<compile_context>
chip_gen: v5e
topology: v5e:2x2
jax: 0.10.0
libtpu: 0.0.40
codegen_flags: <defaults>
</compile_context>

<pallas_src>
import functools

import jax
import jax.numpy as jnp
from jax.experimental import pallas as pl
from jax.experimental.pallas import tpu as pltpu

NEG_SLOPE = 0.01  # torch.nn.LeakyReLU default
_SUBLANE = 8      # f32 sublane height


def _leaky_relu(y):
    return jnp.where(y > 0, y, NEG_SLOPE * y)


def discriminator_kernel(
    vpu_tail,
    state_ref, action_ref,
    w11_ref, b11_ref, w12_ref, b12_ref, w13_ref, b13_ref,
    w21_ref, b21_ref, w22_ref, b22_ref, w23_ref, b23_ref,
    wc1a_ref, wc1b_ref, bc1_ref, wc2_ref, bc2_ref,
    out_ref,
):
    def lin(x, w_ref, b_ref=None):
        # bf16 operands on the MXU, f32 accumulation, f32 bias add on the VPU.
        y = jnp.dot(x.astype(jnp.bfloat16), w_ref[...],
                    preferred_element_type=jnp.float32)
        if b_ref is not None:
            y = y + b_ref[...]
        return y

    # Branch 1: state -> 1024 -> 512 -> 256
    x1 = _leaky_relu(lin(state_ref[...], w11_ref, b11_ref))
    x1 = _leaky_relu(lin(x1, w12_ref, b12_ref))
    x1 = _leaky_relu(lin(x1, w13_ref, b13_ref))

    # Branch 2: action -> 1024 -> 512 -> 256
    x2 = _leaky_relu(lin(action_ref[...], w21_ref, b21_ref))
    x2 = _leaky_relu(lin(x2, w22_ref, b22_ref))
    x2 = _leaky_relu(lin(x2, w23_ref, b23_ref))

    # Fusion head: cat([x1, x2]) @ Wc1 == x1 @ Wc1[:256] + x2 @ Wc1[256:]
    # -> two 256-K matmuls, no lane-concat materialization.
    x = _leaky_relu(lin(x1, wc1a_ref) + lin(x2, wc1b_ref) + bc1_ref[...])

    if vpu_tail:
        # out_dim == 1: wc2 arrives pre-transposed as (1, 256) f32; use the
        # VPU (multiply) + XLU (lane reduce) instead of an N=1 MXU matmul.
        out = jnp.sum(x * wc2_ref[...], axis=-1, keepdims=True) + bc2_ref[...]
    else:
        out = lin(x, wc2_ref, bc2_ref)

    out_ref[...] = out.astype(out_ref.dtype)


def _full_spec(shape):
    # full-array block, grid=() -> index_map takes no grid args
    return pl.BlockSpec(shape, lambda: (0,) * len(shape))


def discriminator_forward(state, action, params):
    B = state.shape[0]
    out_dim = params["bc2"].shape[1]
    vpu_tail = out_dim == 1

    # Pad batch to a full f32 sublane so matmul rows / stores aren't mostly masked.
    B_pad = max(_SUBLANE, -(-B // _SUBLANE) * _SUBLANE)
    if B_pad != B:
        pad = ((0, B_pad - B), (0, 0))
        state = jnp.pad(state, pad)
        action = jnp.pad(action, pad)

    # Final-layer weight: transposed (1, 256) f32 for the VPU tail, else (256, out) bf16.
    wc2_arg = params["wc2"].T if vpu_tail else params["wc2"].astype(jnp.bfloat16)

    ordered = [
        params["w11"], params["b11"], params["w12"], params["b12"],
        params["w13"], params["b13"],
        params["w21"], params["b21"], params["w22"], params["b22"],
        params["w23"], params["b23"],
        params["wc1a"], params["wc1b"], params["bc1"], wc2_arg, params["bc2"],
    ]

    in_specs = [_full_spec(state.shape), _full_spec(action.shape)]
    in_specs += [_full_spec(p.shape) for p in ordered]

    out_padded = pl.pallas_call(
        functools.partial(discriminator_kernel, vpu_tail),
        out_shape=jax.ShapeDtypeStruct((B_pad, out_dim), jnp.float32),
        in_specs=in_specs,
        out_specs=_full_spec((B_pad, out_dim)),
        compiler_params=pltpu.CompilerParams(vmem_limit_bytes=16 << 20),
    )(state, action, *ordered)

    return out_padded[:B]


def init_params(key, state_dim, action_dim, out_dim):
    """Mirrors nn.Linear default init: U(-1/sqrt(fan_in), +1/sqrt(fan_in)).
    Weights stored as (in, out) so the kernel computes x @ W + b.
    Matmul weights are kept in bf16 (f32 accumulation happens on the MXU);
    biases and the tiny final-layer weight stay f32."""
    dims = {
        "11": (state_dim, 1024), "12": (1024, 512), "13": (512, 256),
        "21": (action_dim, 1024), "22": (1024, 512), "23": (512, 256),
        "c1": (512, 256), "c2": (256, out_dim),
    }
    params = {}
    keys = jax.random.split(key, 2 * len(dims))
    for i, (name, (fan_in, fan_out)) in enumerate(dims.items()):
        bound = 1.0 / jnp.sqrt(jnp.float32(fan_in))
        w = jax.random.uniform(keys[2 * i], (fan_in, fan_out), jnp.float32,
                               -bound, bound)
        b = jax.random.uniform(keys[2 * i + 1], (1, fan_out), jnp.float32,
                               -bound, bound)
        if name == "c1":
            # Split the fusion weight so the kernel can skip the concat.
            params["wc1a"] = w[:256].astype(jnp.bfloat16)
            params["wc1b"] = w[256:].astype(jnp.bfloat16)
            params["bc1"] = b
        elif name == "c2":
            params["wc2"] = w          # tiny; kept f32
            params["bc2"] = b
        else:
            params[f"w{name}"] = w.astype(jnp.bfloat16)
            params[f"b{name}"] = b
    return params


def reference_forward(state, action, params):
    """Pure-JAX reference mirroring the kernel's numerics (bf16 MXU operands,
    f32 accumulation and activations)."""
    def lin(x, w, b=None):
        y = jnp.dot(x.astype(jnp.bfloat16), w, preferred_element_type=jnp.float32)
        return y if b is None else y + b

    x1 = _leaky_relu(lin(state, params["w11"], params["b11"]))
    x1 = _leaky_relu(lin(x1, params["w12"], params["b12"]))
    x1 = _leaky_relu(lin(x1, params["w13"], params["b13"]))
    x2 = _leaky_relu(lin(action, params["w21"], params["b21"]))
    x2 = _leaky_relu(lin(x2, params["w22"], params["b22"]))
    x2 = _leaky_relu(lin(x2, params["w23"], params["b23"]))
    x = _leaky_relu(lin(x1, params["wc1a"]) + lin(x2, params["wc1b"])
                    + params["bc1"])
    return x @ params["wc2"] + params["bc2"]   # f32 final layer


if __name__ == "__main__":
    B, STATE_DIM, ACTION_DIM, OUT_DIM = 4, 32, 16, 1

    key = jax.random.PRNGKey(0)
    k_state, k_action, k_params = jax.random.split(key, 3)

    state = jax.random.normal(k_state, (B, STATE_DIM), jnp.float32)
    action = jax.random.normal(k_action, (B, ACTION_DIM), jnp.float32)
    params = init_params(k_params, STATE_DIM, ACTION_DIM, OUT_DIM)

    out = discriminator_forward(state, action, params)
    out = jax.block_until_ready(out)

    ref = reference_forward(state, action, params)
    assert out.shape == (B, OUT_DIM)
    assert jnp.allclose(out, ref, atol=1e-2, rtol=1e-2), "mismatch vs JAX reference"

    print("KERNEL_OK")
</pallas_src>

<mosaic_0001>
module attributes {stable_mosaic.version = 11 : i64} {
  func.func @discriminator_kernel(%arg0: memref<8x32xf32, #tpu.memory_space<vmem>>, %arg1: memref<8x16xf32, #tpu.memory_space<vmem>>, %arg2: memref<32x1024xbf16, #tpu.memory_space<vmem>>, %arg3: memref<1x1024xf32, #tpu.memory_space<vmem>>, %arg4: memref<1024x512xbf16, #tpu.memory_space<vmem>>, %arg5: memref<1x512xf32, #tpu.memory_space<vmem>>, %arg6: memref<512x256xbf16, #tpu.memory_space<vmem>>, %arg7: memref<1x256xf32, #tpu.memory_space<vmem>>, %arg8: memref<16x1024xbf16, #tpu.memory_space<vmem>>, %arg9: memref<1x1024xf32, #tpu.memory_space<vmem>>, %arg10: memref<1024x512xbf16, #tpu.memory_space<vmem>>, %arg11: memref<1x512xf32, #tpu.memory_space<vmem>>, %arg12: memref<512x256xbf16, #tpu.memory_space<vmem>>, %arg13: memref<1x256xf32, #tpu.memory_space<vmem>>, %arg14: memref<256x256xbf16, #tpu.memory_space<vmem>>, %arg15: memref<256x256xbf16, #tpu.memory_space<vmem>>, %arg16: memref<1x256xf32, #tpu.memory_space<vmem>>, %arg17: memref<1x256xf32, #tpu.memory_space<vmem>>, %arg18: memref<1x1xf32, #tpu.memory_space<vmem>>, %arg19: memref<8x1xf32, #tpu.memory_space<vmem>>) attributes {dimension_semantics = [], scalar_prefetch = 0 : i64, scratch_operands = 0 : i64, tpu.core_type = #tpu.core_type<tc>} {
    %c0 = arith.constant 0 : index
    %c0_0 = arith.constant 0 : index
    %0 = vector.load %arg0[%c0, %c0_0] : memref<8x32xf32, #tpu.memory_space<vmem>>, vector<8x32xf32>
    %1 = arith.truncf %0 : vector<8x32xf32> to vector<8x32xbf16>
    %c0_1 = arith.constant 0 : index
    %c0_2 = arith.constant 0 : index
    %2 = vector.load %arg2[%c0_1, %c0_2] : memref<32x1024xbf16, #tpu.memory_space<vmem>>, vector<32x1024xbf16>
    %cst = arith.constant dense<0.000000e+00> : vector<8x1024xf32>
    %3 = tpu.matmul %1, %2, %cst {dimension_numbers = #tpu.dot_dimension_numbers<[1], [0], [0], [1], [0, 0, 1, 1], [], []>} : vector<8x32xbf16>, vector<32x1024xbf16>, vector<8x1024xf32> -> vector<8x1024xf32>
    %c0_3 = arith.constant 0 : index
    %c0_4 = arith.constant 0 : index
    %4 = vector.load %arg3[%c0_3, %c0_4] : memref<1x1024xf32, #tpu.memory_space<vmem>>, vector<1x1024xf32>
    %5 = vector.broadcast %4 : vector<1x1024xf32> to vector<8x1024xf32>
    %6 = arith.addf %3, %5 : vector<8x1024xf32>
    %cst_5 = arith.constant 0.000000e+00 : f32
    %7 = vector.broadcast %cst_5 : f32 to vector<8x1024xf32>
    %8 = arith.cmpf ogt, %6, %7 : vector<8x1024xf32>
    %cst_6 = arith.constant 0.00999999977 : f32
    %9 = vector.broadcast %cst_6 : f32 to vector<8x1024xf32>
    %10 = arith.mulf %9, %6 : vector<8x1024xf32>
    %11 = arith.select %8, %6, %10 : vector<8x1024xi1>, vector<8x1024xf32>
    %12 = arith.truncf %11 : vector<8x1024xf32> to vector<8x1024xbf16>
    %c0_7 = arith.constant 0 : index
    %c0_8 = arith.constant 0 : index
    %13 = vector.load %arg4[%c0_7, %c0_8] : memref<1024x512xbf16, #tpu.memory_space<vmem>>, vector<1024x512xbf16>
    %cst_9 = arith.constant dense<0.000000e+00> : vector<8x512xf32>
    %14 = tpu.matmul %12, %13, %cst_9 {dimension_numbers = #tpu.dot_dimension_numbers<[1], [0], [0], [1], [0, 0, 1, 1], [], []>} : vector<8x1024xbf16>, vector<1024x512xbf16>, vector<8x512xf32> -> vector<8x512xf32>
    %c0_10 = arith.constant 0 : index
    %c0_11 = arith.constant 0 : index
    %15 = vector.load %arg5[%c0_10, %c0_11] : memref<1x512xf32, #tpu.memory_space<vmem>>, vector<1x512xf32>
    %16 = vector.broadcast %15 : vector<1x512xf32> to vector<8x512xf32>
    %17 = arith.addf %14, %16 : vector<8x512xf32>
    %cst_12 = arith.constant 0.000000e+00 : f32
    %18 = vector.broadcast %cst_12 : f32 to vector<8x512xf32>
    %19 = arith.cmpf ogt, %17, %18 : vector<8x512xf32>
    %cst_13 = arith.constant 0.00999999977 : f32
    %20 = vector.broadcast %cst_13 : f32 to vector<8x512xf32>
    %21 = arith.mulf %20, %17 : vector<8x512xf32>
    %22 = arith.select %19, %17, %21 : vector<8x512xi1>, vector<8x512xf32>
    %23 = arith.truncf %22 : vector<8x512xf32> to vector<8x512xbf16>
    %c0_14 = arith.constant 0 : index
    %c0_15 = arith.constant 0 : index
    %24 = vector.load %arg6[%c0_14, %c0_15] : memref<512x256xbf16, #tpu.memory_space<vmem>>, vector<512x256xbf16>
    %cst_16 = arith.constant dense<0.000000e+00> : vector<8x256xf32>
    %25 = tpu.matmul %23, %24, %cst_16 {dimension_numbers = #tpu.dot_dimension_numbers<[1], [0], [0], [1], [0, 0, 1, 1], [], []>} : vector<8x512xbf16>, vector<512x256xbf16>, vector<8x256xf32> -> vector<8x256xf32>
    %c0_17 = arith.constant 0 : index
    %c0_18 = arith.constant 0 : index
    %26 = vector.load %arg7[%c0_17, %c0_18] : memref<1x256xf32, #tpu.memory_space<vmem>>, vector<1x256xf32>
    %27 = vector.broadcast %26 : vector<1x256xf32> to vector<8x256xf32>
    %28 = arith.addf %25, %27 : vector<8x256xf32>
    %cst_19 = arith.constant 0.000000e+00 : f32
    %29 = vector.broadcast %cst_19 : f32 to vector<8x256xf32>
    %30 = arith.cmpf ogt, %28, %29 : vector<8x256xf32>
    %cst_20 = arith.constant 0.00999999977 : f32
    %31 = vector.broadcast %cst_20 : f32 to vector<8x256xf32>
    %32 = arith.mulf %31, %28 : vector<8x256xf32>
    %33 = arith.select %30, %28, %32 : vector<8x256xi1>, vector<8x256xf32>
    %c0_21 = arith.constant 0 : index
    %c0_22 = arith.constant 0 : index
    %34 = vector.load %arg1[%c0_21, %c0_22] : memref<8x16xf32, #tpu.memory_space<vmem>>, vector<8x16xf32>
    %35 = arith.truncf %34 : vector<8x16xf32> to vector<8x16xbf16>
    %c0_23 = arith.constant 0 : index
    %c0_24 = arith.constant 0 : index
    %36 = vector.load %arg8[%c0_23, %c0_24] : memref<16x1024xbf16, #tpu.memory_space<vmem>>, vector<16x1024xbf16>
    %cst_25 = arith.constant dense<0.000000e+00> : vector<8x1024xf32>
    %37 = tpu.matmul %35, %36, %cst_25 {dimension_numbers = #tpu.dot_dimension_numbers<[1], [0], [0], [1], [0, 0, 1, 1], [], []>} : vector<8x16xbf16>, vector<16x1024xbf16>, vector<8x1024xf32> -> vector<8x1024xf32>
    %c0_26 = arith.constant 0 : index
    %c0_27 = arith.constant 0 : index
    %38 = vector.load %arg9[%c0_26, %c0_27] : memref<1x1024xf32, #tpu.memory_space<vmem>>, vector<1x1024xf32>
    %39 = vector.broadcast %38 : vector<1x1024xf32> to vector<8x1024xf32>
    %40 = arith.addf %37, %39 : vector<8x1024xf32>
    %cst_28 = arith.constant 0.000000e+00 : f32
    %41 = vector.broadcast %cst_28 : f32 to vector<8x1024xf32>
    %42 = arith.cmpf ogt, %40, %41 : vector<8x1024xf32>
    %cst_29 = arith.constant 0.00999999977 : f32
    %43 = vector.broadcast %cst_29 : f32 to vector<8x1024xf32>
    %44 = arith.mulf %43, %40 : vector<8x1024xf32>
    %45 = arith.select %42, %40, %44 : vector<8x1024xi1>, vector<8x1024xf32>
    %46 = arith.truncf %45 : vector<8x1024xf32> to vector<8x1024xbf16>
    %c0_30 = arith.constant 0 : index
    %c0_31 = arith.constant 0 : index
    %47 = vector.load %arg10[%c0_30, %c0_31] : memref<1024x512xbf16, #tpu.memory_space<vmem>>, vector<1024x512xbf16>
    %cst_32 = arith.constant dense<0.000000e+00> : vector<8x512xf32>
    %48 = tpu.matmul %46, %47, %cst_32 {dimension_numbers = #tpu.dot_dimension_numbers<[1], [0], [0], [1], [0, 0, 1, 1], [], []>} : vector<8x1024xbf16>, vector<1024x512xbf16>, vector<8x512xf32> -> vector<8x512xf32>
    %c0_33 = arith.constant 0 : index
    %c0_34 = arith.constant 0 : index
    %49 = vector.load %arg11[%c0_33, %c0_34] : memref<1x512xf32, #tpu.memory_space<vmem>>, vector<1x512xf32>
    %50 = vector.broadcast %49 : vector<1x512xf32> to vector<8x512xf32>
    %51 = arith.addf %48, %50 : vector<8x512xf32>
    %cst_35 = arith.constant 0.000000e+00 : f32
    %52 = vector.broadcast %cst_35 : f32 to vector<8x512xf32>
    %53 = arith.cmpf ogt, %51, %52 : vector<8x512xf32>
    %cst_36 = arith.constant 0.00999999977 : f32
    %54 = vector.broadcast %cst_36 : f32 to vector<8x512xf32>
    %55 = arith.mulf %54, %51 : vector<8x512xf32>
    %56 = arith.select %53, %51, %55 : vector<8x512xi1>, vector<8x512xf32>
    %57 = arith.truncf %56 : vector<8x512xf32> to vector<8x512xbf16>
    %c0_37 = arith.constant 0 : index
    %c0_38 = arith.constant 0 : index
    %58 = vector.load %arg12[%c0_37, %c0_38] : memref<512x256xbf16, #tpu.memory_space<vmem>>, vector<512x256xbf16>
    %cst_39 = arith.constant dense<0.000000e+00> : vector<8x256xf32>
    %59 = tpu.matmul %57, %58, %cst_39 {dimension_numbers = #tpu.dot_dimension_numbers<[1], [0], [0], [1], [0, 0, 1, 1], [], []>} : vector<8x512xbf16>, vector<512x256xbf16>, vector<8x256xf32> -> vector<8x256xf32>
    %c0_40 = arith.constant 0 : index
    %c0_41 = arith.constant 0 : index
    %60 = vector.load %arg13[%c0_40, %c0_41] : memref<1x256xf32, #tpu.memory_space<vmem>>, vector<1x256xf32>
    %61 = vector.broadcast %60 : vector<1x256xf32> to vector<8x256xf32>
    %62 = arith.addf %59, %61 : vector<8x256xf32>
    %cst_42 = arith.constant 0.000000e+00 : f32
    %63 = vector.broadcast %cst_42 : f32 to vector<8x256xf32>
    %64 = arith.cmpf ogt, %62, %63 : vector<8x256xf32>
    %cst_43 = arith.constant 0.00999999977 : f32
    %65 = vector.broadcast %cst_43 : f32 to vector<8x256xf32>
    %66 = arith.mulf %65, %62 : vector<8x256xf32>
    %67 = arith.select %64, %62, %66 : vector<8x256xi1>, vector<8x256xf32>
    %68 = arith.truncf %33 : vector<8x256xf32> to vector<8x256xbf16>
    %c0_44 = arith.constant 0 : index
    %c0_45 = arith.constant 0 : index
    %69 = vector.load %arg14[%c0_44, %c0_45] : memref<256x256xbf16, #tpu.memory_space<vmem>>, vector<256x256xbf16>
    %cst_46 = arith.constant dense<0.000000e+00> : vector<8x256xf32>
    %70 = tpu.matmul %68, %69, %cst_46 {dimension_numbers = #tpu.dot_dimension_numbers<[1], [0], [0], [1], [0, 0, 1, 1], [], []>} : vector<8x256xbf16>, vector<256x256xbf16>, vector<8x256xf32> -> vector<8x256xf32>
    %71 = arith.truncf %67 : vector<8x256xf32> to vector<8x256xbf16>
    %c0_47 = arith.constant 0 : index
    %c0_48 = arith.constant 0 : index
    %72 = vector.load %arg15[%c0_47, %c0_48] : memref<256x256xbf16, #tpu.memory_space<vmem>>, vector<256x256xbf16>
    %cst_49 = arith.constant dense<0.000000e+00> : vector<8x256xf32>
    %73 = tpu.matmul %71, %72, %cst_49 {dimension_numbers = #tpu.dot_dimension_numbers<[1], [0], [0], [1], [0, 0, 1, 1], [], []>} : vector<8x256xbf16>, vector<256x256xbf16>, vector<8x256xf32> -> vector<8x256xf32>
    %74 = arith.addf %70, %73 : vector<8x256xf32>
    %c0_50 = arith.constant 0 : index
    %c0_51 = arith.constant 0 : index
    %75 = vector.load %arg16[%c0_50, %c0_51] : memref<1x256xf32, #tpu.memory_space<vmem>>, vector<1x256xf32>
    %76 = vector.broadcast %75 : vector<1x256xf32> to vector<8x256xf32>
    %77 = arith.addf %74, %76 : vector<8x256xf32>
    %cst_52 = arith.constant 0.000000e+00 : f32
    %78 = vector.broadcast %cst_52 : f32 to vector<8x256xf32>
    %79 = arith.cmpf ogt, %77, %78 : vector<8x256xf32>
    %cst_53 = arith.constant 0.00999999977 : f32
    %80 = vector.broadcast %cst_53 : f32 to vector<8x256xf32>
    %81 = arith.mulf %80, %77 : vector<8x256xf32>
    %82 = arith.select %79, %77, %81 : vector<8x256xi1>, vector<8x256xf32>
    %c0_54 = arith.constant 0 : index
    %c0_55 = arith.constant 0 : index
    %83 = vector.load %arg17[%c0_54, %c0_55] : memref<1x256xf32, #tpu.memory_space<vmem>>, vector<1x256xf32>
    %84 = vector.broadcast %83 : vector<1x256xf32> to vector<8x256xf32>
    %85 = arith.mulf %82, %84 : vector<8x256xf32>
    %cst_56 = arith.constant dense<0.000000e+00> : vector<8xf32>
    %86 = vector.multi_reduction <add>, %85, %cst_56 [1] : vector<8x256xf32> to vector<8xf32>
    %87 = vector.shape_cast %86 : vector<8xf32> to vector<8x1xf32>
    %c0_57 = arith.constant 0 : index
    %c0_58 = arith.constant 0 : index
    %88 = vector.load %arg18[%c0_57, %c0_58] : memref<1x1xf32, #tpu.memory_space<vmem>>, vector<1x1xf32>
    %89 = vector.broadcast %88 : vector<1x1xf32> to vector<8x1xf32>
    %90 = arith.addf %87, %89 : vector<8x1xf32>
    %c0_59 = arith.constant 0 : index
    %c0_60 = arith.constant 0 : index
    %91 = vector.load %arg19[%c0_59, %c0_60] : memref<8x1xf32, #tpu.memory_space<vmem>>, vector<8x1xf32>
    tpu.vector_store %arg19[%c0_59, %c0_60], %90 {strides = array<i32>} : memref<8x1xf32, #tpu.memory_space<vmem>>, vector<8x1xf32>,
    return
  }
}

</mosaic_0001>

<llo_original>
// kernel: tpu_custom_call.1
$region0: #{tpu_custom_call.1}
  #allocation0 [shape = 'u32[]', space=smem, size = 0x4, offset = 0x4, fixed_abs, tag = 'smem constant byte address 0x4 - core index']
  #allocation1 [shape = 'u32[72,128]{1,0:T(1,128)}', space=vmem, size = 0x9000, scoped, tag = 'internal scratch']
  #allocation2 [shape = 'f32[1,1]{1,0:T(1,128)S(1)}', space=vmem, size = 0x200, scoped, tag = 'scoped memory for tpu_custom_call.1']
  %s0 = inlined_call_operand.hbm [shape: f32[8,32], index: 0, kind: input, shape index: {}]
  %s1 = inlined_call_operand.hbm [shape: f32[8,16], index: 1, kind: input, shape index: {}]
  %s2 = inlined_call_operand.hbm [shape: bf16[32,1024], index: 2, kind: input, shape index: {}]
  %s3 = inlined_call_operand.hbm [shape: f32[1,1024], index: 3, kind: input, shape index: {}]
  %s4 = inlined_call_operand.hbm [shape: bf16[1024,512], index: 4, kind: input, shape index: {}]
  %s5 = inlined_call_operand.hbm [shape: f32[1,512], index: 5, kind: input, shape index: {}]
  %s6 = inlined_call_operand.hbm [shape: bf16[512,256], index: 6, kind: input, shape index: {}]
  %s7 = inlined_call_operand.hbm [shape: f32[1,256], index: 7, kind: input, shape index: {}]
  %s8 = inlined_call_operand.hbm [shape: bf16[16,1024], index: 8, kind: input, shape index: {}]
  %s9 = inlined_call_operand.vmem [shape: f32[1,1024], index: 9, kind: input, shape index: {}]
  %s10 = inlined_call_operand.hbm [shape: bf16[1024,512], index: 10, kind: input, shape index: {}]
  %s11 = inlined_call_operand.vmem [shape: f32[1,512], index: 11, kind: input, shape index: {}]
  %s12 = inlined_call_operand.hbm [shape: bf16[512,256], index: 12, kind: input, shape index: {}]
  %s13 = inlined_call_operand.vmem [shape: f32[1,256], index: 13, kind: input, shape index: {}]
  %s14 = inlined_call_operand.hbm [shape: bf16[256,256], index: 14, kind: input, shape index: {}]
  %s15 = inlined_call_operand.hbm [shape: bf16[256,256], index: 15, kind: input, shape index: {}]
  %s16 = inlined_call_operand.vmem [shape: f32[1,256], index: 16, kind: input, shape index: {}]
  %s17 = inlined_call_operand.vmem [shape: f32[1,256], index: 17, kind: input, shape index: {}]
  %s18 = inlined_call_operand.<no memory space> [shape: f32[1,1], index: 18, kind: input, shape index: {}]
  %s19 = inlined_call_operand.vmem [shape: f32[8,1], index: 19, kind: output, shape index: {}]
  %s20 = sld [smem:[#allocation0]]
  $region138: #{tpu_custom_call.1} parent=0
    _
  %s22 = ssub.s32 1, %s20
  %s23 = scalar_select 0, %s22, %s20
  %v24 = vstv %s18
  %25 = vst [vmem:[#allocation2] sm:$0x1] %v24
  $region1: #{tpu_custom_call.1} parent=0
    #allocation3 [shape = 'u8[4096]{0}', space=vmem, size = 0x1000, scoped, tag = 'input window, operand 0, single buffered']
    #allocation4 [shape = 's32[1]{0}', space=sflag, size = 0x4, scoped, tag = 'scoped memory for tpu_custom_call.1']
    #allocation5 [shape = 'u8[4096]{0}', space=vmem, size = 0x1000, scoped, tag = 'input window, operand 1, single buffered']
    #allocation6 [shape = 's32[1]{0}', space=sflag, size = 0x4, scoped, tag = 'scoped memory for tpu_custom_call.1']
    #allocation7 [shape = 'u8[65536]{0}', space=vmem, size = 0x10000, scoped, tag = 'input window, operand 2, single buffered']
    #allocation8 [shape = 'u8[4096]{0}', space=vmem, size = 0x1000, scoped, tag = 'input window, operand 3, single buffered']
    #allocation9 [shape = 's32[1]{0}', space=sflag, size = 0x4, scoped, tag = 'scoped memory for tpu_custom_call.1']
    #allocation10 [shape = 'u8[1048576]{0}', space=vmem, size = 0x100000, scoped, tag = 'input window, operand 4, single buffered']
    #allocation11 [shape = 'u8[2048]{0}', space=vmem, size = 0x800, scoped, tag = 'input window, operand 5, single buffered']
    #allocation12 [shape = 's32[1]{0}', space=sflag, size = 0x4, scoped, tag = 'scoped memory for tpu_custom_call.1']
    #allocation13 [shape = 'u8[262144]{0}', space=vmem, size = 0x40000, scoped, tag = 'input window, operand 6, single buffered']
    #allocation14 [shape = 'u8[1024]{0}', space=vmem, size = 0x400, scoped, tag = 'input window, operand 7, single buffered']
    #allocation15 [shape = 's32[1]{0}', space=sflag, size = 0x4, scoped, tag = 'scoped memory for tpu_custom_call.1']
    #allocation16 [shape = 'u8[32768]{0}', space=vmem, size = 0x8000, scoped, tag = 'input window, operand 8, single buffered']
    #allocation17 [shape = 'u8[1048576]{0}', space=vmem, size = 0x100000, scoped, tag = 'input window, operand 10, single buffered']
    #allocation18 [shape = 's32[1]{0}', space=sflag, size = 0x4, scoped, tag = 'scoped memory for tpu_custom_call.1']
    #allocation19 [shape = 'u8[262144]{0}', space=vmem, size = 0x40000, scoped, tag = 'input window, operand 12, single buffered']
    #allocation20 [shape = 'u8[131072]{0}', space=vmem, size = 0x20000, scoped, tag = 'input window, operand 14, single buffered']
    #allocation21 [shape = 's32[1]{0}', space=sflag, size = 0x4, scoped, tag = 'scoped memory for tpu_custom_call.1']
    #allocation22 [shape = 'u8[131072]{0}', space=vmem, size = 0x20000, scoped, tag = 'input window, operand 15, single buffered']
    %26 = vsyncpa [#allocation4], 0
    %27 = vsyncpa [#allocation6], 0
    %28 = vsyncpa [#allocation9], 0
    %29 = vsyncpa [#allocation12], 0
    %30 = vsyncpa [#allocation15], 0
    %31 = vsyncpa [#allocation18], 0
    %32 = vsyncpa [#allocation21], 0
    // Predicated region
    $region2: #{tpu_custom_call.1} parent=1 // pred_check
      _
    $region3: #{tpu_custom_call.1} parent=1 // pred_check_branch
      %34 = sbr.rel (0) target = $region5
    $region4: #{tpu_custom_call.1} parent=1 // pred_region
      %36 = vsyncadd [#allocation4], 0
      %s38 = sshll.u32 %s0, 4
      %s39 = int_to_ptr.hbm [resolvable:$true] %s38
      %s40 = sshll.u32 [#allocation3], 4
      %s41 = int_to_ptr.vmem [resolvable:$true] %s40
      %43 = dma.hbm_to_vmem [thread:$0]  %s39, 128, %s41, [#allocation4]
    $region5: #{tpu_custom_call.1} parent=1 // pred_fallthru
      _
    // Predicated region
    $region6: #{tpu_custom_call.1} parent=1 // pred_check
      _
    $region7: #{tpu_custom_call.1} parent=1 // pred_check_branch
      %45 = sbr.rel (0) target = $region9
    $region8: #{tpu_custom_call.1} parent=1 // pred_region
      %47 = vsyncadd [#allocation6], 0
      %s49 = sshll.u32 %s1, 4
      %s50 = int_to_ptr.hbm [resolvable:$true] %s49
      %s51 = sshll.u32 [#allocation5], 4
      %s52 = int_to_ptr.vmem [resolvable:$true] %s51
      %54 = dma.hbm_to_vmem [thread:$0]  %s50, 128, %s52, [#allocation6]
    $region9: #{tpu_custom_call.1} parent=1 // pred_fallthru
      _
    // Predicated region
    $region10: #{tpu_custom_call.1} parent=1 // pred_check
      _
    $region11: #{tpu_custom_call.1} parent=1 // pred_check_branch
      %56 = sbr.rel (0) target = $region13
    $region12: #{tpu_custom_call.1} parent=1 // pred_region
      %58 = vsyncadd [#allocation6], 0
      %s59 = sshll.u32 %s2, 4
      %s60 = int_to_ptr.hbm [resolvable:$true] %s59
      %s61 = sshll.u32 [#allocation7], 4
      %s62 = int_to_ptr.vmem [resolvable:$true] %s61
      %67 = dma.hbm_to_vmem [thread:$0]  %s60, 2048, %s62, [#allocation6], 512, 512, 32
    $region13: #{tpu_custom_call.1} parent=1 // pred_fallthru
      _
    // Predicated region
    $region14: #{tpu_custom_call.1} parent=1 // pred_check
      _
    $region15: #{tpu_custom_call.1} parent=1 // pred_check_branch
      %69 = sbr.rel (0) target = $region17
    $region16: #{tpu_custom_call.1} parent=1 // pred_region
      %71 = vsyncadd [#allocation9], 0
      %s73 = sshll.u32 %s3, 4
      %s74 = int_to_ptr.hbm [resolvable:$true] %s73
      %s75 = sshll.u32 [#allocation8], 4
      %s76 = int_to_ptr.vmem [resolvable:$true] %s75
      %78 = dma.hbm_to_vmem [thread:$0]  %s74, 128, %s76, [#allocation9]
    $region17: #{tpu_custom_call.1} parent=1 // pred_fallthru
      _
    // Predicated region
    $region18: #{tpu_custom_call.1} parent=1 // pred_check
      _
    $region19: #{tpu_custom_call.1} parent=1 // pred_check_branch
      %80 = sbr.rel (0) target = $region21
    $region20: #{tpu_custom_call.1} parent=1 // pred_region
      %82 = vsyncadd [#allocation9], 0
      %s83 = sshll.u32 %s4, 4
      %s84 = int_to_ptr.hbm [resolvable:$true] %s83
      %s85 = sshll.u32 [#allocation10], 4
      %s86 = int_to_ptr.vmem [resolvable:$true] %s85
      %91 = dma.hbm_to_vmem [thread:$0]  %s84, 32768, %s86, [#allocation9], 256, 256, 16
    $region21: #{tpu_custom_call.1} parent=1 // pred_fallthru
      _
    // Predicated region
    $region22: #{tpu_custom_call.1} parent=1 // pred_check
      _
    $region23: #{tpu_custom_call.1} parent=1 // pred_check_branch
      %93 = sbr.rel (0) target = $region25
    $region24: #{tpu_custom_call.1} parent=1 // pred_region
      %95 = vsyncadd [#allocation12], 0
      %s97 = sshll.u32 %s5, 4
      %s98 = int_to_ptr.hbm [resolvable:$true] %s97
      %s99 = sshll.u32 [#allocation11], 4
      %s100 = int_to_ptr.vmem [resolvable:$true] %s99
      %102 = dma.hbm_to_vmem [thread:$0]  %s98, 64, %s100, [#allocation12]
    $region25: #{tpu_custom_call.1} parent=1 // pred_fallthru
      _
    // Predicated region
    $region26: #{tpu_custom_call.1} parent=1 // pred_check
      _
    $region27: #{tpu_custom_call.1} parent=1 // pred_check_branch
      %104 = sbr.rel (0) target = $region29
    $region28: #{tpu_custom_call.1} parent=1 // pred_region
      %106 = vsyncadd [#allocation12], 0
      %s107 = sshll.u32 %s6, 4
      %s108 = int_to_ptr.hbm [resolvable:$true] %s107
      %s109 = sshll.u32 [#allocation13], 4
      %s110 = int_to_ptr.vmem [resolvable:$true] %s109
      %115 = dma.hbm_to_vmem [thread:$0]  %s108, 8192, %s110, [#allocation12], 128, 128, 8
    $region29: #{tpu_custom_call.1} parent=1 // pred_fallthru
      _
    // Predicated region
    $region30: #{tpu_custom_call.1} parent=1 // pred_check
      _
    $region31: #{tpu_custom_call.1} parent=1 // pred_check_branch
      %117 = sbr.rel (0) target = $region33
    $region32: #{tpu_custom_call.1} parent=1 // pred_region
      %119 = vsyncadd [#allocation15], 0
      %s121 = sshll.u32 %s7, 4
      %s122 = int_to_ptr.hbm [resolvable:$true] %s121
      %s123 = sshll.u32 [#allocation14], 4
      %s124 = int_to_ptr.vmem [resolvable:$true] %s123
      %126 = dma.hbm_to_vmem [thread:$0]  %s122, 32, %s124, [#allocation15]
    $region33: #{tpu_custom_call.1} parent=1 // pred_fallthru
      _
    // Predicated region
    $region34: #{tpu_custom_call.1} parent=1 // pred_check
      _
    $region35: #{tpu_custom_call.1} parent=1 // pred_check_branch
      %128 = sbr.rel (0) target = $region37
    $region36: #{tpu_custom_call.1} parent=1 // pred_region
      %130 = vsyncadd [#allocation15], 0
      %s131 = sshll.u32 %s8, 4
      %s132 = int_to_ptr.hbm [resolvable:$true] %s131
      %s133 = sshll.u32 [#allocation16], 4
      %s134 = int_to_ptr.vmem [resolvable:$true] %s133
      %139 = dma.hbm_to_vmem [thread:$0]  %s132, 1024, %s134, [#allocation15], 512, 512, 32
    $region37: #{tpu_custom_call.1} parent=1 // pred_fallthru
      _
    // Predicated region
    $region38: #{tpu_custom_call.1} parent=1 // pred_check
      _
    $region39: #{tpu_custom_call.1} parent=1 // pred_check_branch
      %141 = sbr.rel (0) target = $region41
    $region40: #{tpu_custom_call.1} parent=1 // pred_region
      _
    $region41: #{tpu_custom_call.1} parent=1 // pred_fallthru
      _
    // Predicated region
    $region42: #{tpu_custom_call.1} parent=1 // pred_check
      _
    $region43: #{tpu_custom_call.1} parent=1 // pred_check_branch
      %143 = sbr.rel (0) target = $region45
    $region44: #{tpu_custom_call.1} parent=1 // pred_region
      %145 = vsyncadd [#allocation18], 0
      %s146 = sshll.u32 %s10, 4
      %s147 = int_to_ptr.hbm [resolvable:$true] %s146
      %s148 = sshll.u32 [#allocation17], 4
      %s149 = int_to_ptr.vmem [resolvable:$true] %s148
      %154 = dma.hbm_to_vmem [thread:$0]  %s147, 32768, %s149, [#allocation18], 256, 256, 16
    $region45: #{tpu_custom_call.1} parent=1 // pred_fallthru
      _
    // Predicated region
    $region46: #{tpu_custom_call.1} parent=1 // pred_check
      _
    $region47: #{tpu_custom_call.1} parent=1 // pred_check_branch
      %156 = sbr.rel (0) target = $region49
    $region48: #{tpu_custom_call.1} parent=1 // pred_region
      _
    $region49: #{tpu_custom_call.1} parent=1 // pred_fallthru
      _
    // Predicated region
    $region50: #{tpu_custom_call.1} parent=1 // pred_check
      _
    $region51: #{tpu_custom_call.1} parent=1 // pred_check_branch
      %158 = sbr.rel (0) target = $region53
    $region52: #{tpu_custom_call.1} parent=1 // pred_region
      %160 = vsyncadd [#allocation18], 0
      %s161 = sshll.u32 %s12, 4
      %s162 = int_to_ptr.hbm [resolvable:$true] %s161
      %s163 = sshll.u32 [#allocation19], 4
      %s164 = int_to_ptr.vmem [resolvable:$true] %s163
      %169 = dma.hbm_to_vmem [thread:$0]  %s162, 8192, %s164, [#allocation18], 128, 128, 8
    $region53: #{tpu_custom_call.1} parent=1 // pred_fallthru
      _
    // Predicated region
    $region54: #{tpu_custom_call.1} parent=1 // pred_check
      _
    $region55: #{tpu_custom_call.1} parent=1 // pred_check_branch
      %171 = sbr.rel (0) target = $region57
    $region56: #{tpu_custom_call.1} parent=1 // pred_region
      _
    $region57: #{tpu_custom_call.1} parent=1 // pred_fallthru
      _
    // Predicated region
    $region58: #{tpu_custom_call.1} parent=1 // pred_check
      _
    $region59: #{tpu_custom_call.1} parent=1 // pred_check_branch
      %173 = sbr.rel (0) target = $region61
    $region60: #{tpu_custom_call.1} parent=1 // pred_region
      %175 = vsyncadd [#allocation21], 0
      %s176 = sshll.u32 %s14, 4
      %s177 = int_to_ptr.hbm [resolvable:$true] %s176
      %s178 = sshll.u32 [#allocation20], 4
      %s179 = int_to_ptr.vmem [resolvable:$true] %s178
      %184 = dma.hbm_to_vmem [thread:$0]  %s177, 4096, %s179, [#allocation21], 128, 128, 8
    $region61: #{tpu_custom_call.1} parent=1 // pred_fallthru
      _
    // Predicated region
    $region62: #{tpu_custom_call.1} parent=1 // pred_check
      _
    $region63: #{tpu_custom_call.1} parent=1 // pred_check_branch
      %186 = sbr.rel (0) target = $region65
    $region64: #{tpu_custom_call.1} parent=1 // pred_region
      %188 = vsyncadd [#allocation21], 0
      %s189 = sshll.u32 %s15, 4
      %s190 = int_to_ptr.hbm [resolvable:$true] %s189
      %s191 = sshll.u32 [#allocation22], 4
      %s192 = int_to_ptr.vmem [resolvable:$true] %s191
      %197 = dma.hbm_to_vmem [thread:$0]  %s190, 4096, %s192, [#allocation21], 128, 128, 8
    $region65: #{tpu_custom_call.1} parent=1 // pred_fallthru
      _
    // Predicated region
    $region66: #{tpu_custom_call.1} parent=1 // pred_check
      _
    $region67: #{tpu_custom_call.1} parent=1 // pred_check_branch
      %199 = sbr.rel (0) target = $region69
    $region68: #{tpu_custom_call.1} parent=1 // pred_region
      _
    $region69: #{tpu_custom_call.1} parent=1 // pred_fallthru
      _
    // Predicated region
    $region70: #{tpu_custom_call.1} parent=1 // pred_check
      _
    $region71: #{tpu_custom_call.1} parent=1 // pred_check_branch
      %201 = sbr.rel (0) target = $region73
    $region72: #{tpu_custom_call.1} parent=1 // pred_region
      _
    $region73: #{tpu_custom_call.1} parent=1 // pred_fallthru
      _
    // Predicated region
    $region74: #{tpu_custom_call.1} parent=1 // pred_check
      _
    $region75: #{tpu_custom_call.1} parent=1 // pred_check_branch
      %203 = sbr.rel (0) target = $region77
    $region76: #{tpu_custom_call.1} parent=1 // pred_region
      _
    $region77: #{tpu_custom_call.1} parent=1 // pred_fallthru
      _
    // Predicated region
    $region78: #{tpu_custom_call.1} parent=1 // pred_check
      _
    $region79: #{tpu_custom_call.1} parent=1 // pred_check_branch
      %205 = sbr.rel (0) target = $region81
    $region80: #{tpu_custom_call.1} parent=1 // pred_region
      %207 = dma.done [#allocation4], 128
    $region81: #{tpu_custom_call.1} parent=1 // pred_fallthru
      _
    // Predicated region
    $region82: #{tpu_custom_call.1} parent=1 // pred_check
      _
    $region83: #{tpu_custom_call.1} parent=1 // pred_check_branch
      %209 = sbr.rel (0) target = $region85
    $region84: #{tpu_custom_call.1} parent=1 // pred_region
      %211 = dma.done [#allocation6], 128
    $region85: #{tpu_custom_call.1} parent=1 // pred_fallthru
      _
    // Predicated region
    $region86: #{tpu_custom_call.1} parent=1 // pred_check
      _
    $region87: #{tpu_custom_call.1} parent=1 // pred_check_branch
      %213 = sbr.rel (0) target = $region89
    $region88: #{tpu_custom_call.1} parent=1 // pred_region
      %215 = dma.done [#allocation6], 2048
    $region89: #{tpu_custom_call.1} parent=1 // pred_fallthru
      _
    // Predicated region
    $region90: #{tpu_custom_call.1} parent=1 // pred_check
      _
    $region91: #{tpu_custom_call.1} parent=1 // pred_check_branch
      %217 = sbr.rel (0) target = $region93
    $region92: #{tpu_custom_call.1} parent=1 // pred_region
      %219 = dma.done [#allocation9], 128
    $region93: #{tpu_custom_call.1} parent=1 // pred_fallthru
      _
    // Predicated region
    $region94: #{tpu_custom_call.1} parent=1 // pred_check
      _
    $region95: #{tpu_custom_call.1} parent=1 // pred_check_branch
      %221 = sbr.rel (0) target = $region97
    $region96: #{tpu_custom_call.1} parent=1 // pred_region
      %223 = dma.done [#allocation9], 32768
    $region97: #{tpu_custom_call.1} parent=1 // pred_fallthru
      _
    // Predicated region
    $region98: #{tpu_custom_call.1} parent=1 // pred_check
      _
    $region99: #{tpu_custom_call.1} parent=1 // pred_check_branch
      %225 = sbr.rel (0) target = $region101
    $region100: #{tpu_custom_call.1} parent=1 // pred_region
      %227 = dma.done [#allocation12], 64
    $region101: #{tpu_custom_call.1} parent=1 // pred_fallthru
      _
    // Predicated region
    $region102: #{tpu_custom_call.1} parent=1 // pred_check
      _
    $region103: #{tpu_custom_call.1} parent=1 // pred_check_branch
      %229 = sbr.rel (0) target = $region105
    $region104: #{tpu_custom_call.1} parent=1 // pred_region
      %231 = dma.done [#allocation12], 8192
    $region105: #{tpu_custom_call.1} parent=1 // pred_fallthru
      _
    // Predicated region
    $region106: #{tpu_custom_call.1} parent=1 // pred_check
      _
    $region107: #{tpu_custom_call.1} parent=1 // pred_check_branch
      %233 = sbr.rel (0) target = $region109
    $region108: #{tpu_custom_call.1} parent=1 // pred_region
      %235 = dma.done [#allocation15], 32
    $region109: #{tpu_custom_call.1} parent=1 // pred_fallthru
      _
    // Predicated region
    $region110: #{tpu_custom_call.1} parent=1 // pred_check
      _
    $region111: #{tpu_custom_call.1} parent=1 // pred_check_branch
      %237 = sbr.rel (0) target = $region113
    $region112: #{tpu_custom_call.1} parent=1 // pred_region
      %239 = dma.done [#allocation15], 1024
    $region113: #{tpu_custom_call.1} parent=1 // pred_fallthru
      _
    // Predicated region
    $region114: #{tpu_custom_call.1} parent=1 // pred_check
      _
    $region115: #{tpu_custom_call.1} parent=1 // pred_check_branch
      %241 = sbr.rel (0) target = $region117
    $region116: #{tpu_custom_call.1} parent=1 // pred_region
      %243 = dma.done [#allocation18], 32768
    $region117: #{tpu_custom_call.1} parent=1 // pred_fallthru
      _
    // Predicated region
    $region118: #{tpu_custom_call.1} parent=1 // pred_check
      _
    $region119: #{tpu_custom_call.1} parent=1 // pred_check_branch
      %245 = sbr.rel (0) target = $region121
    $region120: #{tpu_custom_call.1} parent=1 // pred_region
      %247 = dma.done [#allocation18], 8192
    $region121: #{tpu_custom_call.1} parent=1 // pred_fallthru
      _
    // Predicated region
    $region122: #{tpu_custom_call.1} parent=1 // pred_check
      _
    $region123: #{tpu_custom_call.1} parent=1 // pred_check_branch
      %249 = sbr.rel (0) target = $region125
    $region124: #{tpu_custom_call.1} parent=1 // pred_region
      %251 = dma.done [#allocation21], 4096
    $region125: #{tpu_custom_call.1} parent=1 // pred_fallthru
      _
    // Predicated region
    $region126: #{tpu_custom_call.1} parent=1 // pred_check
      _
    $region127: #{tpu_custom_call.1} parent=1 // pred_check_branch
      %253 = sbr.rel (0) target = $region129
    $region128: #{tpu_custom_call.1} parent=1 // pred_region
      %255 = dma.done [#allocation21], 4096
    $region129: #{tpu_custom_call.1} parent=1 // pred_fallthru
      _
    %v257 = vld [vmem:[#allocation3] sm:$0xff]
    %v258 = vpack.c.bf16 %v257, %v257
    %v259 = vld [vmem:[#allocation7] sm:$0xff]
    %v260 = vld [vmem:[#allocation7 + $0x8] sm:$0xff]
    %v261 = vld [vmem:[#allocation7 + $0x10] sm:$0xff]
    %v262 = vld [vmem:[#allocation7 + $0x18] sm:$0xff]
    %v263 = vld [vmem:[#allocation7 + $0x20] sm:$0xff]
    %v264 = vld [vmem:[#allocation7 + $0x28] sm:$0xff]
    %v265 = vld [vmem:[#allocation7 + $0x30] sm:$0xff]
    %v266 = vld [vmem:[#allocation7 + $0x38] sm:$0xff]
    %v267 = vld [vmem:[#allocation7 + $0x40] sm:$0xff]
    %v268 = vld [vmem:[#allocation7 + $0x48] sm:$0xff]
    %v269 = vld [vmem:[#allocation7 + $0x50] sm:$0xff]
    %v270 = vld [vmem:[#allocation7 + $0x58] sm:$0xff]
    %v271 = vld [vmem:[#allocation7 + $0x60] sm:$0xff]
    %v272 = vld [vmem:[#allocation7 + $0x68] sm:$0xff]
    %v273 = vld [vmem:[#allocation7 + $0x70] sm:$0xff]
    %v274 = vld [vmem:[#allocation7 + $0x78] sm:$0xff]
    %v275 = vld [vmem:[#allocation8] sm:$0xff]
    %v277 = vperm.slane %v275, 0
    %v278 = vperm.slane %v275, 1
    %v279 = vperm.slane %v275, 2
    %v280 = vperm.slane %v275, 3
    %v281 = vperm.slane %v275, 4
    %v282 = vperm.slane %v275, 5
    %v283 = vperm.slane %v275, 6
    %v284 = vperm.slane %v275, 7
    %v309 = vunpack.c.l.b16 %v259
    %v310 = vunpack.c.h.b16 %v259
    %v311 = vunpack.c.l.b16 %v260
    %v312 = vunpack.c.h.b16 %v260
    %v313 = vunpack.c.l.b16 %v261
    %v314 = vunpack.c.h.b16 %v261
    %v315 = vunpack.c.l.b16 %v262
    %v316 = vunpack.c.h.b16 %v262
    %v317 = vunpack.c.l.b16 %v263
    %v318 = vunpack.c.h.b16 %v263
    %v319 = vunpack.c.l.b16 %v264
    %v320 = vunpack.c.h.b16 %v264
    %v321 = vunpack.c.l.b16 %v265
    %v322 = vunpack.c.h.b16 %v265
    %v323 = vunpack.c.l.b16 %v266
    %v324 = vunpack.c.h.b16 %v266
    %v325 = vunpack.c.l.b16 %v267
    %v326 = vunpack.c.h.b16 %v267
    %v327 = vunpack.c.l.b16 %v268
    %v328 = vunpack.c.h.b16 %v268
    %v329 = vunpack.c.l.b16 %v269
    %v330 = vunpack.c.h.b16 %v269
    %v331 = vunpack.c.l.b16 %v270
    %v332 = vunpack.c.h.b16 %v270
    %v333 = vunpack.c.l.b16 %v271
    %v334 = vunpack.c.h.b16 %v271
    %v335 = vunpack.c.l.b16 %v272
    %v336 = vunpack.c.h.b16 %v272
    %v337 = vunpack.c.l.b16 %v273
    %v338 = vunpack.c.h.b16 %v273
    %v339 = vunpack.c.l.b16 %v274
    %v340 = vunpack.c.h.b16 %v274
    %v341 = vpack.c.b16 %v317, %v309
    %v342 = vpack.c.b16 %v318, %v310
    %v343 = vpack.c.b16 %v319, %v311
    %v344 = vpack.c.b16 %v320, %v312
    %v345 = vpack.c.b16 %v321, %v313
    %v346 = vpack.c.b16 %v322, %v314
    %v347 = vpack.c.b16 %v323, %v315
    %v348 = vpack.c.b16 %v324, %v316
    %v349 = vpack.c.b16 %v333, %v325
    %v350 = vpack.c.b16 %v334, %v326
    %v351 = vpack.c.b16 %v335, %v327
    %v352 = vpack.c.b16 %v336, %v328
    %v353 = vpack.c.b16 %v337, %v329
    %v354 = vpack.c.b16 %v338, %v330
    %v355 = vpack.c.b16 %v339, %v331
    %v356 = vpack.c.b16 %v340, %v332
    %vm373 = vcmask 261120
    %v375 = vsel %vm373, %v258, 0
    %377 = vmatpush.bf16.msra.mxu0 0
    %378 = vmatpush.bf16.msra.mxu0 0
    %379 = vmatpush.bf16.msra.mxu0 0
    %380 = vmatpush.bf16.msra.mxu0 0
    %381 = vmatpush.bf16.msra.mxu0 0
    %382 = vmatpush.bf16.msra.mxu0 0
    %383 = vmatpush.bf16.msra.mxu0 %v349
    %384 = vmatpush.bf16.msra.mxu0 %v341
    %385 = vmatmul.bf16.gmra.mxu0 %v375
    %v386 = vpop.f32.mrf.mxu0
    %v387 = vadd.f32 %v277, %v386
    %v388 = vpop.f32.mrf.mxu0
    %389 = vdwg.mxu0
    %390 = vmatpush.bf16.msra.mxu0 0
    %391 = vmatpush.bf16.msra.mxu0 0
    %392 = vmatpush.bf16.msra.mxu0 0
    %393 = vmatpush.bf16.msra.mxu0 0
    %394 = vmatpush.bf16.msra.mxu0 0
    %395 = vmatpush.bf16.msra.mxu0 0
    %396 = vmatpush.bf16.msra.mxu0 %v350
    %397 = vmatpush.bf16.msra.mxu0 %v342
    %398 = vmatmul.bf16.gmra.mxu0 %v375
    %v399 = vpop.f32.mrf.mxu0
    %v400 = vadd.f32 %v278, %v399
    %v401 = vpop.f32.mrf.mxu0
    %402 = vdwg.mxu0
    %403 = vmatpush.bf16.msra.mxu0 0
    %404 = vmatpush.bf16.msra.mxu0 0
    %405 = vmatpush.bf16.msra.mxu0 0
    %406 = vmatpush.bf16.msra.mxu0 0
    %407 = vmatpush.bf16.msra.mxu0 0
    %408 = vmatpush.bf16.msra.mxu0 0
    %409 = vmatpush.bf16.msra.mxu0 %v351
    %410 = vmatpush.bf16.msra.mxu0 %v343
    %411 = vmatmul.bf16.gmra.mxu0 %v375
    %v412 = vpop.f32.mrf.mxu0
    %v413 = vadd.f32 %v279, %v412
    %v414 = vpop.f32.mrf.mxu0
    %415 = vdwg.mxu0
    %416 = vmatpush.bf16.msra.mxu0 0
    %417 = vmatpush.bf16.msra.mxu0 0
    %418 = vmatpush.bf16.msra.mxu0 0
    %419 = vmatpush.bf16.msra.mxu0 0
    %420 = vmatpush.bf16.msra.mxu0 0
    %421 = vmatpush.bf16.msra.mxu0 0
    %422 = vmatpush.bf16.msra.mxu0 %v352
    %423 = vmatpush.bf16.msra.mxu0 %v344
    %424 = vmatmul.bf16.gmra.mxu0 %v375
    %v425 = vpop.f32.mrf.mxu0
    %v426 = vadd.f32 %v280, %v425
    %v427 = vpop.f32.mrf.mxu0
    %428 = vdwg.mxu0
    %429 = vmatpush.bf16.msra.mxu0 0
    %430 = vmatpush.bf16.msra.mxu0 0
    %431 = vmatpush.bf16.msra.mxu0 0
    %432 = vmatpush.bf16.msra.mxu0 0
    %433 = vmatpush.bf16.msra.mxu0 0
    %434 = vmatpush.bf16.msra.mxu0 0
    %435 = vmatpush.bf16.msra.mxu0 %v353
    %436 = vmatpush.bf16.msra.mxu0 %v345
    %437 = vmatmul.bf16.gmra.mxu0 %v375
    %v438 = vpop.f32.mrf.mxu0
    %v439 = vadd.f32 %v281, %v438
    %v440 = vpop.f32.mrf.mxu0
    %441 = vdwg.mxu0
    %442 = vmatpush.bf16.msra.mxu0 0
    %443 = vmatpush.bf16.msra.mxu0 0
    %444 = vmatpush.bf16.msra.mxu0 0
    %445 = vmatpush.bf16.msra.mxu0 0
    %446 = vmatpush.bf16.msra.mxu0 0
    %447 = vmatpush.bf16.msra.mxu0 0
    %448 = vmatpush.bf16.msra.mxu0 %v354
    %449 = vmatpush.bf16.msra.mxu0 %v346
    %450 = vmatmul.bf16.gmra.mxu0 %v375
    %v451 = vpop.f32.mrf.mxu0
    %v452 = vadd.f32 %v282, %v451
    %v453 = vpop.f32.mrf.mxu0
    %454 = vdwg.mxu0
    %455 = vmatpush.bf16.msra.mxu0 0
    %456 = vmatpush.bf16.msra.mxu0 0
    %457 = vmatpush.bf16.msra.mxu0 0
    %458 = vmatpush.bf16.msra.mxu0 0
    %459 = vmatpush.bf16.msra.mxu0 0
    %460 = vmatpush.bf16.msra.mxu0 0
    %461 = vmatpush.bf16.msra.mxu0 %v355
    %462 = vmatpush.bf16.msra.mxu0 %v347
    %463 = vmatmul.bf16.gmra.mxu0 %v375
    %v464 = vpop.f32.mrf.mxu0
    %v465 = vadd.f32 %v283, %v464
    %v466 = vpop.f32.mrf.mxu0
    %467 = vdwg.mxu0
    %468 = vmatpush.bf16.msra.mxu0 0
    %469 = vmatpush.bf16.msra.mxu0 0
    %470 = vmatpush.bf16.msra.mxu0 0
    %471 = vmatpush.bf16.msra.mxu0 0
    %472 = vmatpush.bf16.msra.mxu0 0
    %473 = vmatpush.bf16.msra.mxu0 0
    %474 = vmatpush.bf16.msra.mxu0 %v356
    %475 = vmatpush.bf16.msra.mxu0 %v348
    %476 = vmatmul.bf16.gmra.mxu0 %v375
    %v477 = vpop.f32.mrf.mxu0
    %v478 = vadd.f32 %v284, %v477
    %v479 = vpop.f32.mrf.mxu0
    %480 = vdwg.mxu0
    %vm481 = vcmp.gt.f32.partialorder %v387, 0.0
    %vm482 = vcmp.gt.f32.partialorder %v400, 0.0
    %vm483 = vcmp.gt.f32.partialorder %v413, 0.0
    %vm484 = vcmp.gt.f32.partialorder %v426, 0.0
    %vm485 = vcmp.gt.f32.partialorder %v439, 0.0
    %vm486 = vcmp.gt.f32.partialorder %v452, 0.0
    %vm487 = vcmp.gt.f32.partialorder %v465, 0.0
    %vm488 = vcmp.gt.f32.partialorder %v478, 0.0
    %v489 = vmul.f32 %v387, 0.01
    %v490 = vmul.f32 %v400, 0.01
    %v491 = vmul.f32 %v413, 0.01
    %v492 = vmul.f32 %v426, 0.01
    %v493 = vmul.f32 %v439, 0.01
    %v494 = vmul.f32 %v452, 0.01
    %v495 = vmul.f32 %v465, 0.01
    %v496 = vmul.f32 %v478, 0.01
    %v497 = vsel %vm481, %v387, %v489
    %v498 = vsel %vm482, %v400, %v490
    %v499 = vsel %vm483, %v413, %v491
    %v500 = vsel %vm484, %v426, %v492
    %v501 = vsel %vm485, %v439, %v493
    %v502 = vsel %vm486, %v452, %v494
    %v503 = vsel %vm487, %v465, %v495
    %v504 = vsel %vm488, %v478, %v496
    %v505 = vpack.c.bf16 %v497, %v497
    %v506 = vpack.c.bf16 %v498, %v498
    %v507 = vpack.c.bf16 %v499, %v499
    %v508 = vpack.c.bf16 %v500, %v500
    %v509 = vpack.c.bf16 %v501, %v501
    %v510 = vpack.c.bf16 %v502, %v502
    %v511 = vpack.c.bf16 %v503, %v503
    %v512 = vpack.c.bf16 %v504, %v504
    %v513 = vld [vmem:[#allocation10] sm:$0xff]
    %v514 = vld [vmem:[#allocation10 + $0x8] sm:$0xff]
    %v515 = vld [vmem:[#allocation10 + $0x10] sm:$0xff]
    %v516 = vld [vmem:[#allocation10 + $0x18] sm:$0xff]
    %v517 = vld [vmem:[#allocation10 + $0x20] sm:$0xff]
    %v518 = vld [vmem:[#allocation10 + $0x28] sm:$0xff]
    %v519 = vld [vmem:[#allocation10 + $0x30] sm:$0xff]
    %v520 = vld [vmem:[#allocation10 + $0x38] sm:$0xff]
    %v521 = vld [vmem:[#allocation10 + $0x40] sm:$0xff]
    %v522 = vld [vmem:[#allocation10 + $0x48] sm:$0xff]
    %v523 = vld [vmem:[#allocation10 + $0x50] sm:$0xff]
    %v524 = vld [vmem:[#allocation10 + $0x58] sm:$0xff]
    %v525 = vld [vmem:[#allocation10 + $0x60] sm:$0xff]
    %v526 = vld [vmem:[#allocation10 + $0x68] sm:$0xff]
    %v527 = vld [vmem:[#allocation10 + $0x70] sm:$0xff]
    %v528 = vld [vmem:[#allocation10 + $0x78] sm:$0xff]
    %v529 = vld [vmem:[#allocation10 + $0x80] sm:$0xff]
    %v530 = vld [vmem:[#allocation10 + $0x88] sm:$0xff]
    %v531 = vld [vmem:[#allocation10 + $0x90] sm:$0xff]
    %v532 = vld [vmem:[#allocation10 + $0x98] sm:$0xff]
    %v533 = vld [vmem:[#allocation10 + $0xa0] sm:$0xff]
    %v534 = vld [vmem:[#allocation10 + $0xa8] sm:$0xff]
    %v535 = vld [vmem:[#allocation10 + $0xb0] sm:$0xff]
    %v536 = vld [vmem:[#allocation10 + $0xb8] sm:$0xff]
    %v537 = vld [vmem:[#allocation10 + $0xc0] sm:$0xff]
    %v538 = vld [vmem:[#allocation10 + $0xc8] sm:$0xff]
    %v539 = vld [vmem:[#allocation10 + $0xd0] sm:$0xff]
    %v540 = vld [vmem:[#allocation10 + $0xd8] sm:$0xff]
    %v541 = vld [vmem:[#allocation10 + $0xe0] sm:$0xff]
    %v542 = vld [vmem:[#allocation10 + $0xe8] sm:$0xff]
    %v543 = vld [vmem:[#allocation10 + $0xf0] sm:$0xff]
    %v544 = vld [vmem:[#allocation10 + $0xf8] sm:$0xff]
    %v545 = vld [vmem:[#allocation10 + $0x100] sm:$0xff]
    %v546 = vld [vmem:[#allocation10 + $0x108] sm:$0xff]
    %v547 = vld [vmem:[#allocation10 + $0x110] sm:$0xff]
    %v548 = vld [vmem:[#allocation10 + $0x118] sm:$0xff]
    %v549 = vld [vmem:[#allocation10 + $0x120] sm:$0xff]
    %v550 = vld [vmem:[#allocation10 + $0x128] sm:$0xff]
    %v551 = vld [vmem:[#allocation10 + $0x130] sm:$0xff]
    %v552 = vld [vmem:[#allocation10 + $0x138] sm:$0xff]
    %v553 = vld [vmem:[#allocation10 + $0x140] sm:$0xff]
    %v554 = vld [vmem:[#allocation10 + $0x148] sm:$0xff]
    %v555 = vld [vmem:[#allocation10 + $0x150] sm:$0xff]
    %v556 = vld [vmem:[#allocation10 + $0x158] sm:$0xff]
    %v557 = vld [vmem:[#allocation10 + $0x160] sm:$0xff]
    %v558 = vld [vmem:[#allocation10 + $0x168] sm:$0xff]
    %v559 = vld [vmem:[#allocation10 + $0x170] sm:$0xff]
    %v560 = vld [vmem:[#allocation10 + $0x178] sm:$0xff]
    %v561 = vld [vmem:[#allocation10 + $0x180] sm:$0xff]
    %v562 = vld [vmem:[#allocation10 + $0x188] sm:$0xff]
    %v563 = vld [vmem:[#allocation10 + $0x190] sm:$0xff]
    %v564 = vld [vmem:[#allocation10 + $0x198] sm:$0xff]
    %v565 = vld [vmem:[#allocation10 + $0x1a0] sm:$0xff]
    %v566 = vld [vmem:[#allocation10 + $0x1a8] sm:$0xff]
    %v567 = vld [vmem:[#allocation10 + $0x1b0] sm:$0xff]
    %v568 = vld [vmem:[#allocation10 + $0x1b8] sm:$0xff]
    %v569 = vld [vmem:[#allocation10 + $0x1c0] sm:$0xff]
    %v570 = vld [vmem:[#allocation10 + $0x1c8] sm:$0xff]
    %v571 = vld [vmem:[#allocation10 + $0x1d0] sm:$0xff]
    %v572 = vld [vmem:[#allocation10 + $0x1d8] sm:$0xff]
    %v573 = vld [vmem:[#allocation10 + $0x1e0] sm:$0xff]
    %v574 = vld [vmem:[#allocation10 + $0x1e8] sm:$0xff]
    %v575 = vld [vmem:[#allocation10 + $0x1f0] sm:$0xff]
    %v576 = vld [vmem:[#allocation10 + $0x1f8] sm:$0xff]
    %v577 = vld [vmem:[#allocation10 + $0x200] sm:$0xff]
    %v578 = vld [vmem:[#allocation10 + $0x208] sm:$0xff]
    %v579 = vld [vmem:[#allocation10 + $0x210] sm:$0xff]
    %v580 = vld [vmem:[#allocation10 + $0x218] sm:$0xff]
    %v581 = vld [vmem:[#allocation10 + $0x220] sm:$0xff]
    %v582 = vld [vmem:[#allocation10 + $0x228] sm:$0xff]
    %v583 = vld [vmem:[#allocation10 + $0x230] sm:$0xff]
    %v584 = vld [vmem:[#allocation10 + $0x238] sm:$0xff]
    %v585 = vld [vmem:[#allocation10 + $0x240] sm:$0xff]
    %v586 = vld [vmem:[#allocation10 + $0x248] sm:$0xff]
    %v587 = vld [vmem:[#allocation10 + $0x250] sm:$0xff]
    %v588 = vld [vmem:[#allocation10 + $0x258] sm:$0xff]
    %v589 = vld [vmem:[#allocation10 + $0x260] sm:$0xff]
    %v590 = vld [vmem:[#allocation10 + $0x268] sm:$0xff]
    %v591 = vld [vmem:[#allocation10 + $0x270] sm:$0xff]
    %v592 = vld [vmem:[#allocation10 + $0x278] sm:$0xff]
    %v593 = vld [vmem:[#allocation10 + $0x280] sm:$0xff]
    %v594 = vld [vmem:[#allocation10 + $0x288] sm:$0xff]
    %v595 = vld [vmem:[#allocation10 + $0x290] sm:$0xff]
    %v596 = vld [vmem:[#allocation10 + $0x298] sm:$0xff]
    %v597 = vld [vmem:[#allocation10 + $0x2a0] sm:$0xff]
    %v598 = vld [vmem:[#allocation10 + $0x2a8] sm:$0xff]
    %v599 = vld [vmem:[#allocation10 + $0x2b0] sm:$0xff]
    %v600 = vld [vmem:[#allocation10 + $0x2b8] sm:$0xff]
    %v601 = vld [vmem:[#allocation10 + $0x2c0] sm:$0xff]
    %v602 = vld [vmem:[#allocation10 + $0x2c8] sm:$0xff]
    %v603 = vld [vmem:[#allocation10 + $0x2d0] sm:$0xff]
    %v604 = vld [vmem:[#allocation10 + $0x2d8] sm:$0xff]
    %v605 = vld [vmem:[#allocation10 + $0x2e0] sm:$0xff]
    %v606 = vld [vmem:[#allocation10 + $0x2e8] sm:$0xff]
    %v607 = vld [vmem:[#allocation10 + $0x2f0] sm:$0xff]
    %v608 = vld [vmem:[#allocation10 + $0x2f8] sm:$0xff]
    %v609 = vld [vmem:[#allocation10 + $0x300] sm:$0xff]
    %v610 = vld [vmem:[#allocation10 + $0x308] sm:$0xff]
    %v611 = vld [vmem:[#allocation10 + $0x310] sm:$0xff]
    %v612 = vld [vmem:[#allocation10 + $0x318] sm:$0xff]
    %v613 = vld [vmem:[#allocation10 + $0x320] sm:$0xff]
    %v614 = vld [vmem:[#allocation10 + $0x328] sm:$0xff]
    %v615 = vld [vmem:[#allocation10 + $0x330] sm:$0xff]
    %v616 = vld [vmem:[#allocation10 + $0x338] sm:$0xff]
    %v617 = vld [vmem:[#allocation10 + $0x340] sm:$0xff]
    %v618 = vld [vmem:[#allocation10 + $0x348] sm:$0xff]
    %v619 = vld [vmem:[#allocation10 + $0x350] sm:$0xff]
    %v620 = vld [vmem:[#allocation10 + $0x358] sm:$0xff]
    %v621 = vld [vmem:[#allocation10 + $0x360] sm:$0xff]
    %v622 = vld [vmem:[#allocation10 + $0x368] sm:$0xff]
    %v623 = vld [vmem:[#allocation10 + $0x370] sm:$0xff]
    %v624 = vld [vmem:[#allocation10 + $0x378] sm:$0xff]
    %v625 = vld [vmem:[#allocation10 + $0x380] sm:$0xff]
    %v626 = vld [vmem:[#allocation10 + $0x388] sm:$0xff]
    %v627 = vld [vmem:[#allocation10 + $0x390] sm:$0xff]
    %v628 = vld [vmem:[#allocation10 + $0x398] sm:$0xff]
    %v629 = vld [vmem:[#allocation10 + $0x3a0] sm:$0xff]
    %v630 = vld [vmem:[#allocation10 + $0x3a8] sm:$0xff]
    %v631 = vld [vmem:[#allocation10 + $0x3b0] sm:$0xff]
    %v632 = vld [vmem:[#allocation10 + $0x3b8] sm:$0xff]
    %v633 = vld [vmem:[#allocation10 + $0x3c0] sm:$0xff]
    %v634 = vld [vmem:[#allocation10 + $0x3c8] sm:$0xff]
    %v635 = vld [vmem:[#allocation10 + $0x3d0] sm:$0xff]
    %v636 = vld [vmem:[#allocation10 + $0x3d8] sm:$0xff]
    %v637 = vld [vmem:[#allocation10 + $0x3e0] sm:$0xff]
    %v638 = vld [vmem:[#allocation10 + $0x3e8] sm:$0xff]
    %v639 = vld [vmem:[#allocation10 + $0x3f0] sm:$0xff]
    %v640 = vld [vmem:[#allocation10 + $0x3f8] sm:$0xff]
    %v641 = vld [vmem:[#allocation10 + $0x400] sm:$0xff]
    %v642 = vld [vmem:[#allocation10 + $0x408] sm:$0xff]
    %v643 = vld [vmem:[#allocation10 + $0x410] sm:$0xff]
    %v644 = vld [vmem:[#allocation10 + $0x418] sm:$0xff]
    %v645 = vld [vmem:[#allocation10 + $0x420] sm:$0xff]
    %v646 = vld [vmem:[#allocation10 + $0x428] sm:$0xff]
    %v647 = vld [vmem:[#allocation10 + $0x430] sm:$0xff]
    %v648 = vld [vmem:[#allocation10 + $0x438] sm:$0xff]
    %v649 = vld [vmem:[#allocation10 + $0x440] sm:$0xff]
    %v650 = vld [vmem:[#allocation10 + $0x448] sm:$0xff]
    %v651 = vld [vmem:[#allocation10 + $0x450] sm:$0xff]
    %v652 = vld [vmem:[#allocation10 + $0x458] sm:$0xff]
    %v653 = vld [vmem:[#allocation10 + $0x460] sm:$0xff]
    %v654 = vld [vmem:[#allocation10 + $0x468] sm:$0xff]
    %v655 = vld [vmem:[#allocation10 + $0x470] sm:$0xff]
    %v656 = vld [vmem:[#allocation10 + $0x478] sm:$0xff]
    %v657 = vld [vmem:[#allocation10 + $0x480] sm:$0xff]
    %v658 = vld [vmem:[#allocation10 + $0x488] sm:$0xff]
    %v659 = vld [vmem:[#allocation10 + $0x490] sm:$0xff]
    %v660 = vld [vmem:[#allocation10 + $0x498] sm:$0xff]
    %v661 = vld [vmem:[#allocation10 + $0x4a0] sm:$0xff]
    %v662 = vld [vmem:[#allocation10 + $0x4a8] sm:$0xff]
    %v663 = vld [vmem:[#allocation10 + $0x4b0] sm:$0xff]
    %v664 = vld [vmem:[#allocation10 + $0x4b8] sm:$0xff]
    %v665 = vld [vmem:[#allocation10 + $0x4c0] sm:$0xff]
    %v666 = vld [vmem:[#allocation10 + $0x4c8] sm:$0xff]
    %v667 = vld [vmem:[#allocation10 + $0x4d0] sm:$0xff]
    %v668 = vld [vmem:[#allocation10 + $0x4d8] sm:$0xff]
    %v669 = vld [vmem:[#allocation10 + $0x4e0] sm:$0xff]
    %v670 = vld [vmem:[#allocation10 + $0x4e8] sm:$0xff]
    %v671 = vld [vmem:[#allocation10 + $0x4f0] sm:$0xff]
    %v672 = vld [vmem:[#allocation10 + $0x4f8] sm:$0xff]
    %v673 = vld [vmem:[#allocation10 + $0x500] sm:$0xff]
    %v674 = vld [vmem:[#allocation10 + $0x508] sm:$0xff]
    %v675 = vld [vmem:[#allocation10 + $0x510] sm:$0xff]
    %v676 = vld [vmem:[#allocation10 + $0x518] sm:$0xff]
    %v677 = vld [vmem:[#allocation10 + $0x520] sm:$0xff]
    %v678 = vld [vmem:[#allocation10 + $0x528] sm:$0xff]
    %v679 = vld [vmem:[#allocation10 + $0x530] sm:$0xff]
    %v680 = vld [vmem:[#allocation10 + $0x538] sm:$0xff]
    %v681 = vld [vmem:[#allocation10 + $0x540] sm:$0xff]
    %v682 = vld [vmem:[#allocation10 + $0x548] sm:$0xff]
    %v683 = vld [vmem:[#allocation10 + $0x550] sm:$0xff]
    %v684 = vld [vmem:[#allocation10 + $0x558] sm:$0xff]
    %v685 = vld [vmem:[#allocation10 + $0x560] sm:$0xff]
    %v686 = vld [vmem:[#allocation10 + $0x568] sm:$0xff]
    %v687 = vld [vmem:[#allocation10 + $0x570] sm:$0xff]
    %v688 = vld [vmem:[#allocation10 + $0x578] sm:$0xff]
    %v689 = vld [vmem:[#allocation10 + $0x580] sm:$0xff]
    %v690 = vld [vmem:[#allocation10 + $0x588] sm:$0xff]
    %v691 = vld [vmem:[#allocation10 + $0x590] sm:$0xff]
    %v692 = vld [vmem:[#allocation10 + $0x598] sm:$0xff]
    %v693 = vld [vmem:[#allocation10 + $0x5a0] sm:$0xff]
    %v694 = vld [vmem:[#allocation10 + $0x5a8] sm:$0xff]
    %v695 = vld [vmem:[#allocation10 + $0x5b0] sm:$0xff]
    %v696 = vld [vmem:[#allocation10 + $0x5b8] sm:$0xff]
    %v697 = vld [vmem:[#allocation10 + $0x5c0] sm:$0xff]
    %v698 = vld [vmem:[#allocation10 + $0x5c8] sm:$0xff]
    %v699 = vld [vmem:[#allocation10 + $0x5d0] sm:$0xff]
    %v700 = vld [vmem:[#allocation10 + $0x5d8] sm:$0xff]
    %v701 = vld [vmem:[#allocation10 + $0x5e0] sm:$0xff]
    %v702 = vld [vmem:[#allocation10 + $0x5e8] sm:$0xff]
    %v703 = vld [vmem:[#allocation10 + $0x5f0] sm:$0xff]
    %v704 = vld [vmem:[#allocation10 + $0x5f8] sm:$0xff]
    %v705 = vld [vmem:[#allocation10 + $0x600] sm:$0xff]
    %v706 = vld [vmem:[#allocation10 + $0x608] sm:$0xff]
    %v707 = vld [vmem:[#allocation10 + $0x610] sm:$0xff]
    %v708 = vld [vmem:[#allocation10 + $0x618] sm:$0xff]
    %v709 = vld [vmem:[#allocation10 + $0x620] sm:$0xff]
    %v710 = vld [vmem:[#allocation10 + $0x628] sm:$0xff]
    %v711 = vld [vmem:[#allocation10 + $0x630] sm:$0xff]
    %v712 = vld [vmem:[#allocation10 + $0x638] sm:$0xff]
    %v713 = vld [vmem:[#allocation10 + $0x640] sm:$0xff]
    %v714 = vld [vmem:[#allocation10 + $0x648] sm:$0xff]
    %v715 = vld [vmem:[#allocation10 + $0x650] sm:$0xff]
    %v716 = vld [vmem:[#allocation10 + $0x658] sm:$0xff]
    %v717 = vld [vmem:[#allocation10 + $0x660] sm:$0xff]
    %v718 = vld [vmem:[#allocation10 + $0x668] sm:$0xff]
    %v719 = vld [vmem:[#allocation10 + $0x670] sm:$0xff]
    %v720 = vld [vmem:[#allocation10 + $0x678] sm:$0xff]
    %v721 = vld [vmem:[#allocation10 + $0x680] sm:$0xff]
    %v722 = vld [vmem:[#allocation10 + $0x688] sm:$0xff]
    %v723 = vld [vmem:[#allocation10 + $0x690] sm:$0xff]
    %v724 = vld [vmem:[#allocation10 + $0x698] sm:$0xff]
    %v725 = vld [vmem:[#allocation10 + $0x6a0] sm:$0xff]
    %v726 = vld [vmem:[#allocation10 + $0x6a8] sm:$0xff]
    %v727 = vld [vmem:[#allocation10 + $0x6b0] sm:$0xff]
    %v728 = vld [vmem:[#allocation10 + $0x6b8] sm:$0xff]
    %v729 = vld [vmem:[#allocation10 + $0x6c0] sm:$0xff]
    %v730 = vld [vmem:[#allocation10 + $0x6c8] sm:$0xff]
    %v731 = vld [vmem:[#allocation10 + $0x6d0] sm:$0xff]
    %v732 = vld [vmem:[#allocation10 + $0x6d8] sm:$0xff]
    %v733 = vld [vmem:[#allocation10 + $0x6e0] sm:$0xff]
    %v734 = vld [vmem:[#allocation10 + $0x6e8] sm:$0xff]
    %v735 = vld [vmem:[#allocation10 + $0x6f0] sm:$0xff]
    %v736 = vld [vmem:[#allocation10 + $0x6f8] sm:$0xff]
    %v737 = vld [vmem:[#allocation10 + $0x700] sm:$0xff]
    %v738 = vld [vmem:[#allocation10 + $0x708] sm:$0xff]
    %v739 = vld [vmem:[#allocation10 + $0x710] sm:$0xff]
    %v740 = vld [vmem:[#allocation10 + $0x718] sm:$0xff]
    %v741 = vld [vmem:[#allocation10 + $0x720] sm:$0xff]
    %v742 = vld [vmem:[#allocation10 + $0x728] sm:$0xff]
    %v743 = vld [vmem:[#allocation10 + $0x730] sm:$0xff]
    %v744 = vld [vmem:[#allocation10 + $0x738] sm:$0xff]
    %v745 = vld [vmem:[#allocation10 + $0x740] sm:$0xff]
    %v746 = vld [vmem:[#allocation10 + $0x748] sm:$0xff]
    %v747 = vld [vmem:[#allocation10 + $0x750] sm:$0xff]
    %v748 = vld [vmem:[#allocation10 + $0x758] sm:$0xff]
    %v749 = vld [vmem:[#allocation10 + $0x760] sm:$0xff]
    %v750 = vld [vmem:[#allocation10 + $0x768] sm:$0xff]
    %v751 = vld [vmem:[#allocation10 + $0x770] sm:$0xff]
    %v752 = vld [vmem:[#allocation10 + $0x778] sm:$0xff]
    %v753 = vld [vmem:[#allocation10 + $0x780] sm:$0xff]
    %v754 = vld [vmem:[#allocation10 + $0x788] sm:$0xff]
    %v755 = vld [vmem:[#allocation10 + $0x790] sm:$0xff]
    %v756 = vld [vmem:[#allocation10 + $0x798] sm:$0xff]
    %v757 = vld [vmem:[#allocation10 + $0x7a0] sm:$0xff]
    %v758 = vld [vmem:[#allocation10 + $0x7a8] sm:$0xff]
    %v759 = vld [vmem:[#allocation10 + $0x7b0] sm:$0xff]
    %v760 = vld [vmem:[#allocation10 + $0x7b8] sm:$0xff]
    %v761 = vld [vmem:[#allocation10 + $0x7c0] sm:$0xff]
    %v762 = vld [vmem:[#allocation10 + $0x7c8] sm:$0xff]
    %v763 = vld [vmem:[#allocation10 + $0x7d0] sm:$0xff]
    %v764 = vld [vmem:[#allocation10 + $0x7d8] sm:$0xff]
    %v765 = vld [vmem:[#allocation10 + $0x7e0] sm:$0xff]
    %v766 = vld [vmem:[#allocation10 + $0x7e8] sm:$0xff]
    %v767 = vld [vmem:[#allocation10 + $0x7f0] sm:$0xff]
    %v768 = vld [vmem:[#allocation10 + $0x7f8] sm:$0xff]
    %v769 = vld [vmem:[#allocation11] sm:$0xf]
    %v771 = vperm.slane %v769, 0
    %v772 = vperm.slane %v769, 1
    %v773 = vperm.slane %v769, 2
    %v774 = vperm.slane %v769, 3
    %v1035 = vunpack.c.l.b16 %v513
    %v1036 = vunpack.c.h.b16 %v513
    %v1037 = vunpack.c.l.b16 %v514
    %v1038 = vunpack.c.h.b16 %v514
    %v1039 = vunpack.c.l.b16 %v515
    %v1040 = vunpack.c.h.b16 %v515
    %v1041 = vunpack.c.l.b16 %v516
    %v1042 = vunpack.c.h.b16 %v516
    %v1043 = vunpack.c.l.b16 %v517
    %v1044 = vunpack.c.h.b16 %v517
    %v1045 = vunpack.c.l.b16 %v518
    %v1046 = vunpack.c.h.b16 %v518
    %v1047 = vunpack.c.l.b16 %v519
    %v1048 = vunpack.c.h.b16 %v519
    %v1049 = vunpack.c.l.b16 %v520
    %v1050 = vunpack.c.h.b16 %v520
    %v1051 = vunpack.c.l.b16 %v521
    %v1052 = vunpack.c.h.b16 %v521
    %v1053 = vunpack.c.l.b16 %v522
    %v1054 = vunpack.c.h.b16 %v522
    %v1055 = vunpack.c.l.b16 %v523
    %v1056 = vunpack.c.h.b16 %v523
    %v1057 = vunpack.c.l.b16 %v524
    %v1058 = vunpack.c.h.b16 %v524
    %v1059 = vunpack.c.l.b16 %v525
    %v1060 = vunpack.c.h.b16 %v525
    %v1061 = vunpack.c.l.b16 %v526
    %v1062 = vunpack.c.h.b16 %v526
    %v1063 = vunpack.c.l.b16 %v527
    %v1064 = vunpack.c.h.b16 %v527
    %v1065 = vunpack.c.l.b16 %v528
    %v1066 = vunpack.c.h.b16 %v528
    %v1067 = vunpack.c.l.b16 %v529
    %v1068 = vunpack.c.h.b16 %v529
    %v1069 = vunpack.c.l.b16 %v530
    %v1070 = vunpack.c.h.b16 %v530
    %v1071 = vunpack.c.l.b16 %v531
    %v1072 = vunpack.c.h.b16 %v531
    %v1073 = vunpack.c.l.b16 %v532
    %v1074 = vunpack.c.h.b16 %v532
    %v1075 = vunpack.c.l.b16 %v533
    %v1076 = vunpack.c.h.b16 %v533
    %v1077 = vunpack.c.l.b16 %v534
    %v1078 = vunpack.c.h.b16 %v534
    %v1079 = vunpack.c.l.b16 %v535
    %v1080 = vunpack.c.h.b16 %v535
    %v1081 = vunpack.c.l.b16 %v536
    %v1082 = vunpack.c.h.b16 %v536
    %v1083 = vunpack.c.l.b16 %v537
    %v1084 = vunpack.c.h.b16 %v537
    %v1085 = vunpack.c.l.b16 %v538
    %v1086 = vunpack.c.h.b16 %v538
    %v1087 = vunpack.c.l.b16 %v539
    %v1088 = vunpack.c.h.b16 %v539
    %v1089 = vunpack.c.l.b16 %v540
    %v1090 = vunpack.c.h.b16 %v540
    %v1091 = vunpack.c.l.b16 %v541
    %v1092 = vunpack.c.h.b16 %v541
    %v1093 = vunpack.c.l.b16 %v542
    %v1094 = vunpack.c.h.b16 %v542
    %v1095 = vunpack.c.l.b16 %v543
    %v1096 = vunpack.c.h.b16 %v543
    %v1097 = vunpack.c.l.b16 %v544
    %v1098 = vunpack.c.h.b16 %v544
    %v1099 = vunpack.c.l.b16 %v545
    %v1100 = vunpack.c.h.b16 %v545
    %v1101 = vunpack.c.l.b16 %v546
    %v1102 = vunpack.c.h.b16 %v546
    %v1103 = vunpack.c.l.b16 %v547
    %v1104 = vunpack.c.h.b16 %v547
    %v1105 = vunpack.c.l.b16 %v548
    %v1106 = vunpack.c.h.b16 %v548
    %v1107 = vunpack.c.l.b16 %v549
    %v1108 = vunpack.c.h.b16 %v549
    %v1109 = vunpack.c.l.b16 %v550
    %v1110 = vunpack.c.h.b16 %v550
    %v1111 = vunpack.c.l.b16 %v551
    %v1112 = vunpack.c.h.b16 %v551
    %v1113 = vunpack.c.l.b16 %v552
    %v1114 = vunpack.c.h.b16 %v552
    %v1115 = vunpack.c.l.b16 %v553
    %v1116 = vunpack.c.h.b16 %v553
    %v1117 = vunpack.c.l.b16 %v554
    %v1118 = vunpack.c.h.b16 %v554
    %v1119 = vunpack.c.l.b16 %v555
    %v1120 = vunpack.c.h.b16 %v555
    %v1121 = vunpack.c.l.b16 %v556
    %v1122 = vunpack.c.h.b16 %v556
    %v1123 = vunpack.c.l.b16 %v557
    %v1124 = vunpack.c.h.b16 %v557
    %v1125 = vunpack.c.l.b16 %v558
    %v1126 = vunpack.c.h.b16 %v558
    %v1127 = vunpack.c.l.b16 %v559
    %v1128 = vunpack.c.h.b16 %v559
    %v1129 = vunpack.c.l.b16 %v560
    %v1130 = vunpack.c.h.b16 %v560
    %v1131 = vunpack.c.l.b16 %v561
    %v1132 = vunpack.c.h.b16 %v561
    %v1133 = vunpack.c.l.b16 %v562
    %v1134 = vunpack.c.h.b16 %v562
    %v1135 = vunpack.c.l.b16 %v563
    %v1136 = vunpack.c.h.b16 %v563
    %v1137 = vunpack.c.l.b16 %v564
    %v1138 = vunpack.c.h.b16 %v564
    %v1139 = vunpack.c.l.b16 %v565
    %v1140 = vunpack.c.h.b16 %v565
    %v1141 = vunpack.c.l.b16 %v566
    %v1142 = vunpack.c.h.b16 %v566
    %v1143 = vunpack.c.l.b16 %v567
    %v1144 = vunpack.c.h.b16 %v567
    %v1145 = vunpack.c.l.b16 %v568
    %v1146 = vunpack.c.h.b16 %v568
    %v1147 = vunpack.c.l.b16 %v569
    %v1148 = vunpack.c.h.b16 %v569
    %v1149 = vunpack.c.l.b16 %v570
    %v1150 = vunpack.c.h.b16 %v570
    %v1151 = vunpack.c.l.b16 %v571
    %v1152 = vunpack.c.h.b16 %v571
    %v1153 = vunpack.c.l.b16 %v572
    %v1154 = vunpack.c.h.b16 %v572
    %v1155 = vunpack.c.l.b16 %v573
    %v1156 = vunpack.c.h.b16 %v573
    %v1157 = vunpack.c.l.b16 %v574
    %v1158 = vunpack.c.h.b16 %v574
    %v1159 = vunpack.c.l.b16 %v575
    %v1160 = vunpack.c.h.b16 %v575
    %v1161 = vunpack.c.l.b16 %v576
    %v1162 = vunpack.c.h.b16 %v576
    %v1163 = vunpack.c.l.b16 %v577
    %v1164 = vunpack.c.h.b16 %v577
    %v1165 = vunpack.c.l.b16 %v578
    %v1166 = vunpack.c.h.b16 %v578
    %v1167 = vunpack.c.l.b16 %v579
    %v1168 = vunpack.c.h.b16 %v579
    %v1169 = vunpack.c.l.b16 %v580
    %v1170 = vunpack.c.h.b16 %v580
    %v1171 = vunpack.c.l.b16 %v581
    %v1172 = vunpack.c.h.b16 %v581
    %v1173 = vunpack.c.l.b16 %v582
    %v1174 = vunpack.c.h.b16 %v582
    %v1175 = vunpack.c.l.b16 %v583
    %v1176 = vunpack.c.h.b16 %v583
    %v1177 = vunpack.c.l.b16 %v584
    %v1178 = vunpack.c.h.b16 %v584
    %v1179 = vunpack.c.l.b16 %v585
    %v1180 = vunpack.c.h.b16 %v585
    %v1181 = vunpack.c.l.b16 %v586
    %v1182 = vunpack.c.h.b16 %v586
    %v1183 = vunpack.c.l.b16 %v587
    %v1184 = vunpack.c.h.b16 %v587
    %v1185 = vunpack.c.l.b16 %v588
    %v1186 = vunpack.c.h.b16 %v588
    %v1187 = vunpack.c.l.b16 %v589
    %v1188 = vunpack.c.h.b16 %v589
    %v1189 = vunpack.c.l.b16 %v590
    %v1190 = vunpack.c.h.b16 %v590
    %v1191 = vunpack.c.l.b16 %v591
    %v1192 = vunpack.c.h.b16 %v591
    %v1193 = vunpack.c.l.b16 %v592
    %v1194 = vunpack.c.h.b16 %v592
    %v1195 = vunpack.c.l.b16 %v593
    %v1196 = vunpack.c.h.b16 %v593
    %v1197 = vunpack.c.l.b16 %v594
    %v1198 = vunpack.c.h.b16 %v594
    %v1199 = vunpack.c.l.b16 %v595
    %v1200 = vunpack.c.h.b16 %v595
    %v1201 = vunpack.c.l.b16 %v596
    %v1202 = vunpack.c.h.b16 %v596
    %v1203 = vunpack.c.l.b16 %v597
    %v1204 = vunpack.c.h.b16 %v597
    %v1205 = vunpack.c.l.b16 %v598
    %v1206 = vunpack.c.h.b16 %v598
    %v1207 = vunpack.c.l.b16 %v599
    %v1208 = vunpack.c.h.b16 %v599
    %v1209 = vunpack.c.l.b16 %v600
    %v1210 = vunpack.c.h.b16 %v600
    %v1211 = vunpack.c.l.b16 %v601
    %v1212 = vunpack.c.h.b16 %v601
    %v1213 = vunpack.c.l.b16 %v602
    %v1214 = vunpack.c.h.b16 %v602
    %v1215 = vunpack.c.l.b16 %v603
    %v1216 = vunpack.c.h.b16 %v603
    %v1217 = vunpack.c.l.b16 %v604
    %v1218 = vunpack.c.h.b16 %v604
    %v1219 = vunpack.c.l.b16 %v605
    %v1220 = vunpack.c.h.b16 %v605
    %v1221 = vunpack.c.l.b16 %v606
    %v1222 = vunpack.c.h.b16 %v606
    %v1223 = vunpack.c.l.b16 %v607
    %v1224 = vunpack.c.h.b16 %v607
    %v1225 = vunpack.c.l.b16 %v608
    %v1226 = vunpack.c.h.b16 %v608
    %v1227 = vunpack.c.l.b16 %v609
    %v1228 = vunpack.c.h.b16 %v609
    %v1229 = vunpack.c.l.b16 %v610
    %v1230 = vunpack.c.h.b16 %v610
    %v1231 = vunpack.c.l.b16 %v611
    %v1232 = vunpack.c.h.b16 %v611
    %v1233 = vunpack.c.l.b16 %v612
    %v1234 = vunpack.c.h.b16 %v612
    %v1235 = vunpack.c.l.b16 %v613
    %v1236 = vunpack.c.h.b16 %v613
    %v1237 = vunpack.c.l.b16 %v614
    %v1238 = vunpack.c.h.b16 %v614
    %v1239 = vunpack.c.l.b16 %v615
    %v1240 = vunpack.c.h.b16 %v615
    %v1241 = vunpack.c.l.b16 %v616
    %v1242 = vunpack.c.h.b16 %v616
    %v1243 = vunpack.c.l.b16 %v617
    %v1244 = vunpack.c.h.b16 %v617
    %v1245 = vunpack.c.l.b16 %v618
    %v1246 = vunpack.c.h.b16 %v618
    %v1247 = vunpack.c.l.b16 %v619
    %v1248 = vunpack.c.h.b16 %v619
    %v1249 = vunpack.c.l.b16 %v620
    %v1250 = vunpack.c.h.b16 %v620
    %v1251 = vunpack.c.l.b16 %v621
    %v1252 = vunpack.c.h.b16 %v621
    %v1253 = vunpack.c.l.b16 %v622
    %v1254 = vunpack.c.h.b16 %v622
    %v1255 = vunpack.c.l.b16 %v623
    %v1256 = vunpack.c.h.b16 %v623
    %v1257 = vunpack.c.l.b16 %v624
    %v1258 = vunpack.c.h.b16 %v624
    %v1259 = vunpack.c.l.b16 %v625
    %v1260 = vunpack.c.h.b16 %v625
    %v1261 = vunpack.c.l.b16 %v626
    %v1262 = vunpack.c.h.b16 %v626
    %v1263 = vunpack.c.l.b16 %v627
    %v1264 = vunpack.c.h.b16 %v627
    %v1265 = vunpack.c.l.b16 %v628
    %v1266 = vunpack.c.h.b16 %v628
    %v1267 = vunpack.c.l.b16 %v629
    %v1268 = vunpack.c.h.b16 %v629
    %v1269 = vunpack.c.l.b16 %v630
    %v1270 = vunpack.c.h.b16 %v630
    %v1271 = vunpack.c.l.b16 %v631
    %v1272 = vunpack.c.h.b16 %v631
    %v1273 = vunpack.c.l.b16 %v632
    %v1274 = vunpack.c.h.b16 %v632
    %v1275 = vunpack.c.l.b16 %v633
    %v1276 = vunpack.c.h.b16 %v633
    %v1277 = vunpack.c.l.b16 %v634
    %v1278 = vunpack.c.h.b16 %v634
    %v1279 = vunpack.c.l.b16 %v635
    %v1280 = vunpack.c.h.b16 %v635
    %v1281 = vunpack.c.l.b16 %v636
    %v1282 = vunpack.c.h.b16 %v636
    %v1283 = vunpack.c.l.b16 %v637
    %v1284 = vunpack.c.h.b16 %v637
    %v1285 = vunpack.c.l.b16 %v638
    %v1286 = vunpack.c.h.b16 %v638
    %v1287 = vunpack.c.l.b16 %v639
    %v1288 = vunpack.c.h.b16 %v639
    %v1289 = vunpack.c.l.b16 %v640
    %v1290 = vunpack.c.h.b16 %v640
    %v1291 = vunpack.c.l.b16 %v641
    %v1292 = vunpack.c.h.b16 %v641
    %v1293 = vunpack.c.l.b16 %v642
    %v1294 = vunpack.c.h.b16 %v642
    %v1295 = vunpack.c.l.b16 %v643
    %v1296 = vunpack.c.h.b16 %v643
    %v1297 = vunpack.c.l.b16 %v644
    %v1298 = vunpack.c.h.b16 %v644
    %v1299 = vunpack.c.l.b16 %v645
    %v1300 = vunpack.c.h.b16 %v645
    %v1301 = vunpack.c.l.b16 %v646
    %v1302 = vunpack.c.h.b16 %v646
    %v1303 = vunpack.c.l.b16 %v647
    %v1304 = vunpack.c.h.b16 %v647
    %v1305 = vunpack.c.l.b16 %v648
    %v1306 = vunpack.c.h.b16 %v648
    %v1307 = vunpack.c.l.b16 %v649
    %v1308 = vunpack.c.h.b16 %v649
    %v1309 = vunpack.c.l.b16 %v650
    %v1310 = vunpack.c.h.b16 %v650
    %v1311 = vunpack.c.l.b16 %v651
    %v1312 = vunpack.c.h.b16 %v651
    %v1313 = vunpack.c.l.b16 %v652
    %v1314 = vunpack.c.h.b16 %v652
    %v1315 = vunpack.c.l.b16 %v653
    %v1316 = vunpack.c.h.b16 %v653
    %v1317 = vunpack.c.l.b16 %v654
    %v1318 = vunpack.c.h.b16 %v654
    %v1319 = vunpack.c.l.b16 %v655
    %v1320 = vunpack.c.h.b16 %v655
    %v1321 = vunpack.c.l.b16 %v656
    %v1322 = vunpack.c.h.b16 %v656
    %v1323 = vunpack.c.l.b16 %v657
    %v1324 = vunpack.c.h.b16 %v657
    %v1325 = vunpack.c.l.b16 %v658
    %v1326 = vunpack.c.h.b16 %v658
    %v1327 = vunpack.c.l.b16 %v659
    %v1328 = vunpack.c.h.b16 %v659
    %v1329 = vunpack.c.l.b16 %v660
    %v1330 = vunpack.c.h.b16 %v660
    %v1331 = vunpack.c.l.b16 %v661
    %v1332 = vunpack.c.h.b16 %v661
    %v1333 = vunpack.c.l.b16 %v662
    %v1334 = vunpack.c.h.b16 %v662
    %v1335 = vunpack.c.l.b16 %v663
    %v1336 = vunpack.c.h.b16 %v663
    %v1337 = vunpack.c.l.b16 %v664
    %v1338 = vunpack.c.h.b16 %v664
    %v1339 = vunpack.c.l.b16 %v665
    %v1340 = vunpack.c.h.b16 %v665
    %v1341 = vunpack.c.l.b16 %v666
    %v1342 = vunpack.c.h.b16 %v666
    %v1343 = vunpack.c.l.b16 %v667
    %v1344 = vunpack.c.h.b16 %v667
    %v1345 = vunpack.c.l.b16 %v668
    %v1346 = vunpack.c.h.b16 %v668
    %v1347 = vunpack.c.l.b16 %v669
    %v1348 = vunpack.c.h.b16 %v669
    %v1349 = vunpack.c.l.b16 %v670
    %v1350 = vunpack.c.h.b16 %v670
    %v1351 = vunpack.c.l.b16 %v671
    %v1352 = vunpack.c.h.b16 %v671
    %v1353 = vunpack.c.l.b16 %v672
    %v1354 = vunpack.c.h.b16 %v672
    %v1355 = vunpack.c.l.b16 %v673
    %v1356 = vunpack.c.h.b16 %v673
    %v1357 = vunpack.c.l.b16 %v674
    %v1358 = vunpack.c.h.b16 %v674
    %v1359 = vunpack.c.l.b16 %v675
    %v1360 = vunpack.c.h.b16 %v675
    %v1361 = vunpack.c.l.b16 %v676
    %v1362 = vunpack.c.h.b16 %v676
    %v1363 = vunpack.c.l.b16 %v677
    %v1364 = vunpack.c.h.b16 %v677
    %v1365 = vunpack.c.l.b16 %v678
    %v1366 = vunpack.c.h.b16 %v678
    %v1367 = vunpack.c.l.b16 %v679
    %v1368 = vunpack.c.h.b16 %v679
    %v1369 = vunpack.c.l.b16 %v680
    %v1370 = vunpack.c.h.b16 %v680
    %v1371 = vunpack.c.l.b16 %v681
    %v1372 = vunpack.c.h.b16 %v681
    %v1373 = vunpack.c.l.b16 %v682
    %v1374 = vunpack.c.h.b16 %v682
    %v1375 = vunpack.c.l.b16 %v683
    %v1376 = vunpack.c.h.b16 %v683
    %v1377 = vunpack.c.l.b16 %v684
    %v1378 = vunpack.c.h.b16 %v684
    %v1379 = vunpack.c.l.b16 %v685
    %v1380 = vunpack.c.h.b16 %v685
    %v1381 = vunpack.c.l.b16 %v686
    %v1382 = vunpack.c.h.b16 %v686
    %v1383 = vunpack.c.l.b16 %v687
    %v1384 = vunpack.c.h.b16 %v687
    %v1385 = vunpack.c.l.b16 %v688
    %v1386 = vunpack.c.h.b16 %v688
    %v1387 = vunpack.c.l.b16 %v689
    %v1388 = vunpack.c.h.b16 %v689
    %v1389 = vunpack.c.l.b16 %v690
    %v1390 = vunpack.c.h.b16 %v690
    %v1391 = vunpack.c.l.b16 %v691
    %v1392 = vunpack.c.h.b16 %v691
    %v1393 = vunpack.c.l.b16 %v692
    %v1394 = vunpack.c.h.b16 %v692
    %v1395 = vunpack.c.l.b16 %v693
    %v1396 = vunpack.c.h.b16 %v693
    %v1397 = vunpack.c.l.b16 %v694
    %v1398 = vunpack.c.h.b16 %v694
    %v1399 = vunpack.c.l.b16 %v695
    %v1400 = vunpack.c.h.b16 %v695
    %v1401 = vunpack.c.l.b16 %v696
    %v1402 = vunpack.c.h.b16 %v696
    %v1403 = vunpack.c.l.b16 %v697
    %v1404 = vunpack.c.h.b16 %v697
    %v1405 = vunpack.c.l.b16 %v698
    %v1406 = vunpack.c.h.b16 %v698
    %v1407 = vunpack.c.l.b16 %v699
    %v1408 = vunpack.c.h.b16 %v699
    %v1409 = vunpack.c.l.b16 %v700
    %v1410 = vunpack.c.h.b16 %v700
    %v1411 = vunpack.c.l.b16 %v701
    %v1412 = vunpack.c.h.b16 %v701
    %v1413 = vunpack.c.l.b16 %v702
    %v1414 = vunpack.c.h.b16 %v702
    %v1415 = vunpack.c.l.b16 %v703
    %v1416 = vunpack.c.h.b16 %v703
    %v1417 = vunpack.c.l.b16 %v704
    %v1418 = vunpack.c.h.b16 %v704
    %v1419 = vunpack.c.l.b16 %v705
    %v1420 = vunpack.c.h.b16 %v705
    %v1421 = vunpack.c.l.b16 %v706
    %v1422 = vunpack.c.h.b16 %v706
    %v1423 = vunpack.c.l.b16 %v707
    %v1424 = vunpack.c.h.b16 %v707
    %v1425 = vunpack.c.l.b16 %v708
    %v1426 = vunpack.c.h.b16 %v708
    %v1427 = vunpack.c.l.b16 %v709
    %v1428 = vunpack.c.h.b16 %v709
    %v1429 = vunpack.c.l.b16 %v710
    %v1430 = vunpack.c.h.b16 %v710
    %v1431 = vunpack.c.l.b16 %v711
    %v1432 = vunpack.c.h.b16 %v711
    %v1433 = vunpack.c.l.b16 %v712
    %v1434 = vunpack.c.h.b16 %v712
    %v1435 = vunpack.c.l.b16 %v713
    %v1436 = vunpack.c.h.b16 %v713
    %v1437 = vunpack.c.l.b16 %v714
    %v1438 = vunpack.c.h.b16 %v714
    %v1439 = vunpack.c.l.b16 %v715
    %v1440 = vunpack.c.h.b16 %v715
    %v1441 = vunpack.c.l.b16 %v716
    %v1442 = vunpack.c.h.b16 %v716
    %v1443 = vunpack.c.l.b16 %v717
    %v1444 = vunpack.c.h.b16 %v717
    %v1445 = vunpack.c.l.b16 %v718
    %v1446 = vunpack.c.h.b16 %v718
    %v1447 = vunpack.c.l.b16 %v719
    %v1448 = vunpack.c.h.b16 %v719
    %v1449 = vunpack.c.l.b16 %v720
    %v1450 = vunpack.c.h.b16 %v720
    %v1451 = vunpack.c.l.b16 %v721
    %v1452 = vunpack.c.h.b16 %v721
    %v1453 = vunpack.c.l.b16 %v722
    %v1454 = vunpack.c.h.b16 %v722
    %v1455 = vunpack.c.l.b16 %v723
    %v1456 = vunpack.c.h.b16 %v723
    %v1457 = vunpack.c.l.b16 %v724
    %v1458 = vunpack.c.h.b16 %v724
    %v1459 = vunpack.c.l.b16 %v725
    %v1460 = vunpack.c.h.b16 %v725
    %v1461 = vunpack.c.l.b16 %v726
    %v1462 = vunpack.c.h.b16 %v726
    %v1463 = vunpack.c.l.b16 %v727
    %v1464 = vunpack.c.h.b16 %v727
    %v1465 = vunpack.c.l.b16 %v728
    %v1466 = vunpack.c.h.b16 %v728
    %v1467 = vunpack.c.l.b16 %v729
    %v1468 = vunpack.c.h.b16 %v729
    %v1469 = vunpack.c.l.b16 %v730
    %v1470 = vunpack.c.h.b16 %v730
    %v1471 = vunpack.c.l.b16 %v731
    %v1472 = vunpack.c.h.b16 %v731
    %v1473 = vunpack.c.l.b16 %v732
    %v1474 = vunpack.c.h.b16 %v732
    %v1475 = vunpack.c.l.b16 %v733
    %v1476 = vunpack.c.h.b16 %v733
    %v1477 = vunpack.c.l.b16 %v734
    %v1478 = vunpack.c.h.b16 %v734
    %v1479 = vunpack.c.l.b16 %v735
    %v1480 = vunpack.c.h.b16 %v735
    %v1481 = vunpack.c.l.b16 %v736
    %v1482 = vunpack.c.h.b16 %v736
    %v1483 = vunpack.c.l.b16 %v737
    %v1484 = vunpack.c.h.b16 %v737
    %v1485 = vunpack.c.l.b16 %v738
    %v1486 = vunpack.c.h.b16 %v738
    %v1487 = vunpack.c.l.b16 %v739
    %v1488 = vunpack.c.h.b16 %v739
    %v1489 = vunpack.c.l.b16 %v740
    %v1490 = vunpack.c.h.b16 %v740
    %v1491 = vunpack.c.l.b16 %v741
    %v1492 = vunpack.c.h.b16 %v741
    %v1493 = vunpack.c.l.b16 %v742
    %v1494 = vunpack.c.h.b16 %v742
    %v1495 = vunpack.c.l.b16 %v743
    %v1496 = vunpack.c.h.b16 %v743
    %v1497 = vunpack.c.l.b16 %v744
    %v1498 = vunpack.c.h.b16 %v744
    %v1499 = vunpack.c.l.b16 %v745
    %v1500 = vunpack.c.h.b16 %v745
    %v1501 = vunpack.c.l.b16 %v746
    %v1502 = vunpack.c.h.b16 %v746
    %v1503 = vunpack.c.l.b16 %v747
    %v1504 = vunpack.c.h.b16 %v747
    %v1505 = vunpack.c.l.b16 %v748
    %v1506 = vunpack.c.h.b16 %v748
    %v1507 = vunpack.c.l.b16 %v749
    %v1508 = vunpack.c.h.b16 %v749
    %v1509 = vunpack.c.l.b16 %v750
    %v1510 = vunpack.c.h.b16 %v750
    %v1511 = vunpack.c.l.b16 %v751
    %v1512 = vunpack.c.h.b16 %v751
    %v1513 = vunpack.c.l.b16 %v752
    %v1514 = vunpack.c.h.b16 %v752
    %v1515 = vunpack.c.l.b16 %v753
    %v1516 = vunpack.c.h.b16 %v753
    %v1517 = vunpack.c.l.b16 %v754
    %v1518 = vunpack.c.h.b16 %v754
    %v1519 = vunpack.c.l.b16 %v755
    %v1520 = vunpack.c.h.b16 %v755
    %v1521 = vunpack.c.l.b16 %v756
    %v1522 = vunpack.c.h.b16 %v756
    %v1523 = vunpack.c.l.b16 %v757
    %v1524 = vunpack.c.h.b16 %v757
    %v1525 = vunpack.c.l.b16 %v758
    %v1526 = vunpack.c.h.b16 %v758
    %v1527 = vunpack.c.l.b16 %v759
    %v1528 = vunpack.c.h.b16 %v759
    %v1529 = vunpack.c.l.b16 %v760
    %v1530 = vunpack.c.h.b16 %v760
    %v1531 = vunpack.c.l.b16 %v761
    %v1532 = vunpack.c.h.b16 %v761
    %v1533 = vunpack.c.l.b16 %v762
    %v1534 = vunpack.c.h.b16 %v762
    %v1535 = vunpack.c.l.b16 %v763
    %v1536 = vunpack.c.h.b16 %v763
    %v1537 = vunpack.c.l.b16 %v764
    %v1538 = vunpack.c.h.b16 %v764
    %v1539 = vunpack.c.l.b16 %v765
    %v1540 = vunpack.c.h.b16 %v765
    %v1541 = vunpack.c.l.b16 %v766
    %v1542 = vunpack.c.h.b16 %v766
    %v1543 = vunpack.c.l.b16 %v767
    %v1544 = vunpack.c.h.b16 %v767
    %v1545 = vunpack.c.l.b16 %v768
    %v1546 = vunpack.c.h.b16 %v768
    %v1547 = vpack.c.b16 %v1039, %v1035
    %v1548 = vpack.c.b16 %v1040, %v1036
    %v1549 = vpack.c.b16 %v1041, %v1037
    %v1550 = vpack.c.b16 %v1042, %v1038
    %v1551 = vpack.c.b16 %v1047, %v1043
    %v1552 = vpack.c.b16 %v1048, %v1044
    %v1553 = vpack.c.b16 %v1049, %v1045
    %v1554 = vpack.c.b16 %v1050, %v1046
    %v1555 = vpack.c.b16 %v1055, %v1051
    %v1556 = vpack.c.b16 %v1056, %v1052
    %v1557 = vpack.c.b16 %v1057, %v1053
    %v1558 = vpack.c.b16 %v1058, %v1054
    %v1559 = vpack.c.b16 %v1063, %v1059
    %v1560 = vpack.c.b16 %v1064, %v1060
    %v1561 = vpack.c.b16 %v1065, %v1061
    %v1562 = vpack.c.b16 %v1066, %v1062
    %v1563 = vpack.c.b16 %v1071, %v1067
    %v1564 = vpack.c.b16 %v1072, %v1068
    %v1565 = vpack.c.b16 %v1073, %v1069
    %v1566 = vpack.c.b16 %v1074, %v1070
    %v1567 = vpack.c.b16 %v1079, %v1075
    %v1568 = vpack.c.b16 %v1080, %v1076
    %v1569 = vpack.c.b16 %v1081, %v1077
    %v1570 = vpack.c.b16 %v1082, %v1078
    %v1571 = vpack.c.b16 %v1087, %v1083
    %v1572 = vpack.c.b16 %v1088, %v1084
    %v1573 = vpack.c.b16 %v1089, %v1085
    %v1574 = vpack.c.b16 %v1090, %v1086
    %v1575 = vpack.c.b16 %v1095, %v1091
    %v1576 = vpack.c.b16 %v1096, %v1092
    %v1577 = vpack.c.b16 %v1097, %v1093
    %v1578 = vpack.c.b16 %v1098, %v1094
    %v1579 = vpack.c.b16 %v1103, %v1099
    %v1580 = vpack.c.b16 %v1104, %v1100
    %v1581 = vpack.c.b16 %v1105, %v1101
    %v1582 = vpack.c.b16 %v1106, %v1102
    %v1583 = vpack.c.b16 %v1111, %v1107
    %v1584 = vpack.c.b16 %v1112, %v1108
    %v1585 = vpack.c.b16 %v1113, %v1109
    %v1586 = vpack.c.b16 %v1114, %v1110
    %v1587 = vpack.c.b16 %v1119, %v1115
    %v1588 = vpack.c.b16 %v1120, %v1116
    %v1589 = vpack.c.b16 %v1121, %v1117
    %v1590 = vpack.c.b16 %v1122, %v1118
    %v1591 = vpack.c.b16 %v1127, %v1123
    %v1592 = vpack.c.b16 %v1128, %v1124
    %v1593 = vpack.c.b16 %v1129, %v1125
    %v1594 = vpack.c.b16 %v1130, %v1126
    %v1595 = vpack.c.b16 %v1135, %v1131
    %v1596 = vpack.c.b16 %v1136, %v1132
    %v1597 = vpack.c.b16 %v1137, %v1133
    %v1598 = vpack.c.b16 %v1138, %v1134
    %v1599 = vpack.c.b16 %v1143, %v1139
    %v1600 = vpack.c.b16 %v1144, %v1140
    %v1601 = vpack.c.b16 %v1145, %v1141
    %v1602 = vpack.c.b16 %v1146, %v1142
    %v1603 = vpack.c.b16 %v1151, %v1147
    %v1604 = vpack.c.b16 %v1152, %v1148
    %v1605 = vpack.c.b16 %v1153, %v1149
    %v1606 = vpack.c.b16 %v1154, %v1150
    %v1607 = vpack.c.b16 %v1159, %v1155
    %v1608 = vpack.c.b16 %v1160, %v1156
    %v1609 = vpack.c.b16 %v1161, %v1157
    %v1610 = vpack.c.b16 %v1162, %v1158
    %v1611 = vpack.c.b16 %v1167, %v1163
    %v1612 = vpack.c.b16 %v1168, %v1164
    %v1613 = vpack.c.b16 %v1169, %v1165
    %v1614 = vpack.c.b16 %v1170, %v1166
    %v1615 = vpack.c.b16 %v1175, %v1171
    %v1616 = vpack.c.b16 %v1176, %v1172
    %v1617 = vpack.c.b16 %v1177, %v1173
    %v1618 = vpack.c.b16 %v1178, %v1174
    %v1619 = vpack.c.b16 %v1183, %v1179
    %v1620 = vpack.c.b16 %v1184, %v1180
    %v1621 = vpack.c.b16 %v1185, %v1181
    %v1622 = vpack.c.b16 %v1186, %v1182
    %v1623 = vpack.c.b16 %v1191, %v1187
    %v1624 = vpack.c.b16 %v1192, %v1188
    %v1625 = vpack.c.b16 %v1193, %v1189
    %v1626 = vpack.c.b16 %v1194, %v1190
    %v1627 = vpack.c.b16 %v1199, %v1195
    %v1628 = vpack.c.b16 %v1200, %v1196
    %v1629 = vpack.c.b16 %v1201, %v1197
    %v1630 = vpack.c.b16 %v1202, %v1198
    %v1631 = vpack.c.b16 %v1207, %v1203
    %v1632 = vpack.c.b16 %v1208, %v1204
    %v1633 = vpack.c.b16 %v1209, %v1205
    %v1634 = vpack.c.b16 %v1210, %v1206
    %v1635 = vpack.c.b16 %v1215, %v1211
    %v1636 = vpack.c.b16 %v1216, %v1212
    %v1637 = vpack.c.b16 %v1217, %v1213
    %v1638 = vpack.c.b16 %v1218, %v1214
    %v1639 = vpack.c.b16 %v1223, %v1219
    %v1640 = vpack.c.b16 %v1224, %v1220
    %v1641 = vpack.c.b16 %v1225, %v1221
    %v1642 = vpack.c.b16 %v1226, %v1222
    %v1643 = vpack.c.b16 %v1231, %v1227
    %v1644 = vpack.c.b16 %v1232, %v1228
    %v1645 = vpack.c.b16 %v1233, %v1229
    %v1646 = vpack.c.b16 %v1234, %v1230
    %v1647 = vpack.c.b16 %v1239, %v1235
    %v1648 = vpack.c.b16 %v1240, %v1236
    %v1649 = vpack.c.b16 %v1241, %v1237
    %v1650 = vpack.c.b16 %v1242, %v1238
    %v1651 = vpack.c.b16 %v1247, %v1243
    %v1652 = vpack.c.b16 %v1248, %v1244
    %v1653 = vpack.c.b16 %v1249, %v1245
    %v1654 = vpack.c.b16 %v1250, %v1246
    %v1655 = vpack.c.b16 %v1255, %v1251
    %v1656 = vpack.c.b16 %v1256, %v1252
    %v1657 = vpack.c.b16 %v1257, %v1253
    %v1658 = vpack.c.b16 %v1258, %v1254
    %v1659 = vpack.c.b16 %v1263, %v1259
    %v1660 = vpack.c.b16 %v1264, %v1260
    %v1661 = vpack.c.b16 %v1265, %v1261
    %v1662 = vpack.c.b16 %v1266, %v1262
    %v1663 = vpack.c.b16 %v1271, %v1267
    %v1664 = vpack.c.b16 %v1272, %v1268
    %v1665 = vpack.c.b16 %v1273, %v1269
    %v1666 = vpack.c.b16 %v1274, %v1270
    %v1667 = vpack.c.b16 %v1279, %v1275
    %v1668 = vpack.c.b16 %v1280, %v1276
    %v1669 = vpack.c.b16 %v1281, %v1277
    %v1670 = vpack.c.b16 %v1282, %v1278
    %v1671 = vpack.c.b16 %v1287, %v1283
    %v1672 = vpack.c.b16 %v1288, %v1284
    %v1673 = vpack.c.b16 %v1289, %v1285
    %v1674 = vpack.c.b16 %v1290, %v1286
    %v1675 = vpack.c.b16 %v1295, %v1291
    %v1676 = vpack.c.b16 %v1296, %v1292
    %v1677 = vpack.c.b16 %v1297, %v1293
    %v1678 = vpack.c.b16 %v1298, %v1294
    %v1679 = vpack.c.b16 %v1303, %v1299
    %v1680 = vpack.c.b16 %v1304, %v1300
    %v1681 = vpack.c.b16 %v1305, %v1301
    %v1682 = vpack.c.b16 %v1306, %v1302
    %v1683 = vpack.c.b16 %v1311, %v1307
    %v1684 = vpack.c.b16 %v1312, %v1308
    %v1685 = vpack.c.b16 %v1313, %v1309
    %v1686 = vpack.c.b16 %v1314, %v1310
    %v1687 = vpack.c.b16 %v1319, %v1315
    %v1688 = vpack.c.b16 %v1320, %v1316
    %v1689 = vpack.c.b16 %v1321, %v1317
    %v1690 = vpack.c.b16 %v1322, %v1318
    %v1691 = vpack.c.b16 %v1327, %v1323
    %v1692 = vpack.c.b16 %v1328, %v1324
    %v1693 = vpack.c.b16 %v1329, %v1325
    %v1694 = vpack.c.b16 %v1330, %v1326
    %v1695 = vpack.c.b16 %v1335, %v1331
    %v1696 = vpack.c.b16 %v1336, %v1332
    %v1697 = vpack.c.b16 %v1337, %v1333
    %v1698 = vpack.c.b16 %v1338, %v1334
    %v1699 = vpack.c.b16 %v1343, %v1339
    %v1700 = vpack.c.b16 %v1344, %v1340
    %v1701 = vpack.c.b16 %v1345, %v1341
    %v1702 = vpack.c.b16 %v1346, %v1342
    %v1703 = vpack.c.b16 %v1351, %v1347
    %v1704 = vpack.c.b16 %v1352, %v1348
    %v1705 = vpack.c.b16 %v1353, %v1349
    %v1706 = vpack.c.b16 %v1354, %v1350
    %v1707 = vpack.c.b16 %v1359, %v1355
    %v1708 = vpack.c.b16 %v1360, %v1356
    %v1709 = vpack.c.b16 %v1361, %v1357
    %v1710 = vpack.c.b16 %v1362, %v1358
    %v1711 = vpack.c.b16 %v1367, %v1363
    %v1712 = vpack.c.b16 %v1368, %v1364
    %v1713 = vpack.c.b16 %v1369, %v1365
    %v1714 = vpack.c.b16 %v1370, %v1366
    %v1715 = vpack.c.b16 %v1375, %v1371
    %v1716 = vpack.c.b16 %v1376, %v1372
    %v1717 = vpack.c.b16 %v1377, %v1373
    %v1718 = vpack.c.b16 %v1378, %v1374
    %v1719 = vpack.c.b16 %v1383, %v1379
    %v1720 = vpack.c.b16 %v1384, %v1380
    %v1721 = vpack.c.b16 %v1385, %v1381
    %v1722 = vpack.c.b16 %v1386, %v1382
    %v1723 = vpack.c.b16 %v1391, %v1387
    %v1724 = vpack.c.b16 %v1392, %v1388
    %v1725 = vpack.c.b16 %v1393, %v1389
    %v1726 = vpack.c.b16 %v1394, %v1390
    %v1727 = vpack.c.b16 %v1399, %v1395
    %v1728 = vpack.c.b16 %v1400, %v1396
    %v1729 = vpack.c.b16 %v1401, %v1397
    %v1730 = vpack.c.b16 %v1402, %v1398
    %v1731 = vpack.c.b16 %v1407, %v1403
    %v1732 = vpack.c.b16 %v1408, %v1404
    %v1733 = vpack.c.b16 %v1409, %v1405
    %v1734 = vpack.c.b16 %v1410, %v1406
    %v1735 = vpack.c.b16 %v1415, %v1411
    %v1736 = vpack.c.b16 %v1416, %v1412
    %v1737 = vpack.c.b16 %v1417, %v1413
    %v1738 = vpack.c.b16 %v1418, %v1414
    %v1739 = vpack.c.b16 %v1423, %v1419
    %v1740 = vpack.c.b16 %v1424, %v1420
    %v1741 = vpack.c.b16 %v1425, %v1421
    %v1742 = vpack.c.b16 %v1426, %v1422
    %v1743 = vpack.c.b16 %v1431, %v1427
    %v1744 = vpack.c.b16 %v1432, %v1428
    %v1745 = vpack.c.b16 %v1433, %v1429
    %v1746 = vpack.c.b16 %v1434, %v1430
    %v1747 = vpack.c.b16 %v1439, %v1435
    %v1748 = vpack.c.b16 %v1440, %v1436
    %v1749 = vpack.c.b16 %v1441, %v1437
    %v1750 = vpack.c.b16 %v1442, %v1438
    %v1751 = vpack.c.b16 %v1447, %v1443
    %v1752 = vpack.c.b16 %v1448, %v1444
    %v1753 = vpack.c.b16 %v1449, %v1445
    %v1754 = vpack.c.b16 %v1450, %v1446
    %v1755 = vpack.c.b16 %v1455, %v1451
    %v1756 = vpack.c.b16 %v1456, %v1452
    %v1757 = vpack.c.b16 %v1457, %v1453
    %v1758 = vpack.c.b16 %v1458, %v1454
    %v1759 = vpack.c.b16 %v1463, %v1459
    %v1760 = vpack.c.b16 %v1464, %v1460
    %v1761 = vpack.c.b16 %v1465, %v1461
    %v1762 = vpack.c.b16 %v1466, %v1462
    %v1763 = vpack.c.b16 %v1471, %v1467
    %v1764 = vpack.c.b16 %v1472, %v1468
    %v1765 = vpack.c.b16 %v1473, %v1469
    %v1766 = vpack.c.b16 %v1474, %v1470
    %v1767 = vpack.c.b16 %v1479, %v1475
    %v1768 = vpack.c.b16 %v1480, %v1476
    %v1769 = vpack.c.b16 %v1481, %v1477
    %v1770 = vpack.c.b16 %v1482, %v1478
    %v1771 = vpack.c.b16 %v1487, %v1483
    %v1772 = vpack.c.b16 %v1488, %v1484
    %v1773 = vpack.c.b16 %v1489, %v1485
    %v1774 = vpack.c.b16 %v1490, %v1486
    %v1775 = vpack.c.b16 %v1495, %v1491
    %v1776 = vpack.c.b16 %v1496, %v1492
    %v1777 = vpack.c.b16 %v1497, %v1493
    %v1778 = vpack.c.b16 %v1498, %v1494
    %v1779 = vpack.c.b16 %v1503, %v1499
    %v1780 = vpack.c.b16 %v1504, %v1500
    %v1781 = vpack.c.b16 %v1505, %v1501
    %v1782 = vpack.c.b16 %v1506, %v1502
    %v1783 = vpack.c.b16 %v1511, %v1507
    %v1784 = vpack.c.b16 %v1512, %v1508
    %v1785 = vpack.c.b16 %v1513, %v1509
    %v1786 = vpack.c.b16 %v1514, %v1510
    %v1787 = vpack.c.b16 %v1519, %v1515
    %v1788 = vpack.c.b16 %v1520, %v1516
    %v1789 = vpack.c.b16 %v1521, %v1517
    %v1790 = vpack.c.b16 %v1522, %v1518
    %v1791 = vpack.c.b16 %v1527, %v1523
    %v1792 = vpack.c.b16 %v1528, %v1524
    %v1793 = vpack.c.b16 %v1529, %v1525
    %v1794 = vpack.c.b16 %v1530, %v1526
    %v1795 = vpack.c.b16 %v1535, %v1531
    %v1796 = vpack.c.b16 %v1536, %v1532
    %v1797 = vpack.c.b16 %v1537, %v1533
    %v1798 = vpack.c.b16 %v1538, %v1534
    %v1799 = vpack.c.b16 %v1543, %v1539
    %v1800 = vpack.c.b16 %v1544, %v1540
    %v1801 = vpack.c.b16 %v1545, %v1541
    %v1802 = vpack.c.b16 %v1546, %v1542
    %2059 = vmatpush.bf16.msra.mxu0 %v1575
    %2060 = vmatpush.bf16.msra.mxu0 %v1571
    %2061 = vmatpush.bf16.msra.mxu0 %v1567
    %2062 = vmatpush.bf16.msra.mxu0 %v1563
    %2063 = vmatpush.bf16.msra.mxu0 %v1559
    %2064 = vmatpush.bf16.msra.mxu0 %v1555
    %2065 = vmatpush.bf16.msra.mxu0 %v1551
    %2066 = vmatpush.bf16.msra.mxu0 %v1547
    %2067 = vmatmul.bf16.gmra.mxu0 %v505
    %v2068 = vpop.f32.mrf.mxu0
    %v2069 = vadd.f32 %v771, %v2068
    %v2070 = vpop.f32.mrf.mxu0
    %2071 = vdwg.mxu0
    %2072 = vmatpush.bf16.msra.mxu0 %v1607
    %2073 = vmatpush.bf16.msra.mxu0 %v1603
    %2074 = vmatpush.bf16.msra.mxu0 %v1599
    %2075 = vmatpush.bf16.msra.mxu0 %v1595
    %2076 = vmatpush.bf16.msra.mxu0 %v1591
    %2077 = vmatpush.bf16.msra.mxu0 %v1587
    %2078 = vmatpush.bf16.msra.mxu0 %v1583
    %2079 = vmatpush.bf16.msra.mxu0 %v1579
    %2080 = vmatmul.bf16.gmra.mxu0 %v506
    %v2081 = vpop.f32.mrf.mxu0
    %v2082 = vadd.f32 %v2069, %v2081
    %v2083 = vpop.f32.mrf.mxu0
    %2084 = vdwg.mxu0
    %2085 = vmatpush.bf16.msra.mxu0 %v1639
    %2086 = vmatpush.bf16.msra.mxu0 %v1635
    %2087 = vmatpush.bf16.msra.mxu0 %v1631
    %2088 = vmatpush.bf16.msra.mxu0 %v1627
    %2089 = vmatpush.bf16.msra.mxu0 %v1623
    %2090 = vmatpush.bf16.msra.mxu0 %v1619
    %2091 = vmatpush.bf16.msra.mxu0 %v1615
    %2092 = vmatpush.bf16.msra.mxu0 %v1611
    %2093 = vmatmul.bf16.gmra.mxu0 %v507
    %v2094 = vpop.f32.mrf.mxu0
    %v2095 = vadd.f32 %v2082, %v2094
    %v2096 = vpop.f32.mrf.mxu0
    %2097 = vdwg.mxu0
    %2098 = vmatpush.bf16.msra.mxu0 %v1671
    %2099 = vmatpush.bf16.msra.mxu0 %v1667
    %2100 = vmatpush.bf16.msra.mxu0 %v1663
    %2101 = vmatpush.bf16.msra.mxu0 %v1659
    %2102 = vmatpush.bf16.msra.mxu0 %v1655
    %2103 = vmatpush.bf16.msra.mxu0 %v1651
    %2104 = vmatpush.bf16.msra.mxu0 %v1647
    %2105 = vmatpush.bf16.msra.mxu0 %v1643
    %2106 = vmatmul.bf16.gmra.mxu0 %v508
    %v2107 = vpop.f32.mrf.mxu0
    %v2108 = vadd.f32 %v2095, %v2107
    %v2109 = vpop.f32.mrf.mxu0
    %2110 = vdwg.mxu0
    %2111 = vmatpush.bf16.msra.mxu0 %v1703
    %2112 = vmatpush.bf16.msra.mxu0 %v1699
    %2113 = vmatpush.bf16.msra.mxu0 %v1695
    %2114 = vmatpush.bf16.msra.mxu0 %v1691
    %2115 = vmatpush.bf16.msra.mxu0 %v1687
    %2116 = vmatpush.bf16.msra.mxu0 %v1683
    %2117 = vmatpush.bf16.msra.mxu0 %v1679
    %2118 = vmatpush.bf16.msra.mxu0 %v1675
    %2119 = vmatmul.bf16.gmra.mxu0 %v509
    %v2120 = vpop.f32.mrf.mxu0
    %v2121 = vadd.f32 %v2108, %v2120
    %v2122 = vpop.f32.mrf.mxu0
    %2123 = vdwg.mxu0
    %2124 = vmatpush.bf16.msra.mxu0 %v1735
    %2125 = vmatpush.bf16.msra.mxu0 %v1731
    %2126 = vmatpush.bf16.msra.mxu0 %v1727
    %2127 = vmatpush.bf16.msra.mxu0 %v1723
    %2128 = vmatpush.bf16.msra.mxu0 %v1719
    %2129 = vmatpush.bf16.msra.mxu0 %v1715
    %2130 = vmatpush.bf16.msra.mxu0 %v1711
    %2131 = vmatpush.bf16.msra.mxu0 %v1707
    %2132 = vmatmul.bf16.gmra.mxu0 %v510
    %v2133 = vpop.f32.mrf.mxu0
    %v2134 = vadd.f32 %v2121, %v2133
    %v2135 = vpop.f32.mrf.mxu0
    %2136 = vdwg.mxu0
    %2137 = vmatpush.bf16.msra.mxu0 %v1767
    %2138 = vmatpush.bf16.msra.mxu0 %v1763
    %2139 = vmatpush.bf16.msra.mxu0 %v1759
    %2140 = vmatpush.bf16.msra.mxu0 %v1755
    %2141 = vmatpush.bf16.msra.mxu0 %v1751
    %2142 = vmatpush.bf16.msra.mxu0 %v1747
    %2143 = vmatpush.bf16.msra.mxu0 %v1743
    %2144 = vmatpush.bf16.msra.mxu0 %v1739
    %2145 = vmatmul.bf16.gmra.mxu0 %v511
    %v2146 = vpop.f32.mrf.mxu0
    %v2147 = vadd.f32 %v2134, %v2146
    %v2148 = vpop.f32.mrf.mxu0
    %2149 = vdwg.mxu0
    %2150 = vmatpush.bf16.msra.mxu0 %v1799
    %2151 = vmatpush.bf16.msra.mxu0 %v1795
    %2152 = vmatpush.bf16.msra.mxu0 %v1791
    %2153 = vmatpush.bf16.msra.mxu0 %v1787
    %2154 = vmatpush.bf16.msra.mxu0 %v1783
    %2155 = vmatpush.bf16.msra.mxu0 %v1779
    %2156 = vmatpush.bf16.msra.mxu0 %v1775
    %2157 = vmatpush.bf16.msra.mxu0 %v1771
    %2158 = vmatmul.bf16.gmra.mxu0 %v512
    %v2159 = vpop.f32.mrf.mxu0
    %v2160 = vadd.f32 %v2147, %v2159
    %v2161 = vpop.f32.mrf.mxu0
    %2162 = vdwg.mxu0
    %2163 = vmatpush.bf16.msra.mxu0 %v1576
    %2164 = vmatpush.bf16.msra.mxu0 %v1572
    %2165 = vmatpush.bf16.msra.mxu0 %v1568
    %2166 = vmatpush.bf16.msra.mxu0 %v1564
    %2167 = vmatpush.bf16.msra.mxu0 %v1560
    %2168 = vmatpush.bf16.msra.mxu0 %v1556
    %2169 = vmatpush.bf16.msra.mxu0 %v1552
    %2170 = vmatpush.bf16.msra.mxu0 %v1548
    %2171 = vmatmul.bf16.gmra.mxu0 %v505
    %v2172 = vpop.f32.mrf.mxu0
    %v2173 = vadd.f32 %v772, %v2172
    %v2174 = vpop.f32.mrf.mxu0
    %2175 = vdwg.mxu0
    %2176 = vmatpush.bf16.msra.mxu0 %v1608
    %2177 = vmatpush.bf16.msra.mxu0 %v1604
    %2178 = vmatpush.bf16.msra.mxu0 %v1600
    %2179 = vmatpush.bf16.msra.mxu0 %v1596
    %2180 = vmatpush.bf16.msra.mxu0 %v1592
    %2181 = vmatpush.bf16.msra.mxu0 %v1588
    %2182 = vmatpush.bf16.msra.mxu0 %v1584
    %2183 = vmatpush.bf16.msra.mxu0 %v1580
    %2184 = vmatmul.bf16.gmra.mxu0 %v506
    %v2185 = vpop.f32.mrf.mxu0
    %v2186 = vadd.f32 %v2173, %v2185
    %v2187 = vpop.f32.mrf.mxu0
    %2188 = vdwg.mxu0
    %2189 = vmatpush.bf16.msra.mxu0 %v1640
    %2190 = vmatpush.bf16.msra.mxu0 %v1636
    %2191 = vmatpush.bf16.msra.mxu0 %v1632
    %2192 = vmatpush.bf16.msra.mxu0 %v1628
    %2193 = vmatpush.bf16.msra.mxu0 %v1624
    %2194 = vmatpush.bf16.msra.mxu0 %v1620
    %2195 = vmatpush.bf16.msra.mxu0 %v1616
    %2196 = vmatpush.bf16.msra.mxu0 %v1612
    %2197 = vmatmul.bf16.gmra.mxu0 %v507
    %v2198 = vpop.f32.mrf.mxu0
    %v2199 = vadd.f32 %v2186, %v2198
    %v2200 = vpop.f32.mrf.mxu0
    %2201 = vdwg.mxu0
    %2202 = vmatpush.bf16.msra.mxu0 %v1672
    %2203 = vmatpush.bf16.msra.mxu0 %v1668
    %2204 = vmatpush.bf16.msra.mxu0 %v1664
    %2205 = vmatpush.bf16.msra.mxu0 %v1660
    %2206 = vmatpush.bf16.msra.mxu0 %v1656
    %2207 = vmatpush.bf16.msra.mxu0 %v1652
    %2208 = vmatpush.bf16.msra.mxu0 %v1648
    %2209 = vmatpush.bf16.msra.mxu0 %v1644
    %2210 = vmatmul.bf16.gmra.mxu0 %v508
    %v2211 = vpop.f32.mrf.mxu0
    %v2212 = vadd.f32 %v2199, %v2211
    %v2213 = vpop.f32.mrf.mxu0
    %2214 = vdwg.mxu0
    %2215 = vmatpush.bf16.msra.mxu0 %v1704
    %2216 = vmatpush.bf16.msra.mxu0 %v1700
    %2217 = vmatpush.bf16.msra.mxu0 %v1696
    %2218 = vmatpush.bf16.msra.mxu0 %v1692
    %2219 = vmatpush.bf16.msra.mxu0 %v1688
    %2220 = vmatpush.bf16.msra.mxu0 %v1684
    %2221 = vmatpush.bf16.msra.mxu0 %v1680
    %2222 = vmatpush.bf16.msra.mxu0 %v1676
    %2223 = vmatmul.bf16.gmra.mxu0 %v509
    %v2224 = vpop.f32.mrf.mxu0
    %v2225 = vadd.f32 %v2212, %v2224
    %v2226 = vpop.f32.mrf.mxu0
    %2227 = vdwg.mxu0
    %2228 = vmatpush.bf16.msra.mxu0 %v1736
    %2229 = vmatpush.bf16.msra.mxu0 %v1732
    %2230 = vmatpush.bf16.msra.mxu0 %v1728
    %2231 = vmatpush.bf16.msra.mxu0 %v1724
    %2232 = vmatpush.bf16.msra.mxu0 %v1720
    %2233 = vmatpush.bf16.msra.mxu0 %v1716
    %2234 = vmatpush.bf16.msra.mxu0 %v1712
    %2235 = vmatpush.bf16.msra.mxu0 %v1708
    %2236 = vmatmul.bf16.gmra.mxu0 %v510
    %v2237 = vpop.f32.mrf.mxu0
    %v2238 = vadd.f32 %v2225, %v2237
    %v2239 = vpop.f32.mrf.mxu0
    %2240 = vdwg.mxu0
    %2241 = vmatpush.bf16.msra.mxu0 %v1768
    %2242 = vmatpush.bf16.msra.mxu0 %v1764
    %2243 = vmatpush.bf16.msra.mxu0 %v1760
    %2244 = vmatpush.bf16.msra.mxu0 %v1756
    %2245 = vmatpush.bf16.msra.mxu0 %v1752
    %2246 = vmatpush.bf16.msra.mxu0 %v1748
    %2247 = vmatpush.bf16.msra.mxu0 %v1744
    %2248 = vmatpush.bf16.msra.mxu0 %v1740
    %2249 = vmatmul.bf16.gmra.mxu0 %v511
    %v2250 = vpop.f32.mrf.mxu0
    %v2251 = vadd.f32 %v2238, %v2250
    %v2252 = vpop.f32.mrf.mxu0
    %2253 = vdwg.mxu0
    %2254 = vmatpush.bf16.msra.mxu0 %v1800
    %2255 = vmatpush.bf16.msra.mxu0 %v1796
    %2256 = vmatpush.bf16.msra.mxu0 %v1792
    %2257 = vmatpush.bf16.msra.mxu0 %v1788
    %2258 = vmatpush.bf16.msra.mxu0 %v1784
    %2259 = vmatpush.bf16.msra.mxu0 %v1780
    %2260 = vmatpush.bf16.msra.mxu0 %v1776
    %2261 = vmatpush.bf16.msra.mxu0 %v1772
    %2262 = vmatmul.bf16.gmra.mxu0 %v512
    %v2263 = vpop.f32.mrf.mxu0
    %v2264 = vadd.f32 %v2251, %v2263
    %v2265 = vpop.f32.mrf.mxu0
    %2266 = vdwg.mxu0
    %2267 = vmatpush.bf16.msra.mxu0 %v1577
    %2268 = vmatpush.bf16.msra.mxu0 %v1573
    %2269 = vmatpush.bf16.msra.mxu0 %v1569
    %2270 = vmatpush.bf16.msra.mxu0 %v1565
    %2271 = vmatpush.bf16.msra.mxu0 %v1561
    %2272 = vmatpush.bf16.msra.mxu0 %v1557
    %2273 = vmatpush.bf16.msra.mxu0 %v1553
    %2274 = vmatpush.bf16.msra.mxu0 %v1549
    %2275 = vmatmul.bf16.gmra.mxu0 %v505
    %v2276 = vpop.f32.mrf.mxu0
    %v2277 = vadd.f32 %v773, %v2276
    %v2278 = vpop.f32.mrf.mxu0
    %2279 = vdwg.mxu0
    %2280 = vmatpush.bf16.msra.mxu0 %v1609
    %2281 = vmatpush.bf16.msra.mxu0 %v1605
    %2282 = vmatpush.bf16.msra.mxu0 %v1601
    %2283 = vmatpush.bf16.msra.mxu0 %v1597
    %2284 = vmatpush.bf16.msra.mxu0 %v1593
    %2285 = vmatpush.bf16.msra.mxu0 %v1589
    %2286 = vmatpush.bf16.msra.mxu0 %v1585
    %2287 = vmatpush.bf16.msra.mxu0 %v1581
    %2288 = vmatmul.bf16.gmra.mxu0 %v506
    %v2289 = vpop.f32.mrf.mxu0
    %v2290 = vadd.f32 %v2277, %v2289
    %v2291 = vpop.f32.mrf.mxu0
    %2292 = vdwg.mxu0
    %2293 = vmatpush.bf16.msra.mxu0 %v1641
    %2294 = vmatpush.bf16.msra.mxu0 %v1637
    %2295 = vmatpush.bf16.msra.mxu0 %v1633
    %2296 = vmatpush.bf16.msra.mxu0 %v1629
    %2297 = vmatpush.bf16.msra.mxu0 %v1625
    %2298 = vmatpush.bf16.msra.mxu0 %v1621
    %2299 = vmatpush.bf16.msra.mxu0 %v1617
    %2300 = vmatpush.bf16.msra.mxu0 %v1613
    %2301 = vmatmul.bf16.gmra.mxu0 %v507
    %v2302 = vpop.f32.mrf.mxu0
    %v2303 = vadd.f32 %v2290, %v2302
    %v2304 = vpop.f32.mrf.mxu0
    %2305 = vdwg.mxu0
    %2306 = vmatpush.bf16.msra.mxu0 %v1673
    %2307 = vmatpush.bf16.msra.mxu0 %v1669
    %2308 = vmatpush.bf16.msra.mxu0 %v1665
    %2309 = vmatpush.bf16.msra.mxu0 %v1661
    %2310 = vmatpush.bf16.msra.mxu0 %v1657
    %2311 = vmatpush.bf16.msra.mxu0 %v1653
    %2312 = vmatpush.bf16.msra.mxu0 %v1649
    %2313 = vmatpush.bf16.msra.mxu0 %v1645
    %2314 = vmatmul.bf16.gmra.mxu0 %v508
    %v2315 = vpop.f32.mrf.mxu0
    %v2316 = vadd.f32 %v2303, %v2315
    %v2317 = vpop.f32.mrf.mxu0
    %2318 = vdwg.mxu0
    %2319 = vmatpush.bf16.msra.mxu0 %v1705
    %2320 = vmatpush.bf16.msra.mxu0 %v1701
    %2321 = vmatpush.bf16.msra.mxu0 %v1697
    %2322 = vmatpush.bf16.msra.mxu0 %v1693
    %2323 = vmatpush.bf16.msra.mxu0 %v1689
    %2324 = vmatpush.bf16.msra.mxu0 %v1685
    %2325 = vmatpush.bf16.msra.mxu0 %v1681
    %2326 = vmatpush.bf16.msra.mxu0 %v1677
    %2327 = vmatmul.bf16.gmra.mxu0 %v509
    %v2328 = vpop.f32.mrf.mxu0
    %v2329 = vadd.f32 %v2316, %v2328
    %v2330 = vpop.f32.mrf.mxu0
    %2331 = vdwg.mxu0
    %2332 = vmatpush.bf16.msra.mxu0 %v1737
    %2333 = vmatpush.bf16.msra.mxu0 %v1733
    %2334 = vmatpush.bf16.msra.mxu0 %v1729
    %2335 = vmatpush.bf16.msra.mxu0 %v1725
    %2336 = vmatpush.bf16.msra.mxu0 %v1721
    %2337 = vmatpush.bf16.msra.mxu0 %v1717
    %2338 = vmatpush.bf16.msra.mxu0 %v1713
    %2339 = vmatpush.bf16.msra.mxu0 %v1709
    %2340 = vmatmul.bf16.gmra.mxu0 %v510
    %v2341 = vpop.f32.mrf.mxu0
    %v2342 = vadd.f32 %v2329, %v2341
    %v2343 = vpop.f32.mrf.mxu0
    %2344 = vdwg.mxu0
    %2345 = vmatpush.bf16.msra.mxu0 %v1769
    %2346 = vmatpush.bf16.msra.mxu0 %v1765
    %2347 = vmatpush.bf16.msra.mxu0 %v1761
    %2348 = vmatpush.bf16.msra.mxu0 %v1757
    %2349 = vmatpush.bf16.msra.mxu0 %v1753
    %2350 = vmatpush.bf16.msra.mxu0 %v1749
    %2351 = vmatpush.bf16.msra.mxu0 %v1745
    %2352 = vmatpush.bf16.msra.mxu0 %v1741
    %2353 = vmatmul.bf16.gmra.mxu0 %v511
    %v2354 = vpop.f32.mrf.mxu0
    %v2355 = vadd.f32 %v2342, %v2354
    %v2356 = vpop.f32.mrf.mxu0
    %2357 = vdwg.mxu0
    %2358 = vmatpush.bf16.msra.mxu0 %v1801
    %2359 = vmatpush.bf16.msra.mxu0 %v1797
    %2360 = vmatpush.bf16.msra.mxu0 %v1793
    %2361 = vmatpush.bf16.msra.mxu0 %v1789
    %2362 = vmatpush.bf16.msra.mxu0 %v1785
    %2363 = vmatpush.bf16.msra.mxu0 %v1781
    %2364 = vmatpush.bf16.msra.mxu0 %v1777
    %2365 = vmatpush.bf16.msra.mxu0 %v1773
    %2366 = vmatmul.bf16.gmra.mxu0 %v512
    %v2367 = vpop.f32.mrf.mxu0
    %v2368 = vadd.f32 %v2355, %v2367
    %v2369 = vpop.f32.mrf.mxu0
    %2370 = vdwg.mxu0
    %2371 = vmatpush.bf16.msra.mxu0 %v1578
    %2372 = vmatpush.bf16.msra.mxu0 %v1574
    %2373 = vmatpush.bf16.msra.mxu0 %v1570
    %2374 = vmatpush.bf16.msra.mxu0 %v1566
    %2375 = vmatpush.bf16.msra.mxu0 %v1562
    %2376 = vmatpush.bf16.msra.mxu0 %v1558
    %2377 = vmatpush.bf16.msra.mxu0 %v1554
    %2378 = vmatpush.bf16.msra.mxu0 %v1550
    %2379 = vmatmul.bf16.gmra.mxu0 %v505
    %v2380 = vpop.f32.mrf.mxu0
    %v2381 = vadd.f32 %v774, %v2380
    %v2382 = vpop.f32.mrf.mxu0
    %2383 = vdwg.mxu0
    %2384 = vmatpush.bf16.msra.mxu0 %v1610
    %2385 = vmatpush.bf16.msra.mxu0 %v1606
    %2386 = vmatpush.bf16.msra.mxu0 %v1602
    %2387 = vmatpush.bf16.msra.mxu0 %v1598
    %2388 = vmatpush.bf16.msra.mxu0 %v1594
    %2389 = vmatpush.bf16.msra.mxu0 %v1590
    %2390 = vmatpush.bf16.msra.mxu0 %v1586
    %2391 = vmatpush.bf16.msra.mxu0 %v1582
    %2392 = vmatmul.bf16.gmra.mxu0 %v506
    %v2393 = vpop.f32.mrf.mxu0
    %v2394 = vadd.f32 %v2381, %v2393
    %v2395 = vpop.f32.mrf.mxu0
    %2396 = vdwg.mxu0
    %2397 = vmatpush.bf16.msra.mxu0 %v1642
    %2398 = vmatpush.bf16.msra.mxu0 %v1638
    %2399 = vmatpush.bf16.msra.mxu0 %v1634
    %2400 = vmatpush.bf16.msra.mxu0 %v1630
    %2401 = vmatpush.bf16.msra.mxu0 %v1626
    %2402 = vmatpush.bf16.msra.mxu0 %v1622
    %2403 = vmatpush.bf16.msra.mxu0 %v1618
    %2404 = vmatpush.bf16.msra.mxu0 %v1614
    %2405 = vmatmul.bf16.gmra.mxu0 %v507
    %v2406 = vpop.f32.mrf.mxu0
    %v2407 = vadd.f32 %v2394, %v2406
    %v2408 = vpop.f32.mrf.mxu0
    %2409 = vdwg.mxu0
    %2410 = vmatpush.bf16.msra.mxu0 %v1674
    %2411 = vmatpush.bf16.msra.mxu0 %v1670
    %2412 = vmatpush.bf16.msra.mxu0 %v1666
    %2413 = vmatpush.bf16.msra.mxu0 %v1662
    %2414 = vmatpush.bf16.msra.mxu0 %v1658
    %2415 = vmatpush.bf16.msra.mxu0 %v1654
    %2416 = vmatpush.bf16.msra.mxu0 %v1650
    %2417 = vmatpush.bf16.msra.mxu0 %v1646
    %2418 = vmatmul.bf16.gmra.mxu0 %v508
    %v2419 = vpop.f32.mrf.mxu0
    %v2420 = vadd.f32 %v2407, %v2419
    %v2421 = vpop.f32.mrf.mxu0
    %2422 = vdwg.mxu0
    %2423 = vmatpush.bf16.msra.mxu0 %v1706
    %2424 = vmatpush.bf16.msra.mxu0 %v1702
    %2425 = vmatpush.bf16.msra.mxu0 %v1698
    %2426 = vmatpush.bf16.msra.mxu0 %v1694
    %2427 = vmatpush.bf16.msra.mxu0 %v1690
    %2428 = vmatpush.bf16.msra.mxu0 %v1686
    %2429 = vmatpush.bf16.msra.mxu0 %v1682
    %2430 = vmatpush.bf16.msra.mxu0 %v1678
    %2431 = vmatmul.bf16.gmra.mxu0 %v509
    %v2432 = vpop.f32.mrf.mxu0
    %v2433 = vadd.f32 %v2420, %v2432
    %v2434 = vpop.f32.mrf.mxu0
    %2435 = vdwg.mxu0
    %2436 = vmatpush.bf16.msra.mxu0 %v1738
    %2437 = vmatpush.bf16.msra.mxu0 %v1734
    %2438 = vmatpush.bf16.msra.mxu0 %v1730
    %2439 = vmatpush.bf16.msra.mxu0 %v1726
    %2440 = vmatpush.bf16.msra.mxu0 %v1722
    %2441 = vmatpush.bf16.msra.mxu0 %v1718
    %2442 = vmatpush.bf16.msra.mxu0 %v1714
    %2443 = vmatpush.bf16.msra.mxu0 %v1710
    %2444 = vmatmul.bf16.gmra.mxu0 %v510
    %v2445 = vpop.f32.mrf.mxu0
    %v2446 = vadd.f32 %v2433, %v2445
    %v2447 = vpop.f32.mrf.mxu0
    %2448 = vdwg.mxu0
    %2449 = vmatpush.bf16.msra.mxu0 %v1770
    %2450 = vmatpush.bf16.msra.mxu0 %v1766
    %2451 = vmatpush.bf16.msra.mxu0 %v1762
    %2452 = vmatpush.bf16.msra.mxu0 %v1758
    %2453 = vmatpush.bf16.msra.mxu0 %v1754
    %2454 = vmatpush.bf16.msra.mxu0 %v1750
    %2455 = vmatpush.bf16.msra.mxu0 %v1746
    %2456 = vmatpush.bf16.msra.mxu0 %v1742
    %2457 = vmatmul.bf16.gmra.mxu0 %v511
    %v2458 = vpop.f32.mrf.mxu0
    %v2459 = vadd.f32 %v2446, %v2458
    %v2460 = vpop.f32.mrf.mxu0
    %2461 = vdwg.mxu0
    %2462 = vmatpush.bf16.msra.mxu0 %v1802
    %2463 = vmatpush.bf16.msra.mxu0 %v1798
    %2464 = vmatpush.bf16.msra.mxu0 %v1794
    %2465 = vmatpush.bf16.msra.mxu0 %v1790
    %2466 = vmatpush.bf16.msra.mxu0 %v1786
    %2467 = vmatpush.bf16.msra.mxu0 %v1782
    %2468 = vmatpush.bf16.msra.mxu0 %v1778
    %2469 = vmatpush.bf16.msra.mxu0 %v1774
    %2470 = vmatmul.bf16.gmra.mxu0 %v512
    %v2471 = vpop.f32.mrf.mxu0
    %v2472 = vadd.f32 %v2459, %v2471
    %v2473 = vpop.f32.mrf.mxu0
    %2474 = vdwg.mxu0
    %vm2475 = vcmp.gt.f32.partialorder %v2160, 0.0
    %vm2476 = vcmp.gt.f32.partialorder %v2264, 0.0
    %vm2477 = vcmp.gt.f32.partialorder %v2368, 0.0
    %vm2478 = vcmp.gt.f32.partialorder %v2472, 0.0
    %v2479 = vmul.f32 %v2160, 0.01
    %v2480 = vmul.f32 %v2264, 0.01
    %v2481 = vmul.f32 %v2368, 0.01
    %v2482 = vmul.f32 %v2472, 0.01
    %v2483 = vsel %vm2475, %v2160, %v2479
    %v2484 = vsel %vm2476, %v2264, %v2480
    %v2485 = vsel %vm2477, %v2368, %v2481
    %v2486 = vsel %vm2478, %v2472, %v2482
    %v2487 = vpack.c.bf16 %v2483, %v2483
    %v2488 = vpack.c.bf16 %v2484, %v2484
    %v2489 = vpack.c.bf16 %v2485, %v2485
    %v2490 = vpack.c.bf16 %v2486, %v2486
    %v2491 = vld [vmem:[#allocation13] sm:$0xff]
    %v2492 = vld [vmem:[#allocation13 + $0x8] sm:$0xff]
    %v2493 = vld [vmem:[#allocation13 + $0x10] sm:$0xff]
    %v2494 = vld [vmem:[#allocation13 + $0x18] sm:$0xff]
    %v2495 = vld [vmem:[#allocation13 + $0x20] sm:$0xff]
    %v2496 = vld [vmem:[#allocation13 + $0x28] sm:$0xff]
    %v2497 = vld [vmem:[#allocation13 + $0x30] sm:$0xff]
    %v2498 = vld [vmem:[#allocation13 + $0x38] sm:$0xff]
    %v2499 = vld [vmem:[#allocation13 + $0x40] sm:$0xff]
    %v2500 = vld [vmem:[#allocation13 + $0x48] sm:$0xff]
    %v2501 = vld [vmem:[#allocation13 + $0x50] sm:$0xff]
    %v2502 = vld [vmem:[#allocation13 + $0x58] sm:$0xff]
    %v2503 = vld [vmem:[#allocation13 + $0x60] sm:$0xff]
    %v2504 = vld [vmem:[#allocation13 + $0x68] sm:$0xff]
    %v2505 = vld [vmem:[#allocation13 + $0x70] sm:$0xff]
    %v2506 = vld [vmem:[#allocation13 + $0x78] sm:$0xff]
    %v2507 = vld [vmem:[#allocation13 + $0x80] sm:$0xff]
    %v2508 = vld [vmem:[#allocation13 + $0x88] sm:$0xff]
    %v2509 = vld [vmem:[#allocation13 + $0x90] sm:$0xff]
    %v2510 = vld [vmem:[#allocation13 + $0x98] sm:$0xff]
    %v2511 = vld [vmem:[#allocation13 + $0xa0] sm:$0xff]
    %v2512 = vld [vmem:[#allocation13 + $0xa8] sm:$0xff]
    %v2513 = vld [vmem:[#allocation13 + $0xb0] sm:$0xff]
    %v2514 = vld [vmem:[#allocation13 + $0xb8] sm:$0xff]
    %v2515 = vld [vmem:[#allocation13 + $0xc0] sm:$0xff]
    %v2516 = vld [vmem:[#allocation13 + $0xc8] sm:$0xff]
    %v2517 = vld [vmem:[#allocation13 + $0xd0] sm:$0xff]
    %v2518 = vld [vmem:[#allocation13 + $0xd8] sm:$0xff]
    %v2519 = vld [vmem:[#allocation13 + $0xe0] sm:$0xff]
    %v2520 = vld [vmem:[#allocation13 + $0xe8] sm:$0xff]
    %v2521 = vld [vmem:[#allocation13 + $0xf0] sm:$0xff]
    %v2522 = vld [vmem:[#allocation13 + $0xf8] sm:$0xff]
    %v2523 = vld [vmem:[#allocation13 + $0x100] sm:$0xff]
    %v2524 = vld [vmem:[#allocation13 + $0x108] sm:$0xff]
    %v2525 = vld [vmem:[#allocation13 + $0x110] sm:$0xff]
    %v2526 = vld [vmem:[#allocation13 + $0x118] sm:$0xff]
    %v2527 = vld [vmem:[#allocation13 + $0x120] sm:$0xff]
    %v2528 = vld [vmem:[#allocation13 + $0x128] sm:$0xff]
    %v2529 = vld [vmem:[#allocation13 + $0x130] sm:$0xff]
    %v2530 = vld [vmem:[#allocation13 + $0x138] sm:$0xff]
    %v2531 = vld [vmem:[#allocation13 + $0x140] sm:$0xff]
    %v2532 = vld [vmem:[#allocation13 + $0x148] sm:$0xff]
    %v2533 = vld [vmem:[#allocation13 + $0x150] sm:$0xff]
    %v2534 = vld [vmem:[#allocation13 + $0x158] sm:$0xff]
    %v2535 = vld [vmem:[#allocation13 + $0x160] sm:$0xff]
    %v2536 = vld [vmem:[#allocation13 + $0x168] sm:$0xff]
    %v2537 = vld [vmem:[#allocation13 + $0x170] sm:$0xff]
    %v2538 = vld [vmem:[#allocation13 + $0x178] sm:$0xff]
    %v2539 = vld [vmem:[#allocation13 + $0x180] sm:$0xff]
    %v2540 = vld [vmem:[#allocation13 + $0x188] sm:$0xff]
    %v2541 = vld [vmem:[#allocation13 + $0x190] sm:$0xff]
    %v2542 = vld [vmem:[#allocation13 + $0x198] sm:$0xff]
    %v2543 = vld [vmem:[#allocation13 + $0x1a0] sm:$0xff]
    %v2544 = vld [vmem:[#allocation13 + $0x1a8] sm:$0xff]
    %v2545 = vld [vmem:[#allocation13 + $0x1b0] sm:$0xff]
    %v2546 = vld [vmem:[#allocation13 + $0x1b8] sm:$0xff]
    %v2547 = vld [vmem:[#allocation13 + $0x1c0] sm:$0xff]
    %v2548 = vld [vmem:[#allocation13 + $0x1c8] sm:$0xff]
    %v2549 = vld [vmem:[#allocation13 + $0x1d0] sm:$0xff]
    %v2550 = vld [vmem:[#allocation13 + $0x1d8] sm:$0xff]
    %v2551 = vld [vmem:[#allocation13 + $0x1e0] sm:$0xff]
    %v2552 = vld [vmem:[#allocation13 + $0x1e8] sm:$0xff]
    %v2553 = vld [vmem:[#allocation13 + $0x1f0] sm:$0xff]
    %v2554 = vld [vmem:[#allocation13 + $0x1f8] sm:$0xff]
    %v2555 = vld [vmem:[#allocation14] sm:$0x3]
    %v2557 = vperm.slane %v2555, 0
    %v2558 = vperm.slane %v2555, 1
    %v2625 = vunpack.c.l.b16 %v2491
    %v2626 = vunpack.c.h.b16 %v2491
    %v2627 = vunpack.c.l.b16 %v2492
    %v2628 = vunpack.c.h.b16 %v2492
    %v2629 = vunpack.c.l.b16 %v2493
    %v2630 = vunpack.c.h.b16 %v2493
    %v2631 = vunpack.c.l.b16 %v2494
    %v2632 = vunpack.c.h.b16 %v2494
    %v2633 = vunpack.c.l.b16 %v2495
    %v2634 = vunpack.c.h.b16 %v2495
    %v2635 = vunpack.c.l.b16 %v2496
    %v2636 = vunpack.c.h.b16 %v2496
    %v2637 = vunpack.c.l.b16 %v2497
    %v2638 = vunpack.c.h.b16 %v2497
    %v2639 = vunpack.c.l.b16 %v2498
    %v2640 = vunpack.c.h.b16 %v2498
    %v2641 = vunpack.c.l.b16 %v2499
    %v2642 = vunpack.c.h.b16 %v2499
    %v2643 = vunpack.c.l.b16 %v2500
    %v2644 = vunpack.c.h.b16 %v2500
    %v2645 = vunpack.c.l.b16 %v2501
    %v2646 = vunpack.c.h.b16 %v2501
    %v2647 = vunpack.c.l.b16 %v2502
    %v2648 = vunpack.c.h.b16 %v2502
    %v2649 = vunpack.c.l.b16 %v2503
    %v2650 = vunpack.c.h.b16 %v2503
    %v2651 = vunpack.c.l.b16 %v2504
    %v2652 = vunpack.c.h.b16 %v2504
    %v2653 = vunpack.c.l.b16 %v2505
    %v2654 = vunpack.c.h.b16 %v2505
    %v2655 = vunpack.c.l.b16 %v2506
    %v2656 = vunpack.c.h.b16 %v2506
    %v2657 = vunpack.c.l.b16 %v2507
    %v2658 = vunpack.c.h.b16 %v2507
    %v2659 = vunpack.c.l.b16 %v2508
    %v2660 = vunpack.c.h.b16 %v2508
    %v2661 = vunpack.c.l.b16 %v2509
    %v2662 = vunpack.c.h.b16 %v2509
    %v2663 = vunpack.c.l.b16 %v2510
    %v2664 = vunpack.c.h.b16 %v2510
    %v2665 = vunpack.c.l.b16 %v2511
    %v2666 = vunpack.c.h.b16 %v2511
    %v2667 = vunpack.c.l.b16 %v2512
    %v2668 = vunpack.c.h.b16 %v2512
    %v2669 = vunpack.c.l.b16 %v2513
    %v2670 = vunpack.c.h.b16 %v2513
    %v2671 = vunpack.c.l.b16 %v2514
    %v2672 = vunpack.c.h.b16 %v2514
    %v2673 = vunpack.c.l.b16 %v2515
    %v2674 = vunpack.c.h.b16 %v2515
    %v2675 = vunpack.c.l.b16 %v2516
    %v2676 = vunpack.c.h.b16 %v2516
    %v2677 = vunpack.c.l.b16 %v2517
    %v2678 = vunpack.c.h.b16 %v2517
    %v2679 = vunpack.c.l.b16 %v2518
    %v2680 = vunpack.c.h.b16 %v2518
    %v2681 = vunpack.c.l.b16 %v2519
    %v2682 = vunpack.c.h.b16 %v2519
    %v2683 = vunpack.c.l.b16 %v2520
    %v2684 = vunpack.c.h.b16 %v2520
    %v2685 = vunpack.c.l.b16 %v2521
    %v2686 = vunpack.c.h.b16 %v2521
    %v2687 = vunpack.c.l.b16 %v2522
    %v2688 = vunpack.c.h.b16 %v2522
    %v2689 = vunpack.c.l.b16 %v2523
    %v2690 = vunpack.c.h.b16 %v2523
    %v2691 = vunpack.c.l.b16 %v2524
    %v2692 = vunpack.c.h.b16 %v2524
    %v2693 = vunpack.c.l.b16 %v2525
    %v2694 = vunpack.c.h.b16 %v2525
    %v2695 = vunpack.c.l.b16 %v2526
    %v2696 = vunpack.c.h.b16 %v2526
    %v2697 = vunpack.c.l.b16 %v2527
    %v2698 = vunpack.c.h.b16 %v2527
    %v2699 = vunpack.c.l.b16 %v2528
    %v2700 = vunpack.c.h.b16 %v2528
    %v2701 = vunpack.c.l.b16 %v2529
    %v2702 = vunpack.c.h.b16 %v2529
    %v2703 = vunpack.c.l.b16 %v2530
    %v2704 = vunpack.c.h.b16 %v2530
    %v2705 = vunpack.c.l.b16 %v2531
    %v2706 = vunpack.c.h.b16 %v2531
    %v2707 = vunpack.c.l.b16 %v2532
    %v2708 = vunpack.c.h.b16 %v2532
    %v2709 = vunpack.c.l.b16 %v2533
    %v2710 = vunpack.c.h.b16 %v2533
    %v2711 = vunpack.c.l.b16 %v2534
    %v2712 = vunpack.c.h.b16 %v2534
    %v2713 = vunpack.c.l.b16 %v2535
    %v2714 = vunpack.c.h.b16 %v2535
    %v2715 = vunpack.c.l.b16 %v2536
    %v2716 = vunpack.c.h.b16 %v2536
    %v2717 = vunpack.c.l.b16 %v2537
    %v2718 = vunpack.c.h.b16 %v2537
    %v2719 = vunpack.c.l.b16 %v2538
    %v2720 = vunpack.c.h.b16 %v2538
    %v2721 = vunpack.c.l.b16 %v2539
    %v2722 = vunpack.c.h.b16 %v2539
    %v2723 = vunpack.c.l.b16 %v2540
    %v2724 = vunpack.c.h.b16 %v2540
    %v2725 = vunpack.c.l.b16 %v2541
    %v2726 = vunpack.c.h.b16 %v2541
    %v2727 = vunpack.c.l.b16 %v2542
    %v2728 = vunpack.c.h.b16 %v2542
    %v2729 = vunpack.c.l.b16 %v2543
    %v2730 = vunpack.c.h.b16 %v2543
    %v2731 = vunpack.c.l.b16 %v2544
    %v2732 = vunpack.c.h.b16 %v2544
    %v2733 = vunpack.c.l.b16 %v2545
    %v2734 = vunpack.c.h.b16 %v2545
    %v2735 = vunpack.c.l.b16 %v2546
    %v2736 = vunpack.c.h.b16 %v2546
    %v2737 = vunpack.c.l.b16 %v2547
    %v2738 = vunpack.c.h.b16 %v2547
    %v2739 = vunpack.c.l.b16 %v2548
    %v2740 = vunpack.c.h.b16 %v2548
    %v2741 = vunpack.c.l.b16 %v2549
    %v2742 = vunpack.c.h.b16 %v2549
    %v2743 = vunpack.c.l.b16 %v2550
    %v2744 = vunpack.c.h.b16 %v2550
    %v2745 = vunpack.c.l.b16 %v2551
    %v2746 = vunpack.c.h.b16 %v2551
    %v2747 = vunpack.c.l.b16 %v2552
    %v2748 = vunpack.c.h.b16 %v2552
    %v2749 = vunpack.c.l.b16 %v2553
    %v2750 = vunpack.c.h.b16 %v2553
    %v2751 = vunpack.c.l.b16 %v2554
    %v2752 = vunpack.c.h.b16 %v2554
    %v2753 = vpack.c.b16 %v2627, %v2625
    %v2754 = vpack.c.b16 %v2628, %v2626
    %v2755 = vpack.c.b16 %v2631, %v2629
    %v2756 = vpack.c.b16 %v2632, %v2630
    %v2757 = vpack.c.b16 %v2635, %v2633
    %v2758 = vpack.c.b16 %v2636, %v2634
    %v2759 = vpack.c.b16 %v2639, %v2637
    %v2760 = vpack.c.b16 %v2640, %v2638
    %v2761 = vpack.c.b16 %v2643, %v2641
    %v2762 = vpack.c.b16 %v2644, %v2642
    %v2763 = vpack.c.b16 %v2647, %v2645
    %v2764 = vpack.c.b16 %v2648, %v2646
    %v2765 = vpack.c.b16 %v2651, %v2649
    %v2766 = vpack.c.b16 %v2652, %v2650
    %v2767 = vpack.c.b16 %v2655, %v2653
    %v2768 = vpack.c.b16 %v2656, %v2654
    %v2769 = vpack.c.b16 %v2659, %v2657
    %v2770 = vpack.c.b16 %v2660, %v2658
    %v2771 = vpack.c.b16 %v2663, %v2661
    %v2772 = vpack.c.b16 %v2664, %v2662
    %v2773 = vpack.c.b16 %v2667, %v2665
    %v2774 = vpack.c.b16 %v2668, %v2666
    %v2775 = vpack.c.b16 %v2671, %v2669
    %v2776 = vpack.c.b16 %v2672, %v2670
    %v2777 = vpack.c.b16 %v2675, %v2673
    %v2778 = vpack.c.b16 %v2676, %v2674
    %v2779 = vpack.c.b16 %v2679, %v2677
    %v2780 = vpack.c.b16 %v2680, %v2678
    %v2781 = vpack.c.b16 %v2683, %v2681
    %v2782 = vpack.c.b16 %v2684, %v2682
    %v2783 = vpack.c.b16 %v2687, %v2685
    %v2784 = vpack.c.b16 %v2688, %v2686
    %v2785 = vpack.c.b16 %v2691, %v2689
    %v2786 = vpack.c.b16 %v2692, %v2690
    %v2787 = vpack.c.b16 %v2695, %v2693
    %v2788 = vpack.c.b16 %v2696, %v2694
    %v2789 = vpack.c.b16 %v2699, %v2697
    %v2790 = vpack.c.b16 %v2700, %v2698
    %v2791 = vpack.c.b16 %v2703, %v2701
    %v2792 = vpack.c.b16 %v2704, %v2702
    %v2793 = vpack.c.b16 %v2707, %v2705
    %v2794 = vpack.c.b16 %v2708, %v2706
    %v2795 = vpack.c.b16 %v2711, %v2709
    %v2796 = vpack.c.b16 %v2712, %v2710
    %v2797 = vpack.c.b16 %v2715, %v2713
    %v2798 = vpack.c.b16 %v2716, %v2714
    %v2799 = vpack.c.b16 %v2719, %v2717
    %v2800 = vpack.c.b16 %v2720, %v2718
    %v2801 = vpack.c.b16 %v2723, %v2721
    %v2802 = vpack.c.b16 %v2724, %v2722
    %v2803 = vpack.c.b16 %v2727, %v2725
    %v2804 = vpack.c.b16 %v2728, %v2726
    %v2805 = vpack.c.b16 %v2731, %v2729
    %v2806 = vpack.c.b16 %v2732, %v2730
    %v2807 = vpack.c.b16 %v2735, %v2733
    %v2808 = vpack.c.b16 %v2736, %v2734
    %v2809 = vpack.c.b16 %v2739, %v2737
    %v2810 = vpack.c.b16 %v2740, %v2738
    %v2811 = vpack.c.b16 %v2743, %v2741
    %v2812 = vpack.c.b16 %v2744, %v2742
    %v2813 = vpack.c.b16 %v2747, %v2745
    %v2814 = vpack.c.b16 %v2748, %v2746
    %v2815 = vpack.c.b16 %v2751, %v2749
    %v2816 = vpack.c.b16 %v2752, %v2750
    %2881 = vmatpush.bf16.msra.mxu0 %v2767
    %2882 = vmatpush.bf16.msra.mxu0 %v2765
    %2883 = vmatpush.bf16.msra.mxu0 %v2763
    %2884 = vmatpush.bf16.msra.mxu0 %v2761
    %2885 = vmatpush.bf16.msra.mxu0 %v2759
    %2886 = vmatpush.bf16.msra.mxu0 %v2757
    %2887 = vmatpush.bf16.msra.mxu0 %v2755
    %2888 = vmatpush.bf16.msra.mxu0 %v2753
    %2889 = vmatmul.bf16.gmra.mxu0 %v2487
    %v2890 = vpop.f32.mrf.mxu0
    %v2891 = vadd.f32 %v2557, %v2890
    %v2892 = vpop.f32.mrf.mxu0
    %2893 = vdwg.mxu0
    %2894 = vmatpush.bf16.msra.mxu0 %v2783
    %2895 = vmatpush.bf16.msra.mxu0 %v2781
    %2896 = vmatpush.bf16.msra.mxu0 %v2779
    %2897 = vmatpush.bf16.msra.mxu0 %v2777
    %2898 = vmatpush.bf16.msra.mxu0 %v2775
    %2899 = vmatpush.bf16.msra.mxu0 %v2773
    %2900 = vmatpush.bf16.msra.mxu0 %v2771
    %2901 = vmatpush.bf16.msra.mxu0 %v2769
    %2902 = vmatmul.bf16.gmra.mxu0 %v2488
    %v2903 = vpop.f32.mrf.mxu0
    %v2904 = vadd.f32 %v2891, %v2903
    %v2905 = vpop.f32.mrf.mxu0
    %2906 = vdwg.mxu0
    %2907 = vmatpush.bf16.msra.mxu0 %v2799
    %2908 = vmatpush.bf16.msra.mxu0 %v2797
    %2909 = vmatpush.bf16.msra.mxu0 %v2795
    %2910 = vmatpush.bf16.msra.mxu0 %v2793
    %2911 = vmatpush.bf16.msra.mxu0 %v2791
    %2912 = vmatpush.bf16.msra.mxu0 %v2789
    %2913 = vmatpush.bf16.msra.mxu0 %v2787
    %2914 = vmatpush.bf16.msra.mxu0 %v2785
    %2915 = vmatmul.bf16.gmra.mxu0 %v2489
    %v2916 = vpop.f32.mrf.mxu0
    %v2917 = vadd.f32 %v2904, %v2916
    %v2918 = vpop.f32.mrf.mxu0
    %2919 = vdwg.mxu0
    %2920 = vmatpush.bf16.msra.mxu0 %v2815
    %2921 = vmatpush.bf16.msra.mxu0 %v2813
    %2922 = vmatpush.bf16.msra.mxu0 %v2811
    %2923 = vmatpush.bf16.msra.mxu0 %v2809
    %2924 = vmatpush.bf16.msra.mxu0 %v2807
    %2925 = vmatpush.bf16.msra.mxu0 %v2805
    %2926 = vmatpush.bf16.msra.mxu0 %v2803
    %2927 = vmatpush.bf16.msra.mxu0 %v2801
    %2928 = vmatmul.bf16.gmra.mxu0 %v2490
    %v2929 = vpop.f32.mrf.mxu0
    %v2930 = vadd.f32 %v2917, %v2929
    %v2931 = vpop.f32.mrf.mxu0
    %2932 = vdwg.mxu0
    %2933 = vmatpush.bf16.msra.mxu0 %v2768
    %2934 = vmatpush.bf16.msra.mxu0 %v2766
    %2935 = vmatpush.bf16.msra.mxu0 %v2764
    %2936 = vmatpush.bf16.msra.mxu0 %v2762
    %2937 = vmatpush.bf16.msra.mxu0 %v2760
    %2938 = vmatpush.bf16.msra.mxu0 %v2758
    %2939 = vmatpush.bf16.msra.mxu0 %v2756
    %2940 = vmatpush.bf16.msra.mxu0 %v2754
    %2941 = vmatmul.bf16.gmra.mxu0 %v2487
    %v2942 = vpop.f32.mrf.mxu0
    %v2943 = vadd.f32 %v2558, %v2942
    %v2944 = vpop.f32.mrf.mxu0
    %2945 = vdwg.mxu0
    %2946 = vmatpush.bf16.msra.mxu0 %v2784
    %2947 = vmatpush.bf16.msra.mxu0 %v2782
    %2948 = vmatpush.bf16.msra.mxu0 %v2780
    %2949 = vmatpush.bf16.msra.mxu0 %v2778
    %2950 = vmatpush.bf16.msra.mxu0 %v2776
    %2951 = vmatpush.bf16.msra.mxu0 %v2774
    %2952 = vmatpush.bf16.msra.mxu0 %v2772
    %2953 = vmatpush.bf16.msra.mxu0 %v2770
    %2954 = vmatmul.bf16.gmra.mxu0 %v2488
    %v2955 = vpop.f32.mrf.mxu0
    %v2956 = vadd.f32 %v2943, %v2955
    %v2957 = vpop.f32.mrf.mxu0
    %2958 = vdwg.mxu0
    %2959 = vmatpush.bf16.msra.mxu0 %v2800
    %2960 = vmatpush.bf16.msra.mxu0 %v2798
    %2961 = vmatpush.bf16.msra.mxu0 %v2796
    %2962 = vmatpush.bf16.msra.mxu0 %v2794
    %2963 = vmatpush.bf16.msra.mxu0 %v2792
    %2964 = vmatpush.bf16.msra.mxu0 %v2790
    %2965 = vmatpush.bf16.msra.mxu0 %v2788
    %2966 = vmatpush.bf16.msra.mxu0 %v2786
    %2967 = vmatmul.bf16.gmra.mxu0 %v2489
    %v2968 = vpop.f32.mrf.mxu0
    %v2969 = vadd.f32 %v2956, %v2968
    %v2970 = vpop.f32.mrf.mxu0
    %2971 = vdwg.mxu0
    %2972 = vmatpush.bf16.msra.mxu0 %v2816
    %2973 = vmatpush.bf16.msra.mxu0 %v2814
    %2974 = vmatpush.bf16.msra.mxu0 %v2812
    %2975 = vmatpush.bf16.msra.mxu0 %v2810
    %2976 = vmatpush.bf16.msra.mxu0 %v2808
    %2977 = vmatpush.bf16.msra.mxu0 %v2806
    %2978 = vmatpush.bf16.msra.mxu0 %v2804
    %2979 = vmatpush.bf16.msra.mxu0 %v2802
    %2980 = vmatmul.bf16.gmra.mxu0 %v2490
    %v2981 = vpop.f32.mrf.mxu0
    %v2982 = vadd.f32 %v2969, %v2981
    %v2983 = vpop.f32.mrf.mxu0
    %2984 = vdwg.mxu0
    %vm2985 = vcmp.gt.f32.partialorder %v2930, 0.0
    %vm2986 = vcmp.gt.f32.partialorder %v2982, 0.0
    %v2987 = vmul.f32 %v2930, 0.01
    %v2988 = vmul.f32 %v2982, 0.01
    %v2989 = vsel %vm2985, %v2930, %v2987
    %v2990 = vsel %vm2986, %v2982, %v2988
    %v2991 = vld [vmem:[#allocation5] sm:$0xff]
    %v2992 = vpack.c.bf16 %v2991, %v2991
    %v2993 = vld [vmem:[#allocation16] sm:$0xff]
    %v2994 = vld [vmem:[#allocation16 + $0x8] sm:$0xff]
    %v2995 = vld [vmem:[#allocation16 + $0x10] sm:$0xff]
    %v2996 = vld [vmem:[#allocation16 + $0x18] sm:$0xff]
    %v2997 = vld [vmem:[#allocation16 + $0x20] sm:$0xff]
    %v2998 = vld [vmem:[#allocation16 + $0x28] sm:$0xff]
    %v2999 = vld [vmem:[#allocation16 + $0x30] sm:$0xff]
    %v3000 = vld [vmem:[#allocation16 + $0x38] sm:$0xff]
    %v3001 = vld [vmem:[%s9] sm:$0xff]
    %v3003 = vperm.slane %v3001, 0
    %v3004 = vperm.slane %v3001, 1
    %v3005 = vperm.slane %v3001, 2
    %v3006 = vperm.slane %v3001, 3
    %v3007 = vperm.slane %v3001, 4
    %v3008 = vperm.slane %v3001, 5
    %v3009 = vperm.slane %v3001, 6
    %v3010 = vperm.slane %v3001, 7
    %v3027 = vunpack.c.l.b16 %v2993
    %v3028 = vunpack.c.h.b16 %v2993
    %v3029 = vunpack.c.l.b16 %v2994
    %v3030 = vunpack.c.h.b16 %v2994
    %v3031 = vunpack.c.l.b16 %v2995
    %v3032 = vunpack.c.h.b16 %v2995
    %v3033 = vunpack.c.l.b16 %v2996
    %v3034 = vunpack.c.h.b16 %v2996
    %v3035 = vunpack.c.l.b16 %v2997
    %v3036 = vunpack.c.h.b16 %v2997
    %v3037 = vunpack.c.l.b16 %v2998
    %v3038 = vunpack.c.h.b16 %v2998
    %v3039 = vunpack.c.l.b16 %v2999
    %v3040 = vunpack.c.h.b16 %v2999
    %v3041 = vunpack.c.l.b16 %v3000
    %v3042 = vunpack.c.h.b16 %v3000
    %v3043 = vpack.c.b16 %v3035, %v3027
    %v3044 = vpack.c.b16 %v3036, %v3028
    %v3045 = vpack.c.b16 %v3037, %v3029
    %v3046 = vpack.c.b16 %v3038, %v3030
    %v3047 = vpack.c.b16 %v3039, %v3031
    %v3048 = vpack.c.b16 %v3040, %v3032
    %v3049 = vpack.c.b16 %v3041, %v3033
    %v3050 = vpack.c.b16 %v3042, %v3034
    %vm3059 = vcmask 130048
    %v3061 = vsel %vm3059, %v2992, 0
    %3063 = vmatpush.bf16.msra.mxu0 0
    %3064 = vmatpush.bf16.msra.mxu0 0
    %3065 = vmatpush.bf16.msra.mxu0 0
    %3066 = vmatpush.bf16.msra.mxu0 0
    %3067 = vmatpush.bf16.msra.mxu0 0
    %3068 = vmatpush.bf16.msra.mxu0 0
    %3069 = vmatpush.bf16.msra.mxu0 0
    %3070 = vmatpush.bf16.msra.mxu0 %v3043
    %3071 = vmatmul.bf16.gmra.mxu0 %v3061
    %v3072 = vpop.f32.mrf.mxu0
    %v3073 = vadd.f32 %v3003, %v3072
    %v3074 = vpop.f32.mrf.mxu0
    %3075 = vdwg.mxu0
    %3076 = vmatpush.bf16.msra.mxu0 0
    %3077 = vmatpush.bf16.msra.mxu0 0
    %3078 = vmatpush.bf16.msra.mxu0 0
    %3079 = vmatpush.bf16.msra.mxu0 0
    %3080 = vmatpush.bf16.msra.mxu0 0
    %3081 = vmatpush.bf16.msra.mxu0 0
    %3082 = vmatpush.bf16.msra.mxu0 0
    %3083 = vmatpush.bf16.msra.mxu0 %v3044
    %3084 = vmatmul.bf16.gmra.mxu0 %v3061
    %v3085 = vpop.f32.mrf.mxu0
    %v3086 = vadd.f32 %v3004, %v3085
    %v3087 = vpop.f32.mrf.mxu0
    %3088 = vdwg.mxu0
    %3089 = vmatpush.bf16.msra.mxu0 0
    %3090 = vmatpush.bf16.msra.mxu0 0
    %3091 = vmatpush.bf16.msra.mxu0 0
    %3092 = vmatpush.bf16.msra.mxu0 0
    %3093 = vmatpush.bf16.msra.mxu0 0
    %3094 = vmatpush.bf16.msra.mxu0 0
    %3095 = vmatpush.bf16.msra.mxu0 0
    %3096 = vmatpush.bf16.msra.mxu0 %v3045
    %3097 = vmatmul.bf16.gmra.mxu0 %v3061
    %v3098 = vpop.f32.mrf.mxu0
    %v3099 = vadd.f32 %v3005, %v3098
    %v3100 = vpop.f32.mrf.mxu0
    %3101 = vdwg.mxu0
    %3102 = vmatpush.bf16.msra.mxu0 0
    %3103 = vmatpush.bf16.msra.mxu0 0
    %3104 = vmatpush.bf16.msra.mxu0 0
    %3105 = vmatpush.bf16.msra.mxu0 0
    %3106 = vmatpush.bf16.msra.mxu0 0
    %3107 = vmatpush.bf16.msra.mxu0 0
    %3108 = vmatpush.bf16.msra.mxu0 0
    %3109 = vmatpush.bf16.msra.mxu0 %v3046
    %3110 = vmatmul.bf16.gmra.mxu0 %v3061
    %v3111 = vpop.f32.mrf.mxu0
    %v3112 = vadd.f32 %v3006, %v3111
    %v3113 = vpop.f32.mrf.mxu0
    %3114 = vdwg.mxu0
    %3115 = vmatpush.bf16.msra.mxu0 0
    %3116 = vmatpush.bf16.msra.mxu0 0
    %3117 = vmatpush.bf16.msra.mxu0 0
    %3118 = vmatpush.bf16.msra.mxu0 0
    %3119 = vmatpush.bf16.msra.mxu0 0
    %3120 = vmatpush.bf16.msra.mxu0 0
    %3121 = vmatpush.bf16.msra.mxu0 0
    %3122 = vmatpush.bf16.msra.mxu0 %v3047
    %3123 = vmatmul.bf16.gmra.mxu0 %v3061
    %v3124 = vpop.f32.mrf.mxu0
    %v3125 = vadd.f32 %v3007, %v3124
    %v3126 = vpop.f32.mrf.mxu0
    %3127 = vdwg.mxu0
    %3128 = vmatpush.bf16.msra.mxu0 0
    %3129 = vmatpush.bf16.msra.mxu0 0
    %3130 = vmatpush.bf16.msra.mxu0 0
    %3131 = vmatpush.bf16.msra.mxu0 0
    %3132 = vmatpush.bf16.msra.mxu0 0
    %3133 = vmatpush.bf16.msra.mxu0 0
    %3134 = vmatpush.bf16.msra.mxu0 0
    %3135 = vmatpush.bf16.msra.mxu0 %v3048
    %3136 = vmatmul.bf16.gmra.mxu0 %v3061
    %v3137 = vpop.f32.mrf.mxu0
    %v3138 = vadd.f32 %v3008, %v3137
    %v3139 = vpop.f32.mrf.mxu0
    %3140 = vdwg.mxu0
    %3141 = vmatpush.bf16.msra.mxu0 0
    %3142 = vmatpush.bf16.msra.mxu0 0
    %3143 = vmatpush.bf16.msra.mxu0 0
    %3144 = vmatpush.bf16.msra.mxu0 0
    %3145 = vmatpush.bf16.msra.mxu0 0
    %3146 = vmatpush.bf16.msra.mxu0 0
    %3147 = vmatpush.bf16.msra.mxu0 0
    %3148 = vmatpush.bf16.msra.mxu0 %v3049
    %3149 = vmatmul.bf16.gmra.mxu0 %v3061
    %v3150 = vpop.f32.mrf.mxu0
    %v3151 = vadd.f32 %v3009, %v3150
    %v3152 = vpop.f32.mrf.mxu0
    %3153 = vdwg.mxu0
    %3154 = vmatpush.bf16.msra.mxu0 0
    %3155 = vmatpush.bf16.msra.mxu0 0
    %3156 = vmatpush.bf16.msra.mxu0 0
    %3157 = vmatpush.bf16.msra.mxu0 0
    %3158 = vmatpush.bf16.msra.mxu0 0
    %3159 = vmatpush.bf16.msra.mxu0 0
    %3160 = vmatpush.bf16.msra.mxu0 0
    %3161 = vmatpush.bf16.msra.mxu0 %v3050
    %3162 = vmatmul.bf16.gmra.mxu0 %v3061
    %v3163 = vpop.f32.mrf.mxu0
    %v3164 = vadd.f32 %v3010, %v3163
    %v3165 = vpop.f32.mrf.mxu0
    %3166 = vdwg.mxu0
    %vm3167 = vcmp.gt.f32.partialorder %v3073, 0.0
    %vm3168 = vcmp.gt.f32.partialorder %v3086, 0.0
    %vm3169 = vcmp.gt.f32.partialorder %v3099, 0.0
    %vm3170 = vcmp.gt.f32.partialorder %v3112, 0.0
    %vm3171 = vcmp.gt.f32.partialorder %v3125, 0.0
    %vm3172 = vcmp.gt.f32.partialorder %v3138, 0.0
    %vm3173 = vcmp.gt.f32.partialorder %v3151, 0.0
    %vm3174 = vcmp.gt.f32.partialorder %v3164, 0.0
    %v3175 = vmul.f32 %v3073, 0.01
    %v3176 = vmul.f32 %v3086, 0.01
    %v3177 = vmul.f32 %v3099, 0.01
    %v3178 = vmul.f32 %v3112, 0.01
    %v3179 = vmul.f32 %v3125, 0.01
    %v3180 = vmul.f32 %v3138, 0.01
    %v3181 = vmul.f32 %v3151, 0.01
    %v3182 = vmul.f32 %v3164, 0.01
    %v3183 = vsel %vm3167, %v3073, %v3175
    %v3184 = vsel %vm3168, %v3086, %v3176
    %v3185 = vsel %vm3169, %v3099, %v3177
    %v3186 = vsel %vm3170, %v3112, %v3178
    %v3187 = vsel %vm3171, %v3125, %v3179
    %v3188 = vsel %vm3172, %v3138, %v3180
    %v3189 = vsel %vm3173, %v3151, %v3181
    %v3190 = vsel %vm3174, %v3164, %v3182
    %v3191 = vpack.c.bf16 %v3183, %v3183
    %v3192 = vpack.c.bf16 %v3184, %v3184
    %v3193 = vpack.c.bf16 %v3185, %v3185
    %v3194 = vpack.c.bf16 %v3186, %v3186
    %v3195 = vpack.c.bf16 %v3187, %v3187
    %v3196 = vpack.c.bf16 %v3188, %v3188
    %v3197 = vpack.c.bf16 %v3189, %v3189
    %v3198 = vpack.c.bf16 %v3190, %v3190
    %v3199 = vld [vmem:[#allocation17] sm:$0xff]
    %v3200 = vld [vmem:[#allocation17 + $0x8] sm:$0xff]
    %v3201 = vld [vmem:[#allocation17 + $0x10] sm:$0xff]
    %v3202 = vld [vmem:[#allocation17 + $0x18] sm:$0xff]
    %v3203 = vld [vmem:[#allocation17 + $0x20] sm:$0xff]
    %v3204 = vld [vmem:[#allocation17 + $0x28] sm:$0xff]
    %v3205 = vld [vmem:[#allocation17 + $0x30] sm:$0xff]
    %v3206 = vld [vmem:[#allocation17 + $0x38] sm:$0xff]
    %v3207 = vld [vmem:[#allocation17 + $0x40] sm:$0xff]
    %v3208 = vld [vmem:[#allocation17 + $0x48] sm:$0xff]
    %v3209 = vld [vmem:[#allocation17 + $0x50] sm:$0xff]
    %v3210 = vld [vmem:[#allocation17 + $0x58] sm:$0xff]
    %v3211 = vld [vmem:[#allocation17 + $0x60] sm:$0xff]
    %v3212 = vld [vmem:[#allocation17 + $0x68] sm:$0xff]
    %v3213 = vld [vmem:[#allocation17 + $0x70] sm:$0xff]
    %v3214 = vld [vmem:[#allocation17 + $0x78] sm:$0xff]
    %v3215 = vld [vmem:[#allocation17 + $0x80] sm:$0xff]
    %v3216 = vld [vmem:[#allocation17 + $0x88] sm:$0xff]
    %v3217 = vld [vmem:[#allocation17 + $0x90] sm:$0xff]
    %v3218 = vld [vmem:[#allocation17 + $0x98] sm:$0xff]
    %v3219 = vld [vmem:[#allocation17 + $0xa0] sm:$0xff]
    %v3220 = vld [vmem:[#allocation17 + $0xa8] sm:$0xff]
    %v3221 = vld [vmem:[#allocation17 + $0xb0] sm:$0xff]
    %v3222 = vld [vmem:[#allocation17 + $0xb8] sm:$0xff]
    %v3223 = vld [vmem:[#allocation17 + $0xc0] sm:$0xff]
    %v3224 = vld [vmem:[#allocation17 + $0xc8] sm:$0xff]
    %v3225 = vld [vmem:[#allocation17 + $0xd0] sm:$0xff]
    %v3226 = vld [vmem:[#allocation17 + $0xd8] sm:$0xff]
    %v3227 = vld [vmem:[#allocation17 + $0xe0] sm:$0xff]
    %v3228 = vld [vmem:[#allocation17 + $0xe8] sm:$0xff]
    %v3229 = vld [vmem:[#allocation17 + $0xf0] sm:$0xff]
    %v3230 = vld [vmem:[#allocation17 + $0xf8] sm:$0xff]
    %v3231 = vld [vmem:[#allocation17 + $0x100] sm:$0xff]
    %v3232 = vld [vmem:[#allocation17 + $0x108] sm:$0xff]
    %v3233 = vld [vmem:[#allocation17 + $0x110] sm:$0xff]
    %v3234 = vld [vmem:[#allocation17 + $0x118] sm:$0xff]
    %v3235 = vld [vmem:[#allocation17 + $0x120] sm:$0xff]
    %v3236 = vld [vmem:[#allocation17 + $0x128] sm:$0xff]
    %v3237 = vld [vmem:[#allocation17 + $0x130] sm:$0xff]
    %v3238 = vld [vmem:[#allocation17 + $0x138] sm:$0xff]
    %v3239 = vld [vmem:[#allocation17 + $0x140] sm:$0xff]
    %v3240 = vld [vmem:[#allocation17 + $0x148] sm:$0xff]
    %v3241 = vld [vmem:[#allocation17 + $0x150] sm:$0xff]
    %v3242 = vld [vmem:[#allocation17 + $0x158] sm:$0xff]
    %v3243 = vld [vmem:[#allocation17 + $0x160] sm:$0xff]
    %v3244 = vld [vmem:[#allocation17 + $0x168] sm:$0xff]
    %v3245 = vld [vmem:[#allocation17 + $0x170] sm:$0xff]
    %v3246 = vld [vmem:[#allocation17 + $0x178] sm:$0xff]
    %v3247 = vld [vmem:[#allocation17 + $0x180] sm:$0xff]
    %v3248 = vld [vmem:[#allocation17 + $0x188] sm:$0xff]
    %v3249 = vld [vmem:[#allocation17 + $0x190] sm:$0xff]
    %v3250 = vld [vmem:[#allocation17 + $0x198] sm:$0xff]
    %v3251 = vld [vmem:[#allocation17 + $0x1a0] sm:$0xff]
    %v3252 = vld [vmem:[#allocation17 + $0x1a8] sm:$0xff]
    %v3253 = vld [vmem:[#allocation17 + $0x1b0] sm:$0xff]
    %v3254 = vld [vmem:[#allocation17 + $0x1b8] sm:$0xff]
    %v3255 = vld [vmem:[#allocation17 + $0x1c0] sm:$0xff]
    %v3256 = vld [vmem:[#allocation17 + $0x1c8] sm:$0xff]
    %v3257 = vld [vmem:[#allocation17 + $0x1d0] sm:$0xff]
    %v3258 = vld [vmem:[#allocation17 + $0x1d8] sm:$0xff]
    %v3259 = vld [vmem:[#allocation17 + $0x1e0] sm:$0xff]
    %v3260 = vld [vmem:[#allocation17 + $0x1e8] sm:$0xff]
    %v3261 = vld [vmem:[#allocation17 + $0x1f0] sm:$0xff]
    %v3262 = vld [vmem:[#allocation17 + $0x1f8] sm:$0xff]
    %v3263 = vld [vmem:[#allocation17 + $0x200] sm:$0xff]
    %v3264 = vld [vmem:[#allocation17 + $0x208] sm:$0xff]
    %v3265 = vld [vmem:[#allocation17 + $0x210] sm:$0xff]
    %v3266 = vld [vmem:[#allocation17 + $0x218] sm:$0xff]
    %v3267 = vld [vmem:[#allocation17 + $0x220] sm:$0xff]
    %v3268 = vld [vmem:[#allocation17 + $0x228] sm:$0xff]
    %v3269 = vld [vmem:[#allocation17 + $0x230] sm:$0xff]
    %v3270 = vld [vmem:[#allocation17 + $0x238] sm:$0xff]
    %v3271 = vld [vmem:[#allocation17 + $0x240] sm:$0xff]
    %v3272 = vld [vmem:[#allocation17 + $0x248] sm:$0xff]
    %v3273 = vld [vmem:[#allocation17 + $0x250] sm:$0xff]
    %v3274 = vld [vmem:[#allocation17 + $0x258] sm:$0xff]
    %v3275 = vld [vmem:[#allocation17 + $0x260] sm:$0xff]
    %v3276 = vld [vmem:[#allocation17 + $0x268] sm:$0xff]
    %v3277 = vld [vmem:[#allocation17 + $0x270] sm:$0xff]
    %v3278 = vld [vmem:[#allocation17 + $0x278] sm:$0xff]
    %v3279 = vld [vmem:[#allocation17 + $0x280] sm:$0xff]
    %v3280 = vld [vmem:[#allocation17 + $0x288] sm:$0xff]
    %v3281 = vld [vmem:[#allocation17 + $0x290] sm:$0xff]
    %v3282 = vld [vmem:[#allocation17 + $0x298] sm:$0xff]
    %v3283 = vld [vmem:[#allocation17 + $0x2a0] sm:$0xff]
    %v3284 = vld [vmem:[#allocation17 + $0x2a8] sm:$0xff]
    %v3285 = vld [vmem:[#allocation17 + $0x2b0] sm:$0xff]
    %v3286 = vld [vmem:[#allocation17 + $0x2b8] sm:$0xff]
    %v3287 = vld [vmem:[#allocation17 + $0x2c0] sm:$0xff]
    %v3288 = vld [vmem:[#allocation17 + $0x2c8] sm:$0xff]
    %v3289 = vld [vmem:[#allocation17 + $0x2d0] sm:$0xff]
    %v3290 = vld [vmem:[#allocation17 + $0x2d8] sm:$0xff]
    %v3291 = vld [vmem:[#allocation17 + $0x2e0] sm:$0xff]
    %v3292 = vld [vmem:[#allocation17 + $0x2e8] sm:$0xff]
    %v3293 = vld [vmem:[#allocation17 + $0x2f0] sm:$0xff]
    %v3294 = vld [vmem:[#allocation17 + $0x2f8] sm:$0xff]
    %v3295 = vld [vmem:[#allocation17 + $0x300] sm:$0xff]
    %v3296 = vld [vmem:[#allocation17 + $0x308] sm:$0xff]
    %v3297 = vld [vmem:[#allocation17 + $0x310] sm:$0xff]
    %v3298 = vld [vmem:[#allocation17 + $0x318] sm:$0xff]
    %v3299 = vld [vmem:[#allocation17 + $0x320] sm:$0xff]
    %v3300 = vld [vmem:[#allocation17 + $0x328] sm:$0xff]
    %v3301 = vld [vmem:[#allocation17 + $0x330] sm:$0xff]
    %v3302 = vld [vmem:[#allocation17 + $0x338] sm:$0xff]
    %v3303 = vld [vmem:[#allocation17 + $0x340] sm:$0xff]
    %v3304 = vld [vmem:[#allocation17 + $0x348] sm:$0xff]
    %v3305 = vld [vmem:[#allocation17 + $0x350] sm:$0xff]
    %v3306 = vld [vmem:[#allocation17 + $0x358] sm:$0xff]
    %v3307 = vld [vmem:[#allocation17 + $0x360] sm:$0xff]
    %v3308 = vld [vmem:[#allocation17 + $0x368] sm:$0xff]
    %v3309 = vld [vmem:[#allocation17 + $0x370] sm:$0xff]
    %v3310 = vld [vmem:[#allocation17 + $0x378] sm:$0xff]
    %v3311 = vld [vmem:[#allocation17 + $0x380] sm:$0xff]
    %v3312 = vld [vmem:[#allocation17 + $0x388] sm:$0xff]
    %v3313 = vld [vmem:[#allocation17 + $0x390] sm:$0xff]
    %v3314 = vld [vmem:[#allocation17 + $0x398] sm:$0xff]
    %v3315 = vld [vmem:[#allocation17 + $0x3a0] sm:$0xff]
    %v3316 = vld [vmem:[#allocation17 + $0x3a8] sm:$0xff]
    %v3317 = vld [vmem:[#allocation17 + $0x3b0] sm:$0xff]
    %v3318 = vld [vmem:[#allocation17 + $0x3b8] sm:$0xff]
    %v3319 = vld [vmem:[#allocation17 + $0x3c0] sm:$0xff]
    %v3320 = vld [vmem:[#allocation17 + $0x3c8] sm:$0xff]
    %v3321 = vld [vmem:[#allocation17 + $0x3d0] sm:$0xff]
    %v3322 = vld [vmem:[#allocation17 + $0x3d8] sm:$0xff]
    %v3323 = vld [vmem:[#allocation17 + $0x3e0] sm:$0xff]
    %v3324 = vld [vmem:[#allocation17 + $0x3e8] sm:$0xff]
    %v3325 = vld [vmem:[#allocation17 + $0x3f0] sm:$0xff]
    %v3326 = vld [vmem:[#allocation17 + $0x3f8] sm:$0xff]
    %v3327 = vld [vmem:[#allocation17 + $0x400] sm:$0xff]
    %v3328 = vld [vmem:[#allocation17 + $0x408] sm:$0xff]
    %v3329 = vld [vmem:[#allocation17 + $0x410] sm:$0xff]
    %v3330 = vld [vmem:[#allocation17 + $0x418] sm:$0xff]
    %v3331 = vld [vmem:[#allocation17 + $0x420] sm:$0xff]
    %v3332 = vld [vmem:[#allocation17 + $0x428] sm:$0xff]
    %v3333 = vld [vmem:[#allocation17 + $0x430] sm:$0xff]
    %v3334 = vld [vmem:[#allocation17 + $0x438] sm:$0xff]
    %v3335 = vld [vmem:[#allocation17 + $0x440] sm:$0xff]
    %v3336 = vld [vmem:[#allocation17 + $0x448] sm:$0xff]
    %v3337 = vld [vmem:[#allocation17 + $0x450] sm:$0xff]
    %v3338 = vld [vmem:[#allocation17 + $0x458] sm:$0xff]
    %v3339 = vld [vmem:[#allocation17 + $0x460] sm:$0xff]
    %v3340 = vld [vmem:[#allocation17 + $0x468] sm:$0xff]
    %v3341 = vld [vmem:[#allocation17 + $0x470] sm:$0xff]
    %v3342 = vld [vmem:[#allocation17 + $0x478] sm:$0xff]
    %v3343 = vld [vmem:[#allocation17 + $0x480] sm:$0xff]
    %v3344 = vld [vmem:[#allocation17 + $0x488] sm:$0xff]
    %v3345 = vld [vmem:[#allocation17 + $0x490] sm:$0xff]
    %v3346 = vld [vmem:[#allocation17 + $0x498] sm:$0xff]
    %v3347 = vld [vmem:[#allocation17 + $0x4a0] sm:$0xff]
    %v3348 = vld [vmem:[#allocation17 + $0x4a8] sm:$0xff]
    %v3349 = vld [vmem:[#allocation17 + $0x4b0] sm:$0xff]
    %v3350 = vld [vmem:[#allocation17 + $0x4b8] sm:$0xff]
    %v3351 = vld [vmem:[#allocation17 + $0x4c0] sm:$0xff]
    %v3352 = vld [vmem:[#allocation17 + $0x4c8] sm:$0xff]
    %v3353 = vld [vmem:[#allocation17 + $0x4d0] sm:$0xff]
    %v3354 = vld [vmem:[#allocation17 + $0x4d8] sm:$0xff]
    %v3355 = vld [vmem:[#allocation17 + $0x4e0] sm:$0xff]
    %v3356 = vld [vmem:[#allocation17 + $0x4e8] sm:$0xff]
    %v3357 = vld [vmem:[#allocation17 + $0x4f0] sm:$0xff]
    %v3358 = vld [vmem:[#allocation17 + $0x4f8] sm:$0xff]
    %v3359 = vld [vmem:[#allocation17 + $0x500] sm:$0xff]
    %v3360 = vld [vmem:[#allocation17 + $0x508] sm:$0xff]
    %v3361 = vld [vmem:[#allocation17 + $0x510] sm:$0xff]
    %v3362 = vld [vmem:[#allocation17 + $0x518] sm:$0xff]
    %v3363 = vld [vmem:[#allocation17 + $0x520] sm:$0xff]
    %v3364 = vld [vmem:[#allocation17 + $0x528] sm:$0xff]
    %v3365 = vld [vmem:[#allocation17 + $0x530] sm:$0xff]
    %v3366 = vld [vmem:[#allocation17 + $0x538] sm:$0xff]
    %v3367 = vld [vmem:[#allocation17 + $0x540] sm:$0xff]
    %v3368 = vld [vmem:[#allocation17 + $0x548] sm:$0xff]
    %v3369 = vld [vmem:[#allocation17 + $0x550] sm:$0xff]
    %v3370 = vld [vmem:[#allocation17 + $0x558] sm:$0xff]
    %v3371 = vld [vmem:[#allocation17 + $0x560] sm:$0xff]
    %v3372 = vld [vmem:[#allocation17 + $0x568] sm:$0xff]
    %v3373 = vld [vmem:[#allocation17 + $0x570] sm:$0xff]
    %v3374 = vld [vmem:[#allocation17 + $0x578] sm:$0xff]
    %v3375 = vld [vmem:[#allocation17 + $0x580] sm:$0xff]
    %v3376 = vld [vmem:[#allocation17 + $0x588] sm:$0xff]
    %v3377 = vld [vmem:[#allocation17 + $0x590] sm:$0xff]
    %v3378 = vld [vmem:[#allocation17 + $0x598] sm:$0xff]
    %v3379 = vld [vmem:[#allocation17 + $0x5a0] sm:$0xff]
    %v3380 = vld [vmem:[#allocation17 + $0x5a8] sm:$0xff]
    %v3381 = vld [vmem:[#allocation17 + $0x5b0] sm:$0xff]
    %v3382 = vld [vmem:[#allocation17 + $0x5b8] sm:$0xff]
    %v3383 = vld [vmem:[#allocation17 + $0x5c0] sm:$0xff]
    %v3384 = vld [vmem:[#allocation17 + $0x5c8] sm:$0xff]
    %v3385 = vld [vmem:[#allocation17 + $0x5d0] sm:$0xff]
    %v3386 = vld [vmem:[#allocation17 + $0x5d8] sm:$0xff]
    %v3387 = vld [vmem:[#allocation17 + $0x5e0] sm:$0xff]
    %v3388 = vld [vmem:[#allocation17 + $0x5e8] sm:$0xff]
    %v3389 = vld [vmem:[#allocation17 + $0x5f0] sm:$0xff]
    %v3390 = vld [vmem:[#allocation17 + $0x5f8] sm:$0xff]
    %v3391 = vld [vmem:[#allocation17 + $0x600] sm:$0xff]
    %v3392 = vld [vmem:[#allocation17 + $0x608] sm:$0xff]
    %v3393 = vld [vmem:[#allocation17 + $0x610] sm:$0xff]
    %v3394 = vld [vmem:[#allocation17 + $0x618] sm:$0xff]
    %v3395 = vld [vmem:[#allocation17 + $0x620] sm:$0xff]
    %v3396 = vld [vmem:[#allocation17 + $0x628] sm:$0xff]
    %v3397 = vld [vmem:[#allocation17 + $0x630] sm:$0xff]
    %v3398 = vld [vmem:[#allocation17 + $0x638] sm:$0xff]
    %v3399 = vld [vmem:[#allocation17 + $0x640] sm:$0xff]
    %v3400 = vld [vmem:[#allocation17 + $0x648] sm:$0xff]
    %v3401 = vld [vmem:[#allocation17 + $0x650] sm:$0xff]
    %v3402 = vld [vmem:[#allocation17 + $0x658] sm:$0xff]
    %v3403 = vld [vmem:[#allocation17 + $0x660] sm:$0xff]
    %v3404 = vld [vmem:[#allocation17 + $0x668] sm:$0xff]
    %v3405 = vld [vmem:[#allocation17 + $0x670] sm:$0xff]
    %v3406 = vld [vmem:[#allocation17 + $0x678] sm:$0xff]
    %v3407 = vld [vmem:[#allocation17 + $0x680] sm:$0xff]
    %v3408 = vld [vmem:[#allocation17 + $0x688] sm:$0xff]
    %v3409 = vld [vmem:[#allocation17 + $0x690] sm:$0xff]
    %v3410 = vld [vmem:[#allocation17 + $0x698] sm:$0xff]
    %v3411 = vld [vmem:[#allocation17 + $0x6a0] sm:$0xff]
    %v3412 = vld [vmem:[#allocation17 + $0x6a8] sm:$0xff]
    %v3413 = vld [vmem:[#allocation17 + $0x6b0] sm:$0xff]
    %v3414 = vld [vmem:[#allocation17 + $0x6b8] sm:$0xff]
    %v3415 = vld [vmem:[#allocation17 + $0x6c0] sm:$0xff]
    %v3416 = vld [vmem:[#allocation17 + $0x6c8] sm:$0xff]
    %v3417 = vld [vmem:[#allocation17 + $0x6d0] sm:$0xff]
    %v3418 = vld [vmem:[#allocation17 + $0x6d8] sm:$0xff]
    %v3419 = vld [vmem:[#allocation17 + $0x6e0] sm:$0xff]
    %v3420 = vld [vmem:[#allocation17 + $0x6e8] sm:$0xff]
    %v3421 = vld [vmem:[#allocation17 + $0x6f0] sm:$0xff]
    %v3422 = vld [vmem:[#allocation17 + $0x6f8] sm:$0xff]
    %v3423 = vld [vmem:[#allocation17 + $0x700] sm:$0xff]
    %v3424 = vld [vmem:[#allocation17 + $0x708] sm:$0xff]
    %v3425 = vld [vmem:[#allocation17 + $0x710] sm:$0xff]
    %v3426 = vld [vmem:[#allocation17 + $0x718] sm:$0xff]
    %v3427 = vld [vmem:[#allocation17 + $0x720] sm:$0xff]
    %v3428 = vld [vmem:[#allocation17 + $0x728] sm:$0xff]
    %v3429 = vld [vmem:[#allocation17 + $0x730] sm:$0xff]
    %v3430 = vld [vmem:[#allocation17 + $0x738] sm:$0xff]
    %v3431 = vld [vmem:[#allocation17 + $0x740] sm:$0xff]
    %v3432 = vld [vmem:[#allocation17 + $0x748] sm:$0xff]
    %v3433 = vld [vmem:[#allocation17 + $0x750] sm:$0xff]
    %v3434 = vld [vmem:[#allocation17 + $0x758] sm:$0xff]
    %v3435 = vld [vmem:[#allocation17 + $0x760] sm:$0xff]
    %v3436 = vld [vmem:[#allocation17 + $0x768] sm:$0xff]
    %v3437 = vld [vmem:[#allocation17 + $0x770] sm:$0xff]
    %v3438 = vld [vmem:[#allocation17 + $0x778] sm:$0xff]
    %v3439 = vld [vmem:[#allocation17 + $0x780] sm:$0xff]
    %v3440 = vld [vmem:[#allocation17 + $0x788] sm:$0xff]
    %v3441 = vld [vmem:[#allocation17 + $0x790] sm:$0xff]
    %v3442 = vld [vmem:[#allocation17 + $0x798] sm:$0xff]
    %v3443 = vld [vmem:[#allocation17 + $0x7a0] sm:$0xff]
    %v3444 = vld [vmem:[#allocation17 + $0x7a8] sm:$0xff]
    %v3445 = vld [vmem:[#allocation17 + $0x7b0] sm:$0xff]
    %v3446 = vld [vmem:[#allocation17 + $0x7b8] sm:$0xff]
    %v3447 = vld [vmem:[#allocation17 + $0x7c0] sm:$0xff]
    %v3448 = vld [vmem:[#allocation17 + $0x7c8] sm:$0xff]
    %v3449 = vld [vmem:[#allocation17 + $0x7d0] sm:$0xff]
    %v3450 = vld [vmem:[#allocation17 + $0x7d8] sm:$0xff]
    %v3451 = vld [vmem:[#allocation17 + $0x7e0] sm:$0xff]
    %v3452 = vld [vmem:[#allocation17 + $0x7e8] sm:$0xff]
    %v3453 = vld [vmem:[#allocation17 + $0x7f0] sm:$0xff]
    %v3454 = vld [vmem:[#allocation17 + $0x7f8] sm:$0xff]
    %v3455 = vld [vmem:[%s11] sm:$0xf]
    %v3457 = vperm.slane %v3455, 0
    %v3458 = vperm.slane %v3455, 1
    %v3459 = vperm.slane %v3455, 2
    %v3460 = vperm.slane %v3455, 3
    %v3721 = vunpack.c.l.b16 %v3199
    %v3722 = vunpack.c.h.b16 %v3199
    %v3723 = vunpack.c.l.b16 %v3200
    %v3724 = vunpack.c.h.b16 %v3200
    %v3725 = vunpack.c.l.b16 %v3201
    %v3726 = vunpack.c.h.b16 %v3201
    %v3727 = vunpack.c.l.b16 %v3202
    %v3728 = vunpack.c.h.b16 %v3202
    %v3729 = vunpack.c.l.b16 %v3203
    %v3730 = vunpack.c.h.b16 %v3203
    %v3731 = vunpack.c.l.b16 %v3204
    %v3732 = vunpack.c.h.b16 %v3204
    %v3733 = vunpack.c.l.b16 %v3205
    %v3734 = vunpack.c.h.b16 %v3205
    %v3735 = vunpack.c.l.b16 %v3206
    %v3736 = vunpack.c.h.b16 %v3206
    %v3737 = vunpack.c.l.b16 %v3207
    %v3738 = vunpack.c.h.b16 %v3207
    %v3739 = vunpack.c.l.b16 %v3208
    %v3740 = vunpack.c.h.b16 %v3208
    %v3741 = vunpack.c.l.b16 %v3209
    %v3742 = vunpack.c.h.b16 %v3209
    %v3743 = vunpack.c.l.b16 %v3210
    %v3744 = vunpack.c.h.b16 %v3210
    %v3745 = vunpack.c.l.b16 %v3211
    %v3746 = vunpack.c.h.b16 %v3211
    %v3747 = vunpack.c.l.b16 %v3212
    %v3748 = vunpack.c.h.b16 %v3212
    %v3749 = vunpack.c.l.b16 %v3213
    %v3750 = vunpack.c.h.b16 %v3213
    %v3751 = vunpack.c.l.b16 %v3214
    %v3752 = vunpack.c.h.b16 %v3214
    %v3753 = vunpack.c.l.b16 %v3215
    %v3754 = vunpack.c.h.b16 %v3215
    %v3755 = vunpack.c.l.b16 %v3216
    %v3756 = vunpack.c.h.b16 %v3216
    %v3757 = vunpack.c.l.b16 %v3217
    %v3758 = vunpack.c.h.b16 %v3217
    %v3759 = vunpack.c.l.b16 %v3218
    %v3760 = vunpack.c.h.b16 %v3218
    %v3761 = vunpack.c.l.b16 %v3219
    %v3762 = vunpack.c.h.b16 %v3219
    %v3763 = vunpack.c.l.b16 %v3220
    %v3764 = vunpack.c.h.b16 %v3220
    %v3765 = vunpack.c.l.b16 %v3221
    %v3766 = vunpack.c.h.b16 %v3221
    %v3767 = vunpack.c.l.b16 %v3222
    %v3768 = vunpack.c.h.b16 %v3222
    %v3769 = vunpack.c.l.b16 %v3223
    %v3770 = vunpack.c.h.b16 %v3223
    %v3771 = vunpack.c.l.b16 %v3224
    %v3772 = vunpack.c.h.b16 %v3224
    %v3773 = vunpack.c.l.b16 %v3225
    %v3774 = vunpack.c.h.b16 %v3225
    %v3775 = vunpack.c.l.b16 %v3226
    %v3776 = vunpack.c.h.b16 %v3226
    %v3777 = vunpack.c.l.b16 %v3227
    %v3778 = vunpack.c.h.b16 %v3227
    %v3779 = vunpack.c.l.b16 %v3228
    %v3780 = vunpack.c.h.b16 %v3228
    %v3781 = vunpack.c.l.b16 %v3229
    %v3782 = vunpack.c.h.b16 %v3229
    %v3783 = vunpack.c.l.b16 %v3230
    %v3784 = vunpack.c.h.b16 %v3230
    %v3785 = vunpack.c.l.b16 %v3231
    %v3786 = vunpack.c.h.b16 %v3231
    %v3787 = vunpack.c.l.b16 %v3232
    %v3788 = vunpack.c.h.b16 %v3232
    %v3789 = vunpack.c.l.b16 %v3233
    %v3790 = vunpack.c.h.b16 %v3233
    %v3791 = vunpack.c.l.b16 %v3234
    %v3792 = vunpack.c.h.b16 %v3234
    %v3793 = vunpack.c.l.b16 %v3235
    %v3794 = vunpack.c.h.b16 %v3235
    %v3795 = vunpack.c.l.b16 %v3236
    %v3796 = vunpack.c.h.b16 %v3236
    %v3797 = vunpack.c.l.b16 %v3237
    %v3798 = vunpack.c.h.b16 %v3237
    %v3799 = vunpack.c.l.b16 %v3238
    %v3800 = vunpack.c.h.b16 %v3238
    %v3801 = vunpack.c.l.b16 %v3239
    %v3802 = vunpack.c.h.b16 %v3239
    %v3803 = vunpack.c.l.b16 %v3240
    %v3804 = vunpack.c.h.b16 %v3240
    %v3805 = vunpack.c.l.b16 %v3241
    %v3806 = vunpack.c.h.b16 %v3241
    %v3807 = vunpack.c.l.b16 %v3242
    %v3808 = vunpack.c.h.b16 %v3242
    %v3809 = vunpack.c.l.b16 %v3243
    %v3810 = vunpack.c.h.b16 %v3243
    %v3811 = vunpack.c.l.b16 %v3244
    %v3812 = vunpack.c.h.b16 %v3244
    %v3813 = vunpack.c.l.b16 %v3245
    %v3814 = vunpack.c.h.b16 %v3245
    %v3815 = vunpack.c.l.b16 %v3246
    %v3816 = vunpack.c.h.b16 %v3246
    %v3817 = vunpack.c.l.b16 %v3247
    %v3818 = vunpack.c.h.b16 %v3247
    %v3819 = vunpack.c.l.b16 %v3248
    %v3820 = vunpack.c.h.b16 %v3248
    %v3821 = vunpack.c.l.b16 %v3249
    %v3822 = vunpack.c.h.b16 %v3249
    %v3823 = vunpack.c.l.b16 %v3250
    %v3824 = vunpack.c.h.b16 %v3250
    %v3825 = vunpack.c.l.b16 %v3251
    %v3826 = vunpack.c.h.b16 %v3251
    %v3827 = vunpack.c.l.b16 %v3252
    %v3828 = vunpack.c.h.b16 %v3252
    %v3829 = vunpack.c.l.b16 %v3253
    %v3830 = vunpack.c.h.b16 %v3253
    %v3831 = vunpack.c.l.b16 %v3254
    %v3832 = vunpack.c.h.b16 %v3254
    %v3833 = vunpack.c.l.b16 %v3255
    %v3834 = vunpack.c.h.b16 %v3255
    %v3835 = vunpack.c.l.b16 %v3256
    %v3836 = vunpack.c.h.b16 %v3256
    %v3837 = vunpack.c.l.b16 %v3257
    %v3838 = vunpack.c.h.b16 %v3257
    %v3839 = vunpack.c.l.b16 %v3258
    %v3840 = vunpack.c.h.b16 %v3258
    %v3841 = vunpack.c.l.b16 %v3259
    %v3842 = vunpack.c.h.b16 %v3259
    %v3843 = vunpack.c.l.b16 %v3260
    %v3844 = vunpack.c.h.b16 %v3260
    %v3845 = vunpack.c.l.b16 %v3261
    %v3846 = vunpack.c.h.b16 %v3261
    %v3847 = vunpack.c.l.b16 %v3262
    %v3848 = vunpack.c.h.b16 %v3262
    %v3849 = vunpack.c.l.b16 %v3263
    %v3850 = vunpack.c.h.b16 %v3263
    %v3851 = vunpack.c.l.b16 %v3264
    %v3852 = vunpack.c.h.b16 %v3264
    %v3853 = vunpack.c.l.b16 %v3265
    %v3854 = vunpack.c.h.b16 %v3265
    %v3855 = vunpack.c.l.b16 %v3266
    %v3856 = vunpack.c.h.b16 %v3266
    %v3857 = vunpack.c.l.b16 %v3267
    %v3858 = vunpack.c.h.b16 %v3267
    %v3859 = vunpack.c.l.b16 %v3268
    %v3860 = vunpack.c.h.b16 %v3268
    %v3861 = vunpack.c.l.b16 %v3269
    %v3862 = vunpack.c.h.b16 %v3269
    %v3863 = vunpack.c.l.b16 %v3270
    %v3864 = vunpack.c.h.b16 %v3270
    %v3865 = vunpack.c.l.b16 %v3271
    %v3866 = vunpack.c.h.b16 %v3271
    %v3867 = vunpack.c.l.b16 %v3272
    %v3868 = vunpack.c.h.b16 %v3272
    %v3869 = vunpack.c.l.b16 %v3273
    %v3870 = vunpack.c.h.b16 %v3273
    %v3871 = vunpack.c.l.b16 %v3274
    %v3872 = vunpack.c.h.b16 %v3274
    %v3873 = vunpack.c.l.b16 %v3275
    %v3874 = vunpack.c.h.b16 %v3275
    %v3875 = vunpack.c.l.b16 %v3276
    %v3876 = vunpack.c.h.b16 %v3276
    %v3877 = vunpack.c.l.b16 %v3277
    %v3878 = vunpack.c.h.b16 %v3277
    %v3879 = vunpack.c.l.b16 %v3278
    %v3880 = vunpack.c.h.b16 %v3278
    %v3881 = vunpack.c.l.b16 %v3279
    %v3882 = vunpack.c.h.b16 %v3279
    %v3883 = vunpack.c.l.b16 %v3280
    %v3884 = vunpack.c.h.b16 %v3280
    %v3885 = vunpack.c.l.b16 %v3281
    %v3886 = vunpack.c.h.b16 %v3281
    %v3887 = vunpack.c.l.b16 %v3282
    %v3888 = vunpack.c.h.b16 %v3282
    %v3889 = vunpack.c.l.b16 %v3283
    %v3890 = vunpack.c.h.b16 %v3283
    %v3891 = vunpack.c.l.b16 %v3284
    %v3892 = vunpack.c.h.b16 %v3284
    %v3893 = vunpack.c.l.b16 %v3285
    %v3894 = vunpack.c.h.b16 %v3285
    %v3895 = vunpack.c.l.b16 %v3286
    %v3896 = vunpack.c.h.b16 %v3286
    %v3897 = vunpack.c.l.b16 %v3287
    %v3898 = vunpack.c.h.b16 %v3287
    %v3899 = vunpack.c.l.b16 %v3288
    %v3900 = vunpack.c.h.b16 %v3288
    %v3901 = vunpack.c.l.b16 %v3289
    %v3902 = vunpack.c.h.b16 %v3289
    %v3903 = vunpack.c.l.b16 %v3290
    %v3904 = vunpack.c.h.b16 %v3290
    %v3905 = vunpack.c.l.b16 %v3291
    %v3906 = vunpack.c.h.b16 %v3291
    %v3907 = vunpack.c.l.b16 %v3292
    %v3908 = vunpack.c.h.b16 %v3292
    %v3909 = vunpack.c.l.b16 %v3293
    %v3910 = vunpack.c.h.b16 %v3293
    %v3911 = vunpack.c.l.b16 %v3294
    %v3912 = vunpack.c.h.b16 %v3294
    %v3913 = vunpack.c.l.b16 %v3295
    %v3914 = vunpack.c.h.b16 %v3295
    %v3915 = vunpack.c.l.b16 %v3296
    %v3916 = vunpack.c.h.b16 %v3296
    %v3917 = vunpack.c.l.b16 %v3297
    %v3918 = vunpack.c.h.b16 %v3297
    %v3919 = vunpack.c.l.b16 %v3298
    %v3920 = vunpack.c.h.b16 %v3298
    %v3921 = vunpack.c.l.b16 %v3299
    %v3922 = vunpack.c.h.b16 %v3299
    %v3923 = vunpack.c.l.b16 %v3300
    %v3924 = vunpack.c.h.b16 %v3300
    %v3925 = vunpack.c.l.b16 %v3301
    %v3926 = vunpack.c.h.b16 %v3301
    %v3927 = vunpack.c.l.b16 %v3302
    %v3928 = vunpack.c.h.b16 %v3302
    %v3929 = vunpack.c.l.b16 %v3303
    %v3930 = vunpack.c.h.b16 %v3303
    %v3931 = vunpack.c.l.b16 %v3304
    %v3932 = vunpack.c.h.b16 %v3304
    %v3933 = vunpack.c.l.b16 %v3305
    %v3934 = vunpack.c.h.b16 %v3305
    %v3935 = vunpack.c.l.b16 %v3306
    %v3936 = vunpack.c.h.b16 %v3306
    %v3937 = vunpack.c.l.b16 %v3307
    %v3938 = vunpack.c.h.b16 %v3307
    %v3939 = vunpack.c.l.b16 %v3308
    %v3940 = vunpack.c.h.b16 %v3308
    %v3941 = vunpack.c.l.b16 %v3309
    %v3942 = vunpack.c.h.b16 %v3309
    %v3943 = vunpack.c.l.b16 %v3310
    %v3944 = vunpack.c.h.b16 %v3310
    %v3945 = vunpack.c.l.b16 %v3311
    %v3946 = vunpack.c.h.b16 %v3311
    %v3947 = vunpack.c.l.b16 %v3312
    %v3948 = vunpack.c.h.b16 %v3312
    %v3949 = vunpack.c.l.b16 %v3313
    %v3950 = vunpack.c.h.b16 %v3313
    %v3951 = vunpack.c.l.b16 %v3314
    %v3952 = vunpack.c.h.b16 %v3314
    %v3953 = vunpack.c.l.b16 %v3315
    %v3954 = vunpack.c.h.b16 %v3315
    %v3955 = vunpack.c.l.b16 %v3316
    %v3956 = vunpack.c.h.b16 %v3316
    %v3957 = vunpack.c.l.b16 %v3317
    %v3958 = vunpack.c.h.b16 %v3317
    %v3959 = vunpack.c.l.b16 %v3318
    %v3960 = vunpack.c.h.b16 %v3318
    %v3961 = vunpack.c.l.b16 %v3319
    %v3962 = vunpack.c.h.b16 %v3319
    %v3963 = vunpack.c.l.b16 %v3320
    %v3964 = vunpack.c.h.b16 %v3320
    %v3965 = vunpack.c.l.b16 %v3321
    %v3966 = vunpack.c.h.b16 %v3321
    %v3967 = vunpack.c.l.b16 %v3322
    %v3968 = vunpack.c.h.b16 %v3322
    %v3969 = vunpack.c.l.b16 %v3323
    %v3970 = vunpack.c.h.b16 %v3323
    %v3971 = vunpack.c.l.b16 %v3324
    %v3972 = vunpack.c.h.b16 %v3324
    %v3973 = vunpack.c.l.b16 %v3325
    %v3974 = vunpack.c.h.b16 %v3325
    %v3975 = vunpack.c.l.b16 %v3326
    %v3976 = vunpack.c.h.b16 %v3326
    %v3977 = vunpack.c.l.b16 %v3327
    %v3978 = vunpack.c.h.b16 %v3327
    %v3979 = vunpack.c.l.b16 %v3328
    %v3980 = vunpack.c.h.b16 %v3328
    %v3981 = vunpack.c.l.b16 %v3329
    %v3982 = vunpack.c.h.b16 %v3329
    %v3983 = vunpack.c.l.b16 %v3330
    %v3984 = vunpack.c.h.b16 %v3330
    %v3985 = vunpack.c.l.b16 %v3331
    %v3986 = vunpack.c.h.b16 %v3331
    %v3987 = vunpack.c.l.b16 %v3332
    %v3988 = vunpack.c.h.b16 %v3332
    %v3989 = vunpack.c.l.b16 %v3333
    %v3990 = vunpack.c.h.b16 %v3333
    %v3991 = vunpack.c.l.b16 %v3334
    %v3992 = vunpack.c.h.b16 %v3334
    %v3993 = vunpack.c.l.b16 %v3335
    %v3994 = vunpack.c.h.b16 %v3335
    %v3995 = vunpack.c.l.b16 %v3336
    %v3996 = vunpack.c.h.b16 %v3336
    %v3997 = vunpack.c.l.b16 %v3337
    %v3998 = vunpack.c.h.b16 %v3337
    %v3999 = vunpack.c.l.b16 %v3338
    %v4000 = vunpack.c.h.b16 %v3338
    %v4001 = vunpack.c.l.b16 %v3339
    %v4002 = vunpack.c.h.b16 %v3339
    %v4003 = vunpack.c.l.b16 %v3340
    %v4004 = vunpack.c.h.b16 %v3340
    %v4005 = vunpack.c.l.b16 %v3341
    %v4006 = vunpack.c.h.b16 %v3341
    %v4007 = vunpack.c.l.b16 %v3342
    %v4008 = vunpack.c.h.b16 %v3342
    %v4009 = vunpack.c.l.b16 %v3343
    %v4010 = vunpack.c.h.b16 %v3343
    %v4011 = vunpack.c.l.b16 %v3344
    %v4012 = vunpack.c.h.b16 %v3344
    %v4013 = vunpack.c.l.b16 %v3345
    %v4014 = vunpack.c.h.b16 %v3345
    %v4015 = vunpack.c.l.b16 %v3346
    %v4016 = vunpack.c.h.b16 %v3346
    %v4017 = vunpack.c.l.b16 %v3347
    %v4018 = vunpack.c.h.b16 %v3347
    %v4019 = vunpack.c.l.b16 %v3348
    %v4020 = vunpack.c.h.b16 %v3348
    %v4021 = vunpack.c.l.b16 %v3349
    %v4022 = vunpack.c.h.b16 %v3349
    %v4023 = vunpack.c.l.b16 %v3350
    %v4024 = vunpack.c.h.b16 %v3350
    %v4025 = vunpack.c.l.b16 %v3351
    %v4026 = vunpack.c.h.b16 %v3351
    %v4027 = vunpack.c.l.b16 %v3352
    %v4028 = vunpack.c.h.b16 %v3352
    %v4029 = vunpack.c.l.b16 %v3353
    %v4030 = vunpack.c.h.b16 %v3353
    %v4031 = vunpack.c.l.b16 %v3354
    %v4032 = vunpack.c.h.b16 %v3354
    %v4033 = vunpack.c.l.b16 %v3355
    %v4034 = vunpack.c.h.b16 %v3355
    %v4035 = vunpack.c.l.b16 %v3356
    %v4036 = vunpack.c.h.b16 %v3356
    %v4037 = vunpack.c.l.b16 %v3357
    %v4038 = vunpack.c.h.b16 %v3357
    %v4039 = vunpack.c.l.b16 %v3358
    %v4040 = vunpack.c.h.b16 %v3358
    %v4041 = vunpack.c.l.b16 %v3359
    %v4042 = vunpack.c.h.b16 %v3359
    %v4043 = vunpack.c.l.b16 %v3360
    %v4044 = vunpack.c.h.b16 %v3360
    %v4045 = vunpack.c.l.b16 %v3361
    %v4046 = vunpack.c.h.b16 %v3361
    %v4047 = vunpack.c.l.b16 %v3362
    %v4048 = vunpack.c.h.b16 %v3362
    %v4049 = vunpack.c.l.b16 %v3363
    %v4050 = vunpack.c.h.b16 %v3363
    %v4051 = vunpack.c.l.b16 %v3364
    %v4052 = vunpack.c.h.b16 %v3364
    %v4053 = vunpack.c.l.b16 %v3365
    %v4054 = vunpack.c.h.b16 %v3365
    %v4055 = vunpack.c.l.b16 %v3366
    %v4056 = vunpack.c.h.b16 %v3366
    %v4057 = vunpack.c.l.b16 %v3367
    %v4058 = vunpack.c.h.b16 %v3367
    %v4059 = vunpack.c.l.b16 %v3368
    %v4060 = vunpack.c.h.b16 %v3368
    %v4061 = vunpack.c.l.b16 %v3369
    %v4062 = vunpack.c.h.b16 %v3369
    %v4063 = vunpack.c.l.b16 %v3370
    %v4064 = vunpack.c.h.b16 %v3370
    %v4065 = vunpack.c.l.b16 %v3371
    %v4066 = vunpack.c.h.b16 %v3371
    %v4067 = vunpack.c.l.b16 %v3372
    %v4068 = vunpack.c.h.b16 %v3372
    %v4069 = vunpack.c.l.b16 %v3373
    %v4070 = vunpack.c.h.b16 %v3373
    %v4071 = vunpack.c.l.b16 %v3374
    %v4072 = vunpack.c.h.b16 %v3374
    %v4073 = vunpack.c.l.b16 %v3375
    %v4074 = vunpack.c.h.b16 %v3375
    %v4075 = vunpack.c.l.b16 %v3376
    %v4076 = vunpack.c.h.b16 %v3376
    %v4077 = vunpack.c.l.b16 %v3377
    %v4078 = vunpack.c.h.b16 %v3377
    %v4079 = vunpack.c.l.b16 %v3378
    %v4080 = vunpack.c.h.b16 %v3378
    %v4081 = vunpack.c.l.b16 %v3379
    %v4082 = vunpack.c.h.b16 %v3379
    %v4083 = vunpack.c.l.b16 %v3380
    %v4084 = vunpack.c.h.b16 %v3380
    %v4085 = vunpack.c.l.b16 %v3381
    %v4086 = vunpack.c.h.b16 %v3381
    %v4087 = vunpack.c.l.b16 %v3382
    %v4088 = vunpack.c.h.b16 %v3382
    %v4089 = vunpack.c.l.b16 %v3383
    %v4090 = vunpack.c.h.b16 %v3383
    %v4091 = vunpack.c.l.b16 %v3384
    %v4092 = vunpack.c.h.b16 %v3384
    %v4093 = vunpack.c.l.b16 %v3385
    %v4094 = vunpack.c.h.b16 %v3385
    %v4095 = vunpack.c.l.b16 %v3386
    %v4096 = vunpack.c.h.b16 %v3386
    %v4097 = vunpack.c.l.b16 %v3387
    %v4098 = vunpack.c.h.b16 %v3387
    %v4099 = vunpack.c.l.b16 %v3388
    %v4100 = vunpack.c.h.b16 %v3388
    %v4101 = vunpack.c.l.b16 %v3389
    %v4102 = vunpack.c.h.b16 %v3389
    %v4103 = vunpack.c.l.b16 %v3390
    %v4104 = vunpack.c.h.b16 %v3390
    %v4105 = vunpack.c.l.b16 %v3391
    %v4106 = vunpack.c.h.b16 %v3391
    %v4107 = vunpack.c.l.b16 %v3392
    %v4108 = vunpack.c.h.b16 %v3392
    %v4109 = vunpack.c.l.b16 %v3393
    %v4110 = vunpack.c.h.b16 %v3393
    %v4111 = vunpack.c.l.b16 %v3394
    %v4112 = vunpack.c.h.b16 %v3394
    %v4113 = vunpack.c.l.b16 %v3395
    %v4114 = vunpack.c.h.b16 %v3395
    %v4115 = vunpack.c.l.b16 %v3396
    %v4116 = vunpack.c.h.b16 %v3396
    %v4117 = vunpack.c.l.b16 %v3397
    %v4118 = vunpack.c.h.b16 %v3397
    %v4119 = vunpack.c.l.b16 %v3398
    %v4120 = vunpack.c.h.b16 %v3398
    %v4121 = vunpack.c.l.b16 %v3399
    %v4122 = vunpack.c.h.b16 %v3399
    %v4123 = vunpack.c.l.b16 %v3400
    %v4124 = vunpack.c.h.b16 %v3400
    %v4125 = vunpack.c.l.b16 %v3401
    %v4126 = vunpack.c.h.b16 %v3401
    %v4127 = vunpack.c.l.b16 %v3402
    %v4128 = vunpack.c.h.b16 %v3402
    %v4129 = vunpack.c.l.b16 %v3403
    %v4130 = vunpack.c.h.b16 %v3403
    %v4131 = vunpack.c.l.b16 %v3404
    %v4132 = vunpack.c.h.b16 %v3404
    %v4133 = vunpack.c.l.b16 %v3405
    %v4134 = vunpack.c.h.b16 %v3405
    %v4135 = vunpack.c.l.b16 %v3406
    %v4136 = vunpack.c.h.b16 %v3406
    %v4137 = vunpack.c.l.b16 %v3407
    %v4138 = vunpack.c.h.b16 %v3407
    %v4139 = vunpack.c.l.b16 %v3408
    %v4140 = vunpack.c.h.b16 %v3408
    %v4141 = vunpack.c.l.b16 %v3409
    %v4142 = vunpack.c.h.b16 %v3409
    %v4143 = vunpack.c.l.b16 %v3410
    %v4144 = vunpack.c.h.b16 %v3410
    %v4145 = vunpack.c.l.b16 %v3411
    %v4146 = vunpack.c.h.b16 %v3411
    %v4147 = vunpack.c.l.b16 %v3412
    %v4148 = vunpack.c.h.b16 %v3412
    %v4149 = vunpack.c.l.b16 %v3413
    %v4150 = vunpack.c.h.b16 %v3413
    %v4151 = vunpack.c.l.b16 %v3414
    %v4152 = vunpack.c.h.b16 %v3414
    %v4153 = vunpack.c.l.b16 %v3415
    %v4154 = vunpack.c.h.b16 %v3415
    %v4155 = vunpack.c.l.b16 %v3416
    %v4156 = vunpack.c.h.b16 %v3416
    %v4157 = vunpack.c.l.b16 %v3417
    %v4158 = vunpack.c.h.b16 %v3417
    %v4159 = vunpack.c.l.b16 %v3418
    %v4160 = vunpack.c.h.b16 %v3418
    %v4161 = vunpack.c.l.b16 %v3419
    %v4162 = vunpack.c.h.b16 %v3419
    %v4163 = vunpack.c.l.b16 %v3420
    %v4164 = vunpack.c.h.b16 %v3420
    %v4165 = vunpack.c.l.b16 %v3421
    %v4166 = vunpack.c.h.b16 %v3421
    %v4167 = vunpack.c.l.b16 %v3422
    %v4168 = vunpack.c.h.b16 %v3422
    %v4169 = vunpack.c.l.b16 %v3423
    %v4170 = vunpack.c.h.b16 %v3423
    %v4171 = vunpack.c.l.b16 %v3424
    %v4172 = vunpack.c.h.b16 %v3424
    %v4173 = vunpack.c.l.b16 %v3425
    %v4174 = vunpack.c.h.b16 %v3425
    %v4175 = vunpack.c.l.b16 %v3426
    %v4176 = vunpack.c.h.b16 %v3426
    %v4177 = vunpack.c.l.b16 %v3427
    %v4178 = vunpack.c.h.b16 %v3427
    %v4179 = vunpack.c.l.b16 %v3428
    %v4180 = vunpack.c.h.b16 %v3428
    %v4181 = vunpack.c.l.b16 %v3429
    %v4182 = vunpack.c.h.b16 %v3429
    %v4183 = vunpack.c.l.b16 %v3430
    %v4184 = vunpack.c.h.b16 %v3430
    %v4185 = vunpack.c.l.b16 %v3431
    %v4186 = vunpack.c.h.b16 %v3431
    %v4187 = vunpack.c.l.b16 %v3432
    %v4188 = vunpack.c.h.b16 %v3432
    %v4189 = vunpack.c.l.b16 %v3433
    %v4190 = vunpack.c.h.b16 %v3433
    %v4191 = vunpack.c.l.b16 %v3434
    %v4192 = vunpack.c.h.b16 %v3434
    %v4193 = vunpack.c.l.b16 %v3435
    %v4194 = vunpack.c.h.b16 %v3435
    %v4195 = vunpack.c.l.b16 %v3436
    %v4196 = vunpack.c.h.b16 %v3436
    %v4197 = vunpack.c.l.b16 %v3437
    %v4198 = vunpack.c.h.b16 %v3437
    %v4199 = vunpack.c.l.b16 %v3438
    %v4200 = vunpack.c.h.b16 %v3438
    %v4201 = vunpack.c.l.b16 %v3439
    %v4202 = vunpack.c.h.b16 %v3439
    %v4203 = vunpack.c.l.b16 %v3440
    %v4204 = vunpack.c.h.b16 %v3440
    %v4205 = vunpack.c.l.b16 %v3441
    %v4206 = vunpack.c.h.b16 %v3441
    %v4207 = vunpack.c.l.b16 %v3442
    %v4208 = vunpack.c.h.b16 %v3442
    %v4209 = vunpack.c.l.b16 %v3443
    %v4210 = vunpack.c.h.b16 %v3443
    %v4211 = vunpack.c.l.b16 %v3444
    %v4212 = vunpack.c.h.b16 %v3444
    %v4213 = vunpack.c.l.b16 %v3445
    %v4214 = vunpack.c.h.b16 %v3445
    %v4215 = vunpack.c.l.b16 %v3446
    %v4216 = vunpack.c.h.b16 %v3446
    %v4217 = vunpack.c.l.b16 %v3447
    %v4218 = vunpack.c.h.b16 %v3447
    %v4219 = vunpack.c.l.b16 %v3448
    %v4220 = vunpack.c.h.b16 %v3448
    %v4221 = vunpack.c.l.b16 %v3449
    %v4222 = vunpack.c.h.b16 %v3449
    %v4223 = vunpack.c.l.b16 %v3450
    %v4224 = vunpack.c.h.b16 %v3450
    %v4225 = vunpack.c.l.b16 %v3451
    %v4226 = vunpack.c.h.b16 %v3451
    %v4227 = vunpack.c.l.b16 %v3452
    %v4228 = vunpack.c.h.b16 %v3452
    %v4229 = vunpack.c.l.b16 %v3453
    %v4230 = vunpack.c.h.b16 %v3453
    %v4231 = vunpack.c.l.b16 %v3454
    %v4232 = vunpack.c.h.b16 %v3454
    %v4233 = vpack.c.b16 %v3725, %v3721
    %v4234 = vpack.c.b16 %v3726, %v3722
    %v4235 = vpack.c.b16 %v3727, %v3723
    %v4236 = vpack.c.b16 %v3728, %v3724
    %v4237 = vpack.c.b16 %v3733, %v3729
    %v4238 = vpack.c.b16 %v3734, %v3730
    %v4239 = vpack.c.b16 %v3735, %v3731
    %v4240 = vpack.c.b16 %v3736, %v3732
    %v4241 = vpack.c.b16 %v3741, %v3737
    %v4242 = vpack.c.b16 %v3742, %v3738
    %v4243 = vpack.c.b16 %v3743, %v3739
    %v4244 = vpack.c.b16 %v3744, %v3740
    %v4245 = vpack.c.b16 %v3749, %v3745
    %v4246 = vpack.c.b16 %v3750, %v3746
    %v4247 = vpack.c.b16 %v3751, %v3747
    %v4248 = vpack.c.b16 %v3752, %v3748
    %v4249 = vpack.c.b16 %v3757, %v3753
    %v4250 = vpack.c.b16 %v3758, %v3754
    %v4251 = vpack.c.b16 %v3759, %v3755
    %v4252 = vpack.c.b16 %v3760, %v3756
    %v4253 = vpack.c.b16 %v3765, %v3761
    %v4254 = vpack.c.b16 %v3766, %v3762
    %v4255 = vpack.c.b16 %v3767, %v3763
    %v4256 = vpack.c.b16 %v3768, %v3764
    %v4257 = vpack.c.b16 %v3773, %v3769
    %v4258 = vpack.c.b16 %v3774, %v3770
    %v4259 = vpack.c.b16 %v3775, %v3771
    %v4260 = vpack.c.b16 %v3776, %v3772
    %v4261 = vpack.c.b16 %v3781, %v3777
    %v4262 = vpack.c.b16 %v3782, %v3778
    %v4263 = vpack.c.b16 %v3783, %v3779
    %v4264 = vpack.c.b16 %v3784, %v3780
    %v4265 = vpack.c.b16 %v3789, %v3785
    %v4266 = vpack.c.b16 %v3790, %v3786
    %v4267 = vpack.c.b16 %v3791, %v3787
    %v4268 = vpack.c.b16 %v3792, %v3788
    %v4269 = vpack.c.b16 %v3797, %v3793
    %v4270 = vpack.c.b16 %v3798, %v3794
    %v4271 = vpack.c.b16 %v3799, %v3795
    %v4272 = vpack.c.b16 %v3800, %v3796
    %v4273 = vpack.c.b16 %v3805, %v3801
    %v4274 = vpack.c.b16 %v3806, %v3802
    %v4275 = vpack.c.b16 %v3807, %v3803
    %v4276 = vpack.c.b16 %v3808, %v3804
    %v4277 = vpack.c.b16 %v3813, %v3809
    %v4278 = vpack.c.b16 %v3814, %v3810
    %v4279 = vpack.c.b16 %v3815, %v3811
    %v4280 = vpack.c.b16 %v3816, %v3812
    %v4281 = vpack.c.b16 %v3821, %v3817
    %v4282 = vpack.c.b16 %v3822, %v3818
    %v4283 = vpack.c.b16 %v3823, %v3819
    %v4284 = vpack.c.b16 %v3824, %v3820
    %v4285 = vpack.c.b16 %v3829, %v3825
    %v4286 = vpack.c.b16 %v3830, %v3826
    %v4287 = vpack.c.b16 %v3831, %v3827
    %v4288 = vpack.c.b16 %v3832, %v3828
    %v4289 = vpack.c.b16 %v3837, %v3833
    %v4290 = vpack.c.b16 %v3838, %v3834
    %v4291 = vpack.c.b16 %v3839, %v3835
    %v4292 = vpack.c.b16 %v3840, %v3836
    %v4293 = vpack.c.b16 %v3845, %v3841
    %v4294 = vpack.c.b16 %v3846, %v3842
    %v4295 = vpack.c.b16 %v3847, %v3843
    %v4296 = vpack.c.b16 %v3848, %v3844
    %v4297 = vpack.c.b16 %v3853, %v3849
    %v4298 = vpack.c.b16 %v3854, %v3850
    %v4299 = vpack.c.b16 %v3855, %v3851
    %v4300 = vpack.c.b16 %v3856, %v3852
    %v4301 = vpack.c.b16 %v3861, %v3857
    %v4302 = vpack.c.b16 %v3862, %v3858
    %v4303 = vpack.c.b16 %v3863, %v3859
    %v4304 = vpack.c.b16 %v3864, %v3860
    %v4305 = vpack.c.b16 %v3869, %v3865
    %v4306 = vpack.c.b16 %v3870, %v3866
    %v4307 = vpack.c.b16 %v3871, %v3867
    %v4308 = vpack.c.b16 %v3872, %v3868
    %v4309 = vpack.c.b16 %v3877, %v3873
    %v4310 = vpack.c.b16 %v3878, %v3874
    %v4311 = vpack.c.b16 %v3879, %v3875
    %v4312 = vpack.c.b16 %v3880, %v3876
    %v4313 = vpack.c.b16 %v3885, %v3881
    %v4314 = vpack.c.b16 %v3886, %v3882
    %v4315 = vpack.c.b16 %v3887, %v3883
    %v4316 = vpack.c.b16 %v3888, %v3884
    %v4317 = vpack.c.b16 %v3893, %v3889
    %v4318 = vpack.c.b16 %v3894, %v3890
    %v4319 = vpack.c.b16 %v3895, %v3891
    %v4320 = vpack.c.b16 %v3896, %v3892
    %v4321 = vpack.c.b16 %v3901, %v3897
    %v4322 = vpack.c.b16 %v3902, %v3898
    %v4323 = vpack.c.b16 %v3903, %v3899
    %v4324 = vpack.c.b16 %v3904, %v3900
    %v4325 = vpack.c.b16 %v3909, %v3905
    %v4326 = vpack.c.b16 %v3910, %v3906
    %v4327 = vpack.c.b16 %v3911, %v3907
    %v4328 = vpack.c.b16 %v3912, %v3908
    %v4329 = vpack.c.b16 %v3917, %v3913
    %v4330 = vpack.c.b16 %v3918, %v3914
    %v4331 = vpack.c.b16 %v3919, %v3915
    %v4332 = vpack.c.b16 %v3920, %v3916
    %v4333 = vpack.c.b16 %v3925, %v3921
    %v4334 = vpack.c.b16 %v3926, %v3922
    %v4335 = vpack.c.b16 %v3927, %v3923
    %v4336 = vpack.c.b16 %v3928, %v3924
    %v4337 = vpack.c.b16 %v3933, %v3929
    %v4338 = vpack.c.b16 %v3934, %v3930
    %v4339 = vpack.c.b16 %v3935, %v3931
    %v4340 = vpack.c.b16 %v3936, %v3932
    %v4341 = vpack.c.b16 %v3941, %v3937
    %v4342 = vpack.c.b16 %v3942, %v3938
    %v4343 = vpack.c.b16 %v3943, %v3939
    %v4344 = vpack.c.b16 %v3944, %v3940
    %v4345 = vpack.c.b16 %v3949, %v3945
    %v4346 = vpack.c.b16 %v3950, %v3946
    %v4347 = vpack.c.b16 %v3951, %v3947
    %v4348 = vpack.c.b16 %v3952, %v3948
    %v4349 = vpack.c.b16 %v3957, %v3953
    %v4350 = vpack.c.b16 %v3958, %v3954
    %v4351 = vpack.c.b16 %v3959, %v3955
    %v4352 = vpack.c.b16 %v3960, %v3956
    %v4353 = vpack.c.b16 %v3965, %v3961
    %v4354 = vpack.c.b16 %v3966, %v3962
    %v4355 = vpack.c.b16 %v3967, %v3963
    %v4356 = vpack.c.b16 %v3968, %v3964
    %v4357 = vpack.c.b16 %v3973, %v3969
    %v4358 = vpack.c.b16 %v3974, %v3970
    %v4359 = vpack.c.b16 %v3975, %v3971
    %v4360 = vpack.c.b16 %v3976, %v3972
    %v4361 = vpack.c.b16 %v3981, %v3977
    %v4362 = vpack.c.b16 %v3982, %v3978
    %v4363 = vpack.c.b16 %v3983, %v3979
    %v4364 = vpack.c.b16 %v3984, %v3980
    %v4365 = vpack.c.b16 %v3989, %v3985
    %v4366 = vpack.c.b16 %v3990, %v3986
    %v4367 = vpack.c.b16 %v3991, %v3987
    %v4368 = vpack.c.b16 %v3992, %v3988
    %v4369 = vpack.c.b16 %v3997, %v3993
    %v4370 = vpack.c.b16 %v3998, %v3994
    %v4371 = vpack.c.b16 %v3999, %v3995
    %v4372 = vpack.c.b16 %v4000, %v3996
    %v4373 = vpack.c.b16 %v4005, %v4001
    %v4374 = vpack.c.b16 %v4006, %v4002
    %v4375 = vpack.c.b16 %v4007, %v4003
    %v4376 = vpack.c.b16 %v4008, %v4004
    %v4377 = vpack.c.b16 %v4013, %v4009
    %v4378 = vpack.c.b16 %v4014, %v4010
    %v4379 = vpack.c.b16 %v4015, %v4011
    %v4380 = vpack.c.b16 %v4016, %v4012
    %v4381 = vpack.c.b16 %v4021, %v4017
    %v4382 = vpack.c.b16 %v4022, %v4018
    %v4383 = vpack.c.b16 %v4023, %v4019
    %v4384 = vpack.c.b16 %v4024, %v4020
    %v4385 = vpack.c.b16 %v4029, %v4025
    %v4386 = vpack.c.b16 %v4030, %v4026
    %v4387 = vpack.c.b16 %v4031, %v4027
    %v4388 = vpack.c.b16 %v4032, %v4028
    %v4389 = vpack.c.b16 %v4037, %v4033
    %v4390 = vpack.c.b16 %v4038, %v4034
    %v4391 = vpack.c.b16 %v4039, %v4035
    %v4392 = vpack.c.b16 %v4040, %v4036
    %v4393 = vpack.c.b16 %v4045, %v4041
    %v4394 = vpack.c.b16 %v4046, %v4042
    %v4395 = vpack.c.b16 %v4047, %v4043
    %v4396 = vpack.c.b16 %v4048, %v4044
    %v4397 = vpack.c.b16 %v4053, %v4049
    %v4398 = vpack.c.b16 %v4054, %v4050
    %v4399 = vpack.c.b16 %v4055, %v4051
    %v4400 = vpack.c.b16 %v4056, %v4052
    %v4401 = vpack.c.b16 %v4061, %v4057
    %v4402 = vpack.c.b16 %v4062, %v4058
    %v4403 = vpack.c.b16 %v4063, %v4059
    %v4404 = vpack.c.b16 %v4064, %v4060
    %v4405 = vpack.c.b16 %v4069, %v4065
    %v4406 = vpack.c.b16 %v4070, %v4066
    %v4407 = vpack.c.b16 %v4071, %v4067
    %v4408 = vpack.c.b16 %v4072, %v4068
    %v4409 = vpack.c.b16 %v4077, %v4073
    %v4410 = vpack.c.b16 %v4078, %v4074
    %v4411 = vpack.c.b16 %v4079, %v4075
    %v4412 = vpack.c.b16 %v4080, %v4076
    %v4413 = vpack.c.b16 %v4085, %v4081
    %v4414 = vpack.c.b16 %v4086, %v4082
    %v4415 = vpack.c.b16 %v4087, %v4083
    %v4416 = vpack.c.b16 %v4088, %v4084
    %v4417 = vpack.c.b16 %v4093, %v4089
    %v4418 = vpack.c.b16 %v4094, %v4090
    %v4419 = vpack.c.b16 %v4095, %v4091
    %v4420 = vpack.c.b16 %v4096, %v4092
    %v4421 = vpack.c.b16 %v4101, %v4097
    %v4422 = vpack.c.b16 %v4102, %v4098
    %v4423 = vpack.c.b16 %v4103, %v4099
    %v4424 = vpack.c.b16 %v4104, %v4100
    %v4425 = vpack.c.b16 %v4109, %v4105
    %v4426 = vpack.c.b16 %v4110, %v4106
    %v4427 = vpack.c.b16 %v4111, %v4107
    %v4428 = vpack.c.b16 %v4112, %v4108
    %v4429 = vpack.c.b16 %v4117, %v4113
    %v4430 = vpack.c.b16 %v4118, %v4114
    %v4431 = vpack.c.b16 %v4119, %v4115
    %v4432 = vpack.c.b16 %v4120, %v4116
    %v4433 = vpack.c.b16 %v4125, %v4121
    %v4434 = vpack.c.b16 %v4126, %v4122
    %v4435 = vpack.c.b16 %v4127, %v4123
    %v4436 = vpack.c.b16 %v4128, %v4124
    %v4437 = vpack.c.b16 %v4133, %v4129
    %v4438 = vpack.c.b16 %v4134, %v4130
    %v4439 = vpack.c.b16 %v4135, %v4131
    %v4440 = vpack.c.b16 %v4136, %v4132
    %v4441 = vpack.c.b16 %v4141, %v4137
    %v4442 = vpack.c.b16 %v4142, %v4138
    %v4443 = vpack.c.b16 %v4143, %v4139
    %v4444 = vpack.c.b16 %v4144, %v4140
    %v4445 = vpack.c.b16 %v4149, %v4145
    %v4446 = vpack.c.b16 %v4150, %v4146
    %v4447 = vpack.c.b16 %v4151, %v4147
    %v4448 = vpack.c.b16 %v4152, %v4148
    %v4449 = vpack.c.b16 %v4157, %v4153
    %v4450 = vpack.c.b16 %v4158, %v4154
    %v4451 = vpack.c.b16 %v4159, %v4155
    %v4452 = vpack.c.b16 %v4160, %v4156
    %v4453 = vpack.c.b16 %v4165, %v4161
    %v4454 = vpack.c.b16 %v4166, %v4162
    %v4455 = vpack.c.b16 %v4167, %v4163
    %v4456 = vpack.c.b16 %v4168, %v4164
    %v4457 = vpack.c.b16 %v4173, %v4169
    %v4458 = vpack.c.b16 %v4174, %v4170
    %v4459 = vpack.c.b16 %v4175, %v4171
    %v4460 = vpack.c.b16 %v4176, %v4172
    %v4461 = vpack.c.b16 %v4181, %v4177
    %v4462 = vpack.c.b16 %v4182, %v4178
    %v4463 = vpack.c.b16 %v4183, %v4179
    %v4464 = vpack.c.b16 %v4184, %v4180
    %v4465 = vpack.c.b16 %v4189, %v4185
    %v4466 = vpack.c.b16 %v4190, %v4186
    %v4467 = vpack.c.b16 %v4191, %v4187
    %v4468 = vpack.c.b16 %v4192, %v4188
    %v4469 = vpack.c.b16 %v4197, %v4193
    %v4470 = vpack.c.b16 %v4198, %v4194
    %v4471 = vpack.c.b16 %v4199, %v4195
    %v4472 = vpack.c.b16 %v4200, %v4196
    %v4473 = vpack.c.b16 %v4205, %v4201
    %v4474 = vpack.c.b16 %v4206, %v4202
    %v4475 = vpack.c.b16 %v4207, %v4203
    %v4476 = vpack.c.b16 %v4208, %v4204
    %v4477 = vpack.c.b16 %v4213, %v4209
    %v4478 = vpack.c.b16 %v4214, %v4210
    %v4479 = vpack.c.b16 %v4215, %v4211
    %v4480 = vpack.c.b16 %v4216, %v4212
    %v4481 = vpack.c.b16 %v4221, %v4217
    %v4482 = vpack.c.b16 %v4222, %v4218
    %v4483 = vpack.c.b16 %v4223, %v4219
    %v4484 = vpack.c.b16 %v4224, %v4220
    %v4485 = vpack.c.b16 %v4229, %v4225
    %v4486 = vpack.c.b16 %v4230, %v4226
    %v4487 = vpack.c.b16 %v4231, %v4227
    %v4488 = vpack.c.b16 %v4232, %v4228
    %4745 = vmatpush.bf16.msra.mxu0 %v4261
    %4746 = vmatpush.bf16.msra.mxu0 %v4257
    %4747 = vmatpush.bf16.msra.mxu0 %v4253
    %4748 = vmatpush.bf16.msra.mxu0 %v4249
    %4749 = vmatpush.bf16.msra.mxu0 %v4245
    %4750 = vmatpush.bf16.msra.mxu0 %v4241
    %4751 = vmatpush.bf16.msra.mxu0 %v4237
    %4752 = vmatpush.bf16.msra.mxu0 %v4233
    %4753 = vmatmul.bf16.gmra.mxu0 %v3191
    %v4754 = vpop.f32.mrf.mxu0
    %v4755 = vadd.f32 %v3457, %v4754
    %v4756 = vpop.f32.mrf.mxu0
    %4757 = vdwg.mxu0
    %4758 = vmatpush.bf16.msra.mxu0 %v4293
    %4759 = vmatpush.bf16.msra.mxu0 %v4289
    %4760 = vmatpush.bf16.msra.mxu0 %v4285
    %4761 = vmatpush.bf16.msra.mxu0 %v4281
    %4762 = vmatpush.bf16.msra.mxu0 %v4277
    %4763 = vmatpush.bf16.msra.mxu0 %v4273
    %4764 = vmatpush.bf16.msra.mxu0 %v4269
    %4765 = vmatpush.bf16.msra.mxu0 %v4265
    %4766 = vmatmul.bf16.gmra.mxu0 %v3192
    %v4767 = vpop.f32.mrf.mxu0
    %v4768 = vadd.f32 %v4755, %v4767
    %v4769 = vpop.f32.mrf.mxu0
    %4770 = vdwg.mxu0
    %4771 = vmatpush.bf16.msra.mxu0 %v4325
    %4772 = vmatpush.bf16.msra.mxu0 %v4321
    %4773 = vmatpush.bf16.msra.mxu0 %v4317
    %4774 = vmatpush.bf16.msra.mxu0 %v4313
    %4775 = vmatpush.bf16.msra.mxu0 %v4309
    %4776 = vmatpush.bf16.msra.mxu0 %v4305
    %4777 = vmatpush.bf16.msra.mxu0 %v4301
    %4778 = vmatpush.bf16.msra.mxu0 %v4297
    %4779 = vmatmul.bf16.gmra.mxu0 %v3193
    %v4780 = vpop.f32.mrf.mxu0
    %v4781 = vadd.f32 %v4768, %v4780
    %v4782 = vpop.f32.mrf.mxu0
    %4783 = vdwg.mxu0
    %4784 = vmatpush.bf16.msra.mxu0 %v4357
    %4785 = vmatpush.bf16.msra.mxu0 %v4353
    %4786 = vmatpush.bf16.msra.mxu0 %v4349
    %4787 = vmatpush.bf16.msra.mxu0 %v4345
    %4788 = vmatpush.bf16.msra.mxu0 %v4341
    %4789 = vmatpush.bf16.msra.mxu0 %v4337
    %4790 = vmatpush.bf16.msra.mxu0 %v4333
    %4791 = vmatpush.bf16.msra.mxu0 %v4329
    %4792 = vmatmul.bf16.gmra.mxu0 %v3194
    %v4793 = vpop.f32.mrf.mxu0
    %v4794 = vadd.f32 %v4781, %v4793
    %v4795 = vpop.f32.mrf.mxu0
    %4796 = vdwg.mxu0
    %4797 = vmatpush.bf16.msra.mxu0 %v4389
    %4798 = vmatpush.bf16.msra.mxu0 %v4385
    %4799 = vmatpush.bf16.msra.mxu0 %v4381
    %4800 = vmatpush.bf16.msra.mxu0 %v4377
    %4801 = vmatpush.bf16.msra.mxu0 %v4373
    %4802 = vmatpush.bf16.msra.mxu0 %v4369
    %4803 = vmatpush.bf16.msra.mxu0 %v4365
    %4804 = vmatpush.bf16.msra.mxu0 %v4361
    %4805 = vmatmul.bf16.gmra.mxu0 %v3195
    %v4806 = vpop.f32.mrf.mxu0
    %v4807 = vadd.f32 %v4794, %v4806
    %v4808 = vpop.f32.mrf.mxu0
    %4809 = vdwg.mxu0
    %4810 = vmatpush.bf16.msra.mxu0 %v4421
    %4811 = vmatpush.bf16.msra.mxu0 %v4417
    %4812 = vmatpush.bf16.msra.mxu0 %v4413
    %4813 = vmatpush.bf16.msra.mxu0 %v4409
    %4814 = vmatpush.bf16.msra.mxu0 %v4405
    %4815 = vmatpush.bf16.msra.mxu0 %v4401
    %4816 = vmatpush.bf16.msra.mxu0 %v4397
    %4817 = vmatpush.bf16.msra.mxu0 %v4393
    %4818 = vmatmul.bf16.gmra.mxu0 %v3196
    %v4819 = vpop.f32.mrf.mxu0
    %v4820 = vadd.f32 %v4807, %v4819
    %v4821 = vpop.f32.mrf.mxu0
    %4822 = vdwg.mxu0
    %4823 = vmatpush.bf16.msra.mxu0 %v4453
    %4824 = vmatpush.bf16.msra.mxu0 %v4449
    %4825 = vmatpush.bf16.msra.mxu0 %v4445
    %4826 = vmatpush.bf16.msra.mxu0 %v4441
    %4827 = vmatpush.bf16.msra.mxu0 %v4437
    %4828 = vmatpush.bf16.msra.mxu0 %v4433
    %4829 = vmatpush.bf16.msra.mxu0 %v4429
    %4830 = vmatpush.bf16.msra.mxu0 %v4425
    %4831 = vmatmul.bf16.gmra.mxu0 %v3197
    %v4832 = vpop.f32.mrf.mxu0
    %v4833 = vadd.f32 %v4820, %v4832
    %v4834 = vpop.f32.mrf.mxu0
    %4835 = vdwg.mxu0
    %4836 = vmatpush.bf16.msra.mxu0 %v4485
    %4837 = vmatpush.bf16.msra.mxu0 %v4481
    %4838 = vmatpush.bf16.msra.mxu0 %v4477
    %4839 = vmatpush.bf16.msra.mxu0 %v4473
    %4840 = vmatpush.bf16.msra.mxu0 %v4469
    %4841 = vmatpush.bf16.msra.mxu0 %v4465
    %4842 = vmatpush.bf16.msra.mxu0 %v4461
    %4843 = vmatpush.bf16.msra.mxu0 %v4457
    %4844 = vmatmul.bf16.gmra.mxu0 %v3198
    %v4845 = vpop.f32.mrf.mxu0
    %v4846 = vadd.f32 %v4833, %v4845
    %v4847 = vpop.f32.mrf.mxu0
    %4848 = vdwg.mxu0
    %4849 = vmatpush.bf16.msra.mxu0 %v4262
    %4850 = vmatpush.bf16.msra.mxu0 %v4258
    %4851 = vmatpush.bf16.msra.mxu0 %v4254
    %4852 = vmatpush.bf16.msra.mxu0 %v4250
    %4853 = vmatpush.bf16.msra.mxu0 %v4246
    %4854 = vmatpush.bf16.msra.mxu0 %v4242
    %4855 = vmatpush.bf16.msra.mxu0 %v4238
    %4856 = vmatpush.bf16.msra.mxu0 %v4234
    %4857 = vmatmul.bf16.gmra.mxu0 %v3191
    %v4858 = vpop.f32.mrf.mxu0
    %v4859 = vadd.f32 %v3458, %v4858
    %v4860 = vpop.f32.mrf.mxu0
    %4861 = vdwg.mxu0
    %4862 = vmatpush.bf16.msra.mxu0 %v4294
    %4863 = vmatpush.bf16.msra.mxu0 %v4290
    %4864 = vmatpush.bf16.msra.mxu0 %v4286
    %4865 = vmatpush.bf16.msra.mxu0 %v4282
    %4866 = vmatpush.bf16.msra.mxu0 %v4278
    %4867 = vmatpush.bf16.msra.mxu0 %v4274
    %4868 = vmatpush.bf16.msra.mxu0 %v4270
    %4869 = vmatpush.bf16.msra.mxu0 %v4266
    %4870 = vmatmul.bf16.gmra.mxu0 %v3192
    %v4871 = vpop.f32.mrf.mxu0
    %v4872 = vadd.f32 %v4859, %v4871
    %v4873 = vpop.f32.mrf.mxu0
    %4874 = vdwg.mxu0
    %4875 = vmatpush.bf16.msra.mxu0 %v4326
    %4876 = vmatpush.bf16.msra.mxu0 %v4322
    %4877 = vmatpush.bf16.msra.mxu0 %v4318
    %4878 = vmatpush.bf16.msra.mxu0 %v4314
    %4879 = vmatpush.bf16.msra.mxu0 %v4310
    %4880 = vmatpush.bf16.msra.mxu0 %v4306
    %4881 = vmatpush.bf16.msra.mxu0 %v4302
    %4882 = vmatpush.bf16.msra.mxu0 %v4298
    %4883 = vmatmul.bf16.gmra.mxu0 %v3193
    %v4884 = vpop.f32.mrf.mxu0
    %v4885 = vadd.f32 %v4872, %v4884
    %v4886 = vpop.f32.mrf.mxu0
    %4887 = vdwg.mxu0
    %4888 = vmatpush.bf16.msra.mxu0 %v4358
    %4889 = vmatpush.bf16.msra.mxu0 %v4354
    %4890 = vmatpush.bf16.msra.mxu0 %v4350
    %4891 = vmatpush.bf16.msra.mxu0 %v4346
    %4892 = vmatpush.bf16.msra.mxu0 %v4342
    %4893 = vmatpush.bf16.msra.mxu0 %v4338
    %4894 = vmatpush.bf16.msra.mxu0 %v4334
    %4895 = vmatpush.bf16.msra.mxu0 %v4330
    %4896 = vmatmul.bf16.gmra.mxu0 %v3194
    %v4897 = vpop.f32.mrf.mxu0
    %v4898 = vadd.f32 %v4885, %v4897
    %v4899 = vpop.f32.mrf.mxu0
    %4900 = vdwg.mxu0
    %4901 = vmatpush.bf16.msra.mxu0 %v4390
    %4902 = vmatpush.bf16.msra.mxu0 %v4386
    %4903 = vmatpush.bf16.msra.mxu0 %v4382
    %4904 = vmatpush.bf16.msra.mxu0 %v4378
    %4905 = vmatpush.bf16.msra.mxu0 %v4374
    %4906 = vmatpush.bf16.msra.mxu0 %v4370
    %4907 = vmatpush.bf16.msra.mxu0 %v4366
    %4908 = vmatpush.bf16.msra.mxu0 %v4362
    %4909 = vmatmul.bf16.gmra.mxu0 %v3195
    %v4910 = vpop.f32.mrf.mxu0
    %v4911 = vadd.f32 %v4898, %v4910
    %v4912 = vpop.f32.mrf.mxu0
    %4913 = vdwg.mxu0
    %4914 = vmatpush.bf16.msra.mxu0 %v4422
    %4915 = vmatpush.bf16.msra.mxu0 %v4418
    %4916 = vmatpush.bf16.msra.mxu0 %v4414
    %4917 = vmatpush.bf16.msra.mxu0 %v4410
    %4918 = vmatpush.bf16.msra.mxu0 %v4406
    %4919 = vmatpush.bf16.msra.mxu0 %v4402
    %4920 = vmatpush.bf16.msra.mxu0 %v4398
    %4921 = vmatpush.bf16.msra.mxu0 %v4394
    %4922 = vmatmul.bf16.gmra.mxu0 %v3196
    %v4923 = vpop.f32.mrf.mxu0
    %v4924 = vadd.f32 %v4911, %v4923
    %v4925 = vpop.f32.mrf.mxu0
    %4926 = vdwg.mxu0
    %4927 = vmatpush.bf16.msra.mxu0 %v4454
    %4928 = vmatpush.bf16.msra.mxu0 %v4450
    %4929 = vmatpush.bf16.msra.mxu0 %v4446
    %4930 = vmatpush.bf16.msra.mxu0 %v4442
    %4931 = vmatpush.bf16.msra.mxu0 %v4438
    %4932 = vmatpush.bf16.msra.mxu0 %v4434
    %4933 = vmatpush.bf16.msra.mxu0 %v4430
    %4934 = vmatpush.bf16.msra.mxu0 %v4426
    %4935 = vmatmul.bf16.gmra.mxu0 %v3197
    %v4936 = vpop.f32.mrf.mxu0
    %v4937 = vadd.f32 %v4924, %v4936
    %v4938 = vpop.f32.mrf.mxu0
    %4939 = vdwg.mxu0
    %4940 = vmatpush.bf16.msra.mxu0 %v4486
    %4941 = vmatpush.bf16.msra.mxu0 %v4482
    %4942 = vmatpush.bf16.msra.mxu0 %v4478
    %4943 = vmatpush.bf16.msra.mxu0 %v4474
    %4944 = vmatpush.bf16.msra.mxu0 %v4470
    %4945 = vmatpush.bf16.msra.mxu0 %v4466
    %4946 = vmatpush.bf16.msra.mxu0 %v4462
    %4947 = vmatpush.bf16.msra.mxu0 %v4458
    %4948 = vmatmul.bf16.gmra.mxu0 %v3198
    %v4949 = vpop.f32.mrf.mxu0
    %v4950 = vadd.f32 %v4937, %v4949
    %v4951 = vpop.f32.mrf.mxu0
    %4952 = vdwg.mxu0
    %4953 = vmatpush.bf16.msra.mxu0 %v4263
    %4954 = vmatpush.bf16.msra.mxu0 %v4259
    %4955 = vmatpush.bf16.msra.mxu0 %v4255
    %4956 = vmatpush.bf16.msra.mxu0 %v4251
    %4957 = vmatpush.bf16.msra.mxu0 %v4247
    %4958 = vmatpush.bf16.msra.mxu0 %v4243
    %4959 = vmatpush.bf16.msra.mxu0 %v4239
    %4960 = vmatpush.bf16.msra.mxu0 %v4235
    %4961 = vmatmul.bf16.gmra.mxu0 %v3191
    %v4962 = vpop.f32.mrf.mxu0
    %v4963 = vadd.f32 %v3459, %v4962
    %v4964 = vpop.f32.mrf.mxu0
    %4965 = vdwg.mxu0
    %4966 = vmatpush.bf16.msra.mxu0 %v4295
    %4967 = vmatpush.bf16.msra.mxu0 %v4291
    %4968 = vmatpush.bf16.msra.mxu0 %v4287
    %4969 = vmatpush.bf16.msra.mxu0 %v4283
    %4970 = vmatpush.bf16.msra.mxu0 %v4279
    %4971 = vmatpush.bf16.msra.mxu0 %v4275
    %4972 = vmatpush.bf16.msra.mxu0 %v4271
    %4973 = vmatpush.bf16.msra.mxu0 %v4267
    %4974 = vmatmul.bf16.gmra.mxu0 %v3192
    %v4975 = vpop.f32.mrf.mxu0
    %v4976 = vadd.f32 %v4963, %v4975
    %v4977 = vpop.f32.mrf.mxu0
    %4978 = vdwg.mxu0
    %4979 = vmatpush.bf16.msra.mxu0 %v4327
    %4980 = vmatpush.bf16.msra.mxu0 %v4323
    %4981 = vmatpush.bf16.msra.mxu0 %v4319
    %4982 = vmatpush.bf16.msra.mxu0 %v4315
    %4983 = vmatpush.bf16.msra.mxu0 %v4311
    %4984 = vmatpush.bf16.msra.mxu0 %v4307
    %4985 = vmatpush.bf16.msra.mxu0 %v4303
    %4986 = vmatpush.bf16.msra.mxu0 %v4299
    %4987 = vmatmul.bf16.gmra.mxu0 %v3193
    %v4988 = vpop.f32.mrf.mxu0
    %v4989 = vadd.f32 %v4976, %v4988
    %v4990 = vpop.f32.mrf.mxu0
    %4991 = vdwg.mxu0
    %4992 = vmatpush.bf16.msra.mxu0 %v4359
    %4993 = vmatpush.bf16.msra.mxu0 %v4355
    %4994 = vmatpush.bf16.msra.mxu0 %v4351
    %4995 = vmatpush.bf16.msra.mxu0 %v4347
    %4996 = vmatpush.bf16.msra.mxu0 %v4343
    %4997 = vmatpush.bf16.msra.mxu0 %v4339
    %4998 = vmatpush.bf16.msra.mxu0 %v4335
    %4999 = vmatpush.bf16.msra.mxu0 %v4331
    %5000 = vmatmul.bf16.gmra.mxu0 %v3194
    %v5001 = vpop.f32.mrf.mxu0
    %v5002 = vadd.f32 %v4989, %v5001
    %v5003 = vpop.f32.mrf.mxu0
    %5004 = vdwg.mxu0
    %5005 = vmatpush.bf16.msra.mxu0 %v4391
    %5006 = vmatpush.bf16.msra.mxu0 %v4387
    %5007 = vmatpush.bf16.msra.mxu0 %v4383
    %5008 = vmatpush.bf16.msra.mxu0 %v4379
    %5009 = vmatpush.bf16.msra.mxu0 %v4375
    %5010 = vmatpush.bf16.msra.mxu0 %v4371
    %5011 = vmatpush.bf16.msra.mxu0 %v4367
    %5012 = vmatpush.bf16.msra.mxu0 %v4363
    %5013 = vmatmul.bf16.gmra.mxu0 %v3195
    %v5014 = vpop.f32.mrf.mxu0
    %v5015 = vadd.f32 %v5002, %v5014
    %v5016 = vpop.f32.mrf.mxu0
    %5017 = vdwg.mxu0
    %5018 = vmatpush.bf16.msra.mxu0 %v4423
    %5019 = vmatpush.bf16.msra.mxu0 %v4419
    %5020 = vmatpush.bf16.msra.mxu0 %v4415
    %5021 = vmatpush.bf16.msra.mxu0 %v4411
    %5022 = vmatpush.bf16.msra.mxu0 %v4407
    %5023 = vmatpush.bf16.msra.mxu0 %v4403
    %5024 = vmatpush.bf16.msra.mxu0 %v4399
    %5025 = vmatpush.bf16.msra.mxu0 %v4395
    %5026 = vmatmul.bf16.gmra.mxu0 %v3196
    %v5027 = vpop.f32.mrf.mxu0
    %v5028 = vadd.f32 %v5015, %v5027
    %v5029 = vpop.f32.mrf.mxu0
    %5030 = vdwg.mxu0
    %5031 = vmatpush.bf16.msra.mxu0 %v4455
    %5032 = vmatpush.bf16.msra.mxu0 %v4451
    %5033 = vmatpush.bf16.msra.mxu0 %v4447
    %5034 = vmatpush.bf16.msra.mxu0 %v4443
    %5035 = vmatpush.bf16.msra.mxu0 %v4439
    %5036 = vmatpush.bf16.msra.mxu0 %v4435
    %5037 = vmatpush.bf16.msra.mxu0 %v4431
    %5038 = vmatpush.bf16.msra.mxu0 %v4427
    %5039 = vmatmul.bf16.gmra.mxu0 %v3197
    %v5040 = vpop.f32.mrf.mxu0
    %v5041 = vadd.f32 %v5028, %v5040
    %v5042 = vpop.f32.mrf.mxu0
    %5043 = vdwg.mxu0
    %5044 = vmatpush.bf16.msra.mxu0 %v4487
    %5045 = vmatpush.bf16.msra.mxu0 %v4483
    %5046 = vmatpush.bf16.msra.mxu0 %v4479
    %5047 = vmatpush.bf16.msra.mxu0 %v4475
    %5048 = vmatpush.bf16.msra.mxu0 %v4471
    %5049 = vmatpush.bf16.msra.mxu0 %v4467
    %5050 = vmatpush.bf16.msra.mxu0 %v4463
    %5051 = vmatpush.bf16.msra.mxu0 %v4459
    %5052 = vmatmul.bf16.gmra.mxu0 %v3198
    %v5053 = vpop.f32.mrf.mxu0
    %v5054 = vadd.f32 %v5041, %v5053
    %v5055 = vpop.f32.mrf.mxu0
    %5056 = vdwg.mxu0
    %5057 = vmatpush.bf16.msra.mxu0 %v4264
    %5058 = vmatpush.bf16.msra.mxu0 %v4260
    %5059 = vmatpush.bf16.msra.mxu0 %v4256
    %5060 = vmatpush.bf16.msra.mxu0 %v4252
    %5061 = vmatpush.bf16.msra.mxu0 %v4248
    %5062 = vmatpush.bf16.msra.mxu0 %v4244
    %5063 = vmatpush.bf16.msra.mxu0 %v4240
    %5064 = vmatpush.bf16.msra.mxu0 %v4236
    %5065 = vmatmul.bf16.gmra.mxu0 %v3191
    %v5066 = vpop.f32.mrf.mxu0
    %v5067 = vadd.f32 %v3460, %v5066
    %v5068 = vpop.f32.mrf.mxu0
    %5069 = vdwg.mxu0
    %5070 = vmatpush.bf16.msra.mxu0 %v4296
    %5071 = vmatpush.bf16.msra.mxu0 %v4292
    %5072 = vmatpush.bf16.msra.mxu0 %v4288
    %5073 = vmatpush.bf16.msra.mxu0 %v4284
    %5074 = vmatpush.bf16.msra.mxu0 %v4280
    %5075 = vmatpush.bf16.msra.mxu0 %v4276
    %5076 = vmatpush.bf16.msra.mxu0 %v4272
    %5077 = vmatpush.bf16.msra.mxu0 %v4268
    %5078 = vmatmul.bf16.gmra.mxu0 %v3192
    %v5079 = vpop.f32.mrf.mxu0
    %v5080 = vadd.f32 %v5067, %v5079
    %v5081 = vpop.f32.mrf.mxu0
    %5082 = vdwg.mxu0
    %5083 = vmatpush.bf16.msra.mxu0 %v4328
    %5084 = vmatpush.bf16.msra.mxu0 %v4324
    %5085 = vmatpush.bf16.msra.mxu0 %v4320
    %5086 = vmatpush.bf16.msra.mxu0 %v4316
    %5087 = vmatpush.bf16.msra.mxu0 %v4312
    %5088 = vmatpush.bf16.msra.mxu0 %v4308
    %5089 = vmatpush.bf16.msra.mxu0 %v4304
    %5090 = vmatpush.bf16.msra.mxu0 %v4300
    %5091 = vmatmul.bf16.gmra.mxu0 %v3193
    %v5092 = vpop.f32.mrf.mxu0
    %v5093 = vadd.f32 %v5080, %v5092
    %v5094 = vpop.f32.mrf.mxu0
    %5095 = vdwg.mxu0
    %5096 = vmatpush.bf16.msra.mxu0 %v4360
    %5097 = vmatpush.bf16.msra.mxu0 %v4356
    %5098 = vmatpush.bf16.msra.mxu0 %v4352
    %5099 = vmatpush.bf16.msra.mxu0 %v4348
    %5100 = vmatpush.bf16.msra.mxu0 %v4344
    %5101 = vmatpush.bf16.msra.mxu0 %v4340
    %5102 = vmatpush.bf16.msra.mxu0 %v4336
    %5103 = vmatpush.bf16.msra.mxu0 %v4332
    %5104 = vmatmul.bf16.gmra.mxu0 %v3194
    %v5105 = vpop.f32.mrf.mxu0
    %v5106 = vadd.f32 %v5093, %v5105
    %v5107 = vpop.f32.mrf.mxu0
    %5108 = vdwg.mxu0
    %5109 = vmatpush.bf16.msra.mxu0 %v4392
    %5110 = vmatpush.bf16.msra.mxu0 %v4388
    %5111 = vmatpush.bf16.msra.mxu0 %v4384
    %5112 = vmatpush.bf16.msra.mxu0 %v4380
    %5113 = vmatpush.bf16.msra.mxu0 %v4376
    %5114 = vmatpush.bf16.msra.mxu0 %v4372
    %5115 = vmatpush.bf16.msra.mxu0 %v4368
    %5116 = vmatpush.bf16.msra.mxu0 %v4364
    %5117 = vmatmul.bf16.gmra.mxu0 %v3195
    %v5118 = vpop.f32.mrf.mxu0
    %v5119 = vadd.f32 %v5106, %v5118
    %v5120 = vpop.f32.mrf.mxu0
    %5121 = vdwg.mxu0
    %5122 = vmatpush.bf16.msra.mxu0 %v4424
    %5123 = vmatpush.bf16.msra.mxu0 %v4420
    %5124 = vmatpush.bf16.msra.mxu0 %v4416
    %5125 = vmatpush.bf16.msra.mxu0 %v4412
    %5126 = vmatpush.bf16.msra.mxu0 %v4408
    %5127 = vmatpush.bf16.msra.mxu0 %v4404
    %5128 = vmatpush.bf16.msra.mxu0 %v4400
    %5129 = vmatpush.bf16.msra.mxu0 %v4396
    %5130 = vmatmul.bf16.gmra.mxu0 %v3196
    %v5131 = vpop.f32.mrf.mxu0
    %v5132 = vadd.f32 %v5119, %v5131
    %v5133 = vpop.f32.mrf.mxu0
    %5134 = vdwg.mxu0
    %5135 = vmatpush.bf16.msra.mxu0 %v4456
    %5136 = vmatpush.bf16.msra.mxu0 %v4452
    %5137 = vmatpush.bf16.msra.mxu0 %v4448
    %5138 = vmatpush.bf16.msra.mxu0 %v4444
    %5139 = vmatpush.bf16.msra.mxu0 %v4440
    %5140 = vmatpush.bf16.msra.mxu0 %v4436
    %5141 = vmatpush.bf16.msra.mxu0 %v4432
    %5142 = vmatpush.bf16.msra.mxu0 %v4428
    %5143 = vmatmul.bf16.gmra.mxu0 %v3197
    %v5144 = vpop.f32.mrf.mxu0
    %v5145 = vadd.f32 %v5132, %v5144
    %v5146 = vpop.f32.mrf.mxu0
    %5147 = vdwg.mxu0
    %5148 = vmatpush.bf16.msra.mxu0 %v4488
    %5149 = vmatpush.bf16.msra.mxu0 %v4484
    %5150 = vmatpush.bf16.msra.mxu0 %v4480
    %5151 = vmatpush.bf16.msra.mxu0 %v4476
    %5152 = vmatpush.bf16.msra.mxu0 %v4472
    %5153 = vmatpush.bf16.msra.mxu0 %v4468
    %5154 = vmatpush.bf16.msra.mxu0 %v4464
    %5155 = vmatpush.bf16.msra.mxu0 %v4460
    %5156 = vmatmul.bf16.gmra.mxu0 %v3198
    %v5157 = vpop.f32.mrf.mxu0
    %v5158 = vadd.f32 %v5145, %v5157
    %v5159 = vpop.f32.mrf.mxu0
    %5160 = vdwg.mxu0
    %vm5161 = vcmp.gt.f32.partialorder %v4846, 0.0
    %vm5162 = vcmp.gt.f32.partialorder %v4950, 0.0
    %vm5163 = vcmp.gt.f32.partialorder %v5054, 0.0
    %vm5164 = vcmp.gt.f32.partialorder %v5158, 0.0
    %v5165 = vmul.f32 %v4846, 0.01
    %v5166 = vmul.f32 %v4950, 0.01
    %v5167 = vmul.f32 %v5054, 0.01
    %v5168 = vmul.f32 %v5158, 0.01
    %v5169 = vsel %vm5161, %v4846, %v5165
    %v5170 = vsel %vm5162, %v4950, %v5166
    %v5171 = vsel %vm5163, %v5054, %v5167
    %v5172 = vsel %vm5164, %v5158, %v5168
    %v5173 = vpack.c.bf16 %v5169, %v5169
    %v5174 = vpack.c.bf16 %v5170, %v5170
    %v5175 = vpack.c.bf16 %v5171, %v5171
    %v5176 = vpack.c.bf16 %v5172, %v5172
    %v5177 = vld [vmem:[#allocation19] sm:$0xff]
    %v5178 = vld [vmem:[#allocation19 + $0x8] sm:$0xff]
    %v5179 = vld [vmem:[#allocation19 + $0x10] sm:$0xff]
    %v5180 = vld [vmem:[#allocation19 + $0x18] sm:$0xff]
    %v5181 = vld [vmem:[#allocation19 + $0x20] sm:$0xff]
    %v5182 = vld [vmem:[#allocation19 + $0x28] sm:$0xff]
    %v5183 = vld [vmem:[#allocation19 + $0x30] sm:$0xff]
    %v5184 = vld [vmem:[#allocation19 + $0x38] sm:$0xff]
    %v5185 = vld [vmem:[#allocation19 + $0x40] sm:$0xff]
    %v5186 = vld [vmem:[#allocation19 + $0x48] sm:$0xff]
    %v5187 = vld [vmem:[#allocation19 + $0x50] sm:$0xff]
    %v5188 = vld [vmem:[#allocation19 + $0x58] sm:$0xff]
    %v5189 = vld [vmem:[#allocation19 + $0x60] sm:$0xff]
    %v5190 = vld [vmem:[#allocation19 + $0x68] sm:$0xff]
    %v5191 = vld [vmem:[#allocation19 + $0x70] sm:$0xff]
    %v5192 = vld [vmem:[#allocation19 + $0x78] sm:$0xff]
    %v5193 = vld [vmem:[#allocation19 + $0x80] sm:$0xff]
    %v5194 = vld [vmem:[#allocation19 + $0x88] sm:$0xff]
    %v5195 = vld [vmem:[#allocation19 + $0x90] sm:$0xff]
    %v5196 = vld [vmem:[#allocation19 + $0x98] sm:$0xff]
    %v5197 = vld [vmem:[#allocation19 + $0xa0] sm:$0xff]
    %v5198 = vld [vmem:[#allocation19 + $0xa8] sm:$0xff]
    %v5199 = vld [vmem:[#allocation19 + $0xb0] sm:$0xff]
    %v5200 = vld [vmem:[#allocation19 + $0xb8] sm:$0xff]
    %v5201 = vld [vmem:[#allocation19 + $0xc0] sm:$0xff]
    %v5202 = vld [vmem:[#allocation19 + $0xc8] sm:$0xff]
    %v5203 = vld [vmem:[#allocation19 + $0xd0] sm:$0xff]
    %v5204 = vld [vmem:[#allocation19 + $0xd8] sm:$0xff]
    %v5205 = vld [vmem:[#allocation19 + $0xe0] sm:$0xff]
    %v5206 = vld [vmem:[#allocation19 + $0xe8] sm:$0xff]
    %v5207 = vld [vmem:[#allocation19 + $0xf0] sm:$0xff]
    %v5208 = vld [vmem:[#allocation19 + $0xf8] sm:$0xff]
    %v5209 = vld [vmem:[#allocation19 + $0x100] sm:$0xff]
    %v5210 = vld [vmem:[#allocation19 + $0x108] sm:$0xff]
    %v5211 = vld [vmem:[#allocation19 + $0x110] sm:$0xff]
    %v5212 = vld [vmem:[#allocation19 + $0x118] sm:$0xff]
    %v5213 = vld [vmem:[#allocation19 + $0x120] sm:$0xff]
    %v5214 = vld [vmem:[#allocation19 + $0x128] sm:$0xff]
    %v5215 = vld [vmem:[#allocation19 + $0x130] sm:$0xff]
    %v5216 = vld [vmem:[#allocation19 + $0x138] sm:$0xff]
    %v5217 = vld [vmem:[#allocation19 + $0x140] sm:$0xff]
    %v5218 = vld [vmem:[#allocation19 + $0x148] sm:$0xff]
    %v5219 = vld [vmem:[#allocation19 + $0x150] sm:$0xff]
    %v5220 = vld [vmem:[#allocation19 + $0x158] sm:$0xff]
    %v5221 = vld [vmem:[#allocation19 + $0x160] sm:$0xff]
    %v5222 = vld [vmem:[#allocation19 + $0x168] sm:$0xff]
    %v5223 = vld [vmem:[#allocation19 + $0x170] sm:$0xff]
    %v5224 = vld [vmem:[#allocation19 + $0x178] sm:$0xff]
    %v5225 = vld [vmem:[#allocation19 + $0x180] sm:$0xff]
    %v5226 = vld [vmem:[#allocation19 + $0x188] sm:$0xff]
    %v5227 = vld [vmem:[#allocation19 + $0x190] sm:$0xff]
    %v5228 = vld [vmem:[#allocation19 + $0x198] sm:$0xff]
    %v5229 = vld [vmem:[#allocation19 + $0x1a0] sm:$0xff]
    %v5230 = vld [vmem:[#allocation19 + $0x1a8] sm:$0xff]
    %v5231 = vld [vmem:[#allocation19 + $0x1b0] sm:$0xff]
    %v5232 = vld [vmem:[#allocation19 + $0x1b8] sm:$0xff]
    %v5233 = vld [vmem:[#allocation19 + $0x1c0] sm:$0xff]
    %v5234 = vld [vmem:[#allocation19 + $0x1c8] sm:$0xff]
    %v5235 = vld [vmem:[#allocation19 + $0x1d0] sm:$0xff]
    %v5236 = vld [vmem:[#allocation19 + $0x1d8] sm:$0xff]
    %v5237 = vld [vmem:[#allocation19 + $0x1e0] sm:$0xff]
    %v5238 = vld [vmem:[#allocation19 + $0x1e8] sm:$0xff]
    %v5239 = vld [vmem:[#allocation19 + $0x1f0] sm:$0xff]
    %v5240 = vld [vmem:[#allocation19 + $0x1f8] sm:$0xff]
    %v5241 = vld [vmem:[%s13] sm:$0x3]
    %v5243 = vperm.slane %v5241, 0
    %v5244 = vperm.slane %v5241, 1
    %v5311 = vunpack.c.l.b16 %v5177
    %v5312 = vunpack.c.h.b16 %v5177
    %v5313 = vunpack.c.l.b16 %v5178
    %v5314 = vunpack.c.h.b16 %v5178
    %v5315 = vunpack.c.l.b16 %v5179
    %v5316 = vunpack.c.h.b16 %v5179
    %v5317 = vunpack.c.l.b16 %v5180
    %v5318 = vunpack.c.h.b16 %v5180
    %v5319 = vunpack.c.l.b16 %v5181
    %v5320 = vunpack.c.h.b16 %v5181
    %v5321 = vunpack.c.l.b16 %v5182
    %v5322 = vunpack.c.h.b16 %v5182
    %v5323 = vunpack.c.l.b16 %v5183
    %v5324 = vunpack.c.h.b16 %v5183
    %v5325 = vunpack.c.l.b16 %v5184
    %v5326 = vunpack.c.h.b16 %v5184
    %v5327 = vunpack.c.l.b16 %v5185
    %v5328 = vunpack.c.h.b16 %v5185
    %v5329 = vunpack.c.l.b16 %v5186
    %v5330 = vunpack.c.h.b16 %v5186
    %v5331 = vunpack.c.l.b16 %v5187
    %v5332 = vunpack.c.h.b16 %v5187
    %v5333 = vunpack.c.l.b16 %v5188
    %v5334 = vunpack.c.h.b16 %v5188
    %v5335 = vunpack.c.l.b16 %v5189
    %v5336 = vunpack.c.h.b16 %v5189
    %v5337 = vunpack.c.l.b16 %v5190
    %v5338 = vunpack.c.h.b16 %v5190
    %v5339 = vunpack.c.l.b16 %v5191
    %v5340 = vunpack.c.h.b16 %v5191
    %v5341 = vunpack.c.l.b16 %v5192
    %v5342 = vunpack.c.h.b16 %v5192
    %v5343 = vunpack.c.l.b16 %v5193
    %v5344 = vunpack.c.h.b16 %v5193
    %v5345 = vunpack.c.l.b16 %v5194
    %v5346 = vunpack.c.h.b16 %v5194
    %v5347 = vunpack.c.l.b16 %v5195
    %v5348 = vunpack.c.h.b16 %v5195
    %v5349 = vunpack.c.l.b16 %v5196
    %v5350 = vunpack.c.h.b16 %v5196
    %v5351 = vunpack.c.l.b16 %v5197
    %v5352 = vunpack.c.h.b16 %v5197
    %v5353 = vunpack.c.l.b16 %v5198
    %v5354 = vunpack.c.h.b16 %v5198
    %v5355 = vunpack.c.l.b16 %v5199
    %v5356 = vunpack.c.h.b16 %v5199
    %v5357 = vunpack.c.l.b16 %v5200
    %v5358 = vunpack.c.h.b16 %v5200
    %v5359 = vunpack.c.l.b16 %v5201
    %v5360 = vunpack.c.h.b16 %v5201
    %v5361 = vunpack.c.l.b16 %v5202
    %v5362 = vunpack.c.h.b16 %v5202
    %v5363 = vunpack.c.l.b16 %v5203
    %v5364 = vunpack.c.h.b16 %v5203
    %v5365 = vunpack.c.l.b16 %v5204
    %v5366 = vunpack.c.h.b16 %v5204
    %v5367 = vunpack.c.l.b16 %v5205
    %v5368 = vunpack.c.h.b16 %v5205
    %v5369 = vunpack.c.l.b16 %v5206
    %v5370 = vunpack.c.h.b16 %v5206
    %v5371 = vunpack.c.l.b16 %v5207
    %v5372 = vunpack.c.h.b16 %v5207
    %v5373 = vunpack.c.l.b16 %v5208
    %v5374 = vunpack.c.h.b16 %v5208
    %v5375 = vunpack.c.l.b16 %v5209
    %v5376 = vunpack.c.h.b16 %v5209
    %v5377 = vunpack.c.l.b16 %v5210
    %v5378 = vunpack.c.h.b16 %v5210
    %v5379 = vunpack.c.l.b16 %v5211
    %v5380 = vunpack.c.h.b16 %v5211
    %v5381 = vunpack.c.l.b16 %v5212
    %v5382 = vunpack.c.h.b16 %v5212
    %v5383 = vunpack.c.l.b16 %v5213
    %v5384 = vunpack.c.h.b16 %v5213
    %v5385 = vunpack.c.l.b16 %v5214
    %v5386 = vunpack.c.h.b16 %v5214
    %v5387 = vunpack.c.l.b16 %v5215
    %v5388 = vunpack.c.h.b16 %v5215
    %v5389 = vunpack.c.l.b16 %v5216
    %v5390 = vunpack.c.h.b16 %v5216
    %v5391 = vunpack.c.l.b16 %v5217
    %v5392 = vunpack.c.h.b16 %v5217
    %v5393 = vunpack.c.l.b16 %v5218
    %v5394 = vunpack.c.h.b16 %v5218
    %v5395 = vunpack.c.l.b16 %v5219
    %v5396 = vunpack.c.h.b16 %v5219
    %v5397 = vunpack.c.l.b16 %v5220
    %v5398 = vunpack.c.h.b16 %v5220
    %v5399 = vunpack.c.l.b16 %v5221
    %v5400 = vunpack.c.h.b16 %v5221
    %v5401 = vunpack.c.l.b16 %v5222
    %v5402 = vunpack.c.h.b16 %v5222
    %v5403 = vunpack.c.l.b16 %v5223
    %v5404 = vunpack.c.h.b16 %v5223
    %v5405 = vunpack.c.l.b16 %v5224
    %v5406 = vunpack.c.h.b16 %v5224
    %v5407 = vunpack.c.l.b16 %v5225
    %v5408 = vunpack.c.h.b16 %v5225
    %v5409 = vunpack.c.l.b16 %v5226
    %v5410 = vunpack.c.h.b16 %v5226
    %v5411 = vunpack.c.l.b16 %v5227
    %v5412 = vunpack.c.h.b16 %v5227
    %v5413 = vunpack.c.l.b16 %v5228
    %v5414 = vunpack.c.h.b16 %v5228
    %v5415 = vunpack.c.l.b16 %v5229
    %v5416 = vunpack.c.h.b16 %v5229
    %v5417 = vunpack.c.l.b16 %v5230
    %v5418 = vunpack.c.h.b16 %v5230
    %v5419 = vunpack.c.l.b16 %v5231
    %v5420 = vunpack.c.h.b16 %v5231
    %v5421 = vunpack.c.l.b16 %v5232
    %v5422 = vunpack.c.h.b16 %v5232
    %v5423 = vunpack.c.l.b16 %v5233
    %v5424 = vunpack.c.h.b16 %v5233
    %v5425 = vunpack.c.l.b16 %v5234
    %v5426 = vunpack.c.h.b16 %v5234
    %v5427 = vunpack.c.l.b16 %v5235
    %v5428 = vunpack.c.h.b16 %v5235
    %v5429 = vunpack.c.l.b16 %v5236
    %v5430 = vunpack.c.h.b16 %v5236
    %v5431 = vunpack.c.l.b16 %v5237
    %v5432 = vunpack.c.h.b16 %v5237
    %v5433 = vunpack.c.l.b16 %v5238
    %v5434 = vunpack.c.h.b16 %v5238
    %v5435 = vunpack.c.l.b16 %v5239
    %v5436 = vunpack.c.h.b16 %v5239
    %v5437 = vunpack.c.l.b16 %v5240
    %v5438 = vunpack.c.h.b16 %v5240
    %v5439 = vpack.c.b16 %v5313, %v5311
    %v5440 = vpack.c.b16 %v5314, %v5312
    %v5441 = vpack.c.b16 %v5317, %v5315
    %v5442 = vpack.c.b16 %v5318, %v5316
    %v5443 = vpack.c.b16 %v5321, %v5319
    %v5444 = vpack.c.b16 %v5322, %v5320
    %v5445 = vpack.c.b16 %v5325, %v5323
    %v5446 = vpack.c.b16 %v5326, %v5324
    %v5447 = vpack.c.b16 %v5329, %v5327
    %v5448 = vpack.c.b16 %v5330, %v5328
    %v5449 = vpack.c.b16 %v5333, %v5331
    %v5450 = vpack.c.b16 %v5334, %v5332
    %v5451 = vpack.c.b16 %v5337, %v5335
    %v5452 = vpack.c.b16 %v5338, %v5336
    %v5453 = vpack.c.b16 %v5341, %v5339
    %v5454 = vpack.c.b16 %v5342, %v5340
    %v5455 = vpack.c.b16 %v5345, %v5343
    %v5456 = vpack.c.b16 %v5346, %v5344
    %v5457 = vpack.c.b16 %v5349, %v5347
    %v5458 = vpack.c.b16 %v5350, %v5348
    %v5459 = vpack.c.b16 %v5353, %v5351
    %v5460 = vpack.c.b16 %v5354, %v5352
    %v5461 = vpack.c.b16 %v5357, %v5355
    %v5462 = vpack.c.b16 %v5358, %v5356
    %v5463 = vpack.c.b16 %v5361, %v5359
    %v5464 = vpack.c.b16 %v5362, %v5360
    %v5465 = vpack.c.b16 %v5365, %v5363
    %v5466 = vpack.c.b16 %v5366, %v5364
    %v5467 = vpack.c.b16 %v5369, %v5367
    %v5468 = vpack.c.b16 %v5370, %v5368
    %v5469 = vpack.c.b16 %v5373, %v5371
    %v5470 = vpack.c.b16 %v5374, %v5372
    %v5471 = vpack.c.b16 %v5377, %v5375
    %v5472 = vpack.c.b16 %v5378, %v5376
    %v5473 = vpack.c.b16 %v5381, %v5379
    %v5474 = vpack.c.b16 %v5382, %v5380
    %v5475 = vpack.c.b16 %v5385, %v5383
    %v5476 = vpack.c.b16 %v5386, %v5384
    %v5477 = vpack.c.b16 %v5389, %v5387
    %v5478 = vpack.c.b16 %v5390, %v5388
    %v5479 = vpack.c.b16 %v5393, %v5391
    %v5480 = vpack.c.b16 %v5394, %v5392
    %v5481 = vpack.c.b16 %v5397, %v5395
    %v5482 = vpack.c.b16 %v5398, %v5396
    %v5483 = vpack.c.b16 %v5401, %v5399
    %v5484 = vpack.c.b16 %v5402, %v5400
    %v5485 = vpack.c.b16 %v5405, %v5403
    %v5486 = vpack.c.b16 %v5406, %v5404
    %v5487 = vpack.c.b16 %v5409, %v5407
    %v5488 = vpack.c.b16 %v5410, %v5408
    %v5489 = vpack.c.b16 %v5413, %v5411
    %v5490 = vpack.c.b16 %v5414, %v5412
    %v5491 = vpack.c.b16 %v5417, %v5415
    %v5492 = vpack.c.b16 %v5418, %v5416
    %v5493 = vpack.c.b16 %v5421, %v5419
    %v5494 = vpack.c.b16 %v5422, %v5420
    %v5495 = vpack.c.b16 %v5425, %v5423
    %v5496 = vpack.c.b16 %v5426, %v5424
    %v5497 = vpack.c.b16 %v5429, %v5427
    %v5498 = vpack.c.b16 %v5430, %v5428
    %v5499 = vpack.c.b16 %v5433, %v5431
    %v5500 = vpack.c.b16 %v5434, %v5432
    %v5501 = vpack.c.b16 %v5437, %v5435
    %v5502 = vpack.c.b16 %v5438, %v5436
    %5567 = vmatpush.bf16.msra.mxu0 %v5453
    %5568 = vmatpush.bf16.msra.mxu0 %v5451
    %5569 = vmatpush.bf16.msra.mxu0 %v5449
    %5570 = vmatpush.bf16.msra.mxu0 %v5447
    %5571 = vmatpush.bf16.msra.mxu0 %v5445
    %5572 = vmatpush.bf16.msra.mxu0 %v5443
    %5573 = vmatpush.bf16.msra.mxu0 %v5441
    %5574 = vmatpush.bf16.msra.mxu0 %v5439
    %5575 = vmatmul.bf16.gmra.mxu0 %v5173
    %v5576 = vpop.f32.mrf.mxu0
    %v5577 = vadd.f32 %v5243, %v5576
    %v5578 = vpop.f32.mrf.mxu0
    %5579 = vdwg.mxu0
    %5580 = vmatpush.bf16.msra.mxu0 %v5469
    %5581 = vmatpush.bf16.msra.mxu0 %v5467
    %5582 = vmatpush.bf16.msra.mxu0 %v5465
    %5583 = vmatpush.bf16.msra.mxu0 %v5463
    %5584 = vmatpush.bf16.msra.mxu0 %v5461
    %5585 = vmatpush.bf16.msra.mxu0 %v5459
    %5586 = vmatpush.bf16.msra.mxu0 %v5457
    %5587 = vmatpush.bf16.msra.mxu0 %v5455
    %5588 = vmatmul.bf16.gmra.mxu0 %v5174
    %v5589 = vpop.f32.mrf.mxu0
    %v5590 = vadd.f32 %v5577, %v5589
    %v5591 = vpop.f32.mrf.mxu0
    %5592 = vdwg.mxu0
    %5593 = vmatpush.bf16.msra.mxu0 %v5485
    %5594 = vmatpush.bf16.msra.mxu0 %v5483
    %5595 = vmatpush.bf16.msra.mxu0 %v5481
    %5596 = vmatpush.bf16.msra.mxu0 %v5479
    %5597 = vmatpush.bf16.msra.mxu0 %v5477
    %5598 = vmatpush.bf16.msra.mxu0 %v5475
    %5599 = vmatpush.bf16.msra.mxu0 %v5473
    %5600 = vmatpush.bf16.msra.mxu0 %v5471
    %5601 = vmatmul.bf16.gmra.mxu0 %v5175
    %v5602 = vpop.f32.mrf.mxu0
    %v5603 = vadd.f32 %v5590, %v5602
    %v5604 = vpop.f32.mrf.mxu0
    %5605 = vdwg.mxu0
    %5606 = vmatpush.bf16.msra.mxu0 %v5501
    %5607 = vmatpush.bf16.msra.mxu0 %v5499
    %5608 = vmatpush.bf16.msra.mxu0 %v5497
    %5609 = vmatpush.bf16.msra.mxu0 %v5495
    %5610 = vmatpush.bf16.msra.mxu0 %v5493
    %5611 = vmatpush.bf16.msra.mxu0 %v5491
    %5612 = vmatpush.bf16.msra.mxu0 %v5489
    %5613 = vmatpush.bf16.msra.mxu0 %v5487
    %5614 = vmatmul.bf16.gmra.mxu0 %v5176
    %v5615 = vpop.f32.mrf.mxu0
    %v5616 = vadd.f32 %v5603, %v5615
    %v5617 = vpop.f32.mrf.mxu0
    %5618 = vdwg.mxu0
    %5619 = vmatpush.bf16.msra.mxu0 %v5454
    %5620 = vmatpush.bf16.msra.mxu0 %v5452
    %5621 = vmatpush.bf16.msra.mxu0 %v5450
    %5622 = vmatpush.bf16.msra.mxu0 %v5448
    %5623 = vmatpush.bf16.msra.mxu0 %v5446
    %5624 = vmatpush.bf16.msra.mxu0 %v5444
    %5625 = vmatpush.bf16.msra.mxu0 %v5442
    %5626 = vmatpush.bf16.msra.mxu0 %v5440
    %5627 = vmatmul.bf16.gmra.mxu0 %v5173
    %v5628 = vpop.f32.mrf.mxu0
    %v5629 = vadd.f32 %v5244, %v5628
    %v5630 = vpop.f32.mrf.mxu0
    %5631 = vdwg.mxu0
    %5632 = vmatpush.bf16.msra.mxu0 %v5470
    %5633 = vmatpush.bf16.msra.mxu0 %v5468
    %5634 = vmatpush.bf16.msra.mxu0 %v5466
    %5635 = vmatpush.bf16.msra.mxu0 %v5464
    %5636 = vmatpush.bf16.msra.mxu0 %v5462
    %5637 = vmatpush.bf16.msra.mxu0 %v5460
    %5638 = vmatpush.bf16.msra.mxu0 %v5458
    %5639 = vmatpush.bf16.msra.mxu0 %v5456
    %5640 = vmatmul.bf16.gmra.mxu0 %v5174
    %v5641 = vpop.f32.mrf.mxu0
    %v5642 = vadd.f32 %v5629, %v5641
    %v5643 = vpop.f32.mrf.mxu0
    %5644 = vdwg.mxu0
    %5645 = vmatpush.bf16.msra.mxu0 %v5486
    %5646 = vmatpush.bf16.msra.mxu0 %v5484
    %5647 = vmatpush.bf16.msra.mxu0 %v5482
    %5648 = vmatpush.bf16.msra.mxu0 %v5480
    %5649 = vmatpush.bf16.msra.mxu0 %v5478
    %5650 = vmatpush.bf16.msra.mxu0 %v5476
    %5651 = vmatpush.bf16.msra.mxu0 %v5474
    %5652 = vmatpush.bf16.msra.mxu0 %v5472
    %5653 = vmatmul.bf16.gmra.mxu0 %v5175
    %v5654 = vpop.f32.mrf.mxu0
    %v5655 = vadd.f32 %v5642, %v5654
    %v5656 = vpop.f32.mrf.mxu0
    %5657 = vdwg.mxu0
    %5658 = vmatpush.bf16.msra.mxu0 %v5502
    %5659 = vmatpush.bf16.msra.mxu0 %v5500
    %5660 = vmatpush.bf16.msra.mxu0 %v5498
    %5661 = vmatpush.bf16.msra.mxu0 %v5496
    %5662 = vmatpush.bf16.msra.mxu0 %v5494
    %5663 = vmatpush.bf16.msra.mxu0 %v5492
    %5664 = vmatpush.bf16.msra.mxu0 %v5490
    %5665 = vmatpush.bf16.msra.mxu0 %v5488
    %5666 = vmatmul.bf16.gmra.mxu0 %v5176
    %v5667 = vpop.f32.mrf.mxu0
    %v5668 = vadd.f32 %v5655, %v5667
    %v5669 = vpop.f32.mrf.mxu0
    %5670 = vdwg.mxu0
    %vm5671 = vcmp.gt.f32.partialorder %v5616, 0.0
    %vm5672 = vcmp.gt.f32.partialorder %v5668, 0.0
    %v5673 = vmul.f32 %v5616, 0.01
    %v5674 = vmul.f32 %v5668, 0.01
    %v5675 = vsel %vm5671, %v5616, %v5673
    %v5676 = vsel %vm5672, %v5668, %v5674
    %v5677 = vpack.c.bf16 %v2989, %v2989
    %v5678 = vpack.c.bf16 %v2990, %v2990
    %v5679 = vld [vmem:[#allocation20] sm:$0xff]
    %v5680 = vld [vmem:[#allocation20 + $0x8] sm:$0xff]
    %v5681 = vld [vmem:[#allocation20 + $0x10] sm:$0xff]
    %v5682 = vld [vmem:[#allocation20 + $0x18] sm:$0xff]
    %v5683 = vld [vmem:[#allocation20 + $0x20] sm:$0xff]
    %v5684 = vld [vmem:[#allocation20 + $0x28] sm:$0xff]
    %v5685 = vld [vmem:[#allocation20 + $0x30] sm:$0xff]
    %v5686 = vld [vmem:[#allocation20 + $0x38] sm:$0xff]
    %v5687 = vld [vmem:[#allocation20 + $0x40] sm:$0xff]
    %v5688 = vld [vmem:[#allocation20 + $0x48] sm:$0xff]
    %v5689 = vld [vmem:[#allocation20 + $0x50] sm:$0xff]
    %v5690 = vld [vmem:[#allocation20 + $0x58] sm:$0xff]
    %v5691 = vld [vmem:[#allocation20 + $0x60] sm:$0xff]
    %v5692 = vld [vmem:[#allocation20 + $0x68] sm:$0xff]
    %v5693 = vld [vmem:[#allocation20 + $0x70] sm:$0xff]
    %v5694 = vld [vmem:[#allocation20 + $0x78] sm:$0xff]
    %v5695 = vld [vmem:[#allocation20 + $0x80] sm:$0xff]
    %v5696 = vld [vmem:[#allocation20 + $0x88] sm:$0xff]
    %v5697 = vld [vmem:[#allocation20 + $0x90] sm:$0xff]
    %v5698 = vld [vmem:[#allocation20 + $0x98] sm:$0xff]
    %v5699 = vld [vmem:[#allocation20 + $0xa0] sm:$0xff]
    %v5700 = vld [vmem:[#allocation20 + $0xa8] sm:$0xff]
    %v5701 = vld [vmem:[#allocation20 + $0xb0] sm:$0xff]
    %v5702 = vld [vmem:[#allocation20 + $0xb8] sm:$0xff]
    %v5703 = vld [vmem:[#allocation20 + $0xc0] sm:$0xff]
    %v5704 = vld [vmem:[#allocation20 + $0xc8] sm:$0xff]
    %v5705 = vld [vmem:[#allocation20 + $0xd0] sm:$0xff]
    %v5706 = vld [vmem:[#allocation20 + $0xd8] sm:$0xff]
    %v5707 = vld [vmem:[#allocation20 + $0xe0] sm:$0xff]
    %v5708 = vld [vmem:[#allocation20 + $0xe8] sm:$0xff]
    %v5709 = vld [vmem:[#allocation20 + $0xf0] sm:$0xff]
    %v5710 = vld [vmem:[#allocation20 + $0xf8] sm:$0xff]
    %v5711 = vpack.c.bf16 %v5675, %v5675
    %v5712 = vpack.c.bf16 %v5676, %v5676
    %v5713 = vld [vmem:[#allocation22] sm:$0xff]
    %v5714 = vld [vmem:[#allocation22 + $0x8] sm:$0xff]
    %v5715 = vld [vmem:[#allocation22 + $0x10] sm:$0xff]
    %v5716 = vld [vmem:[#allocation22 + $0x18] sm:$0xff]
    %v5717 = vld [vmem:[#allocation22 + $0x20] sm:$0xff]
    %v5718 = vld [vmem:[#allocation22 + $0x28] sm:$0xff]
    %v5719 = vld [vmem:[#allocation22 + $0x30] sm:$0xff]
    %v5720 = vld [vmem:[#allocation22 + $0x38] sm:$0xff]
    %v5721 = vld [vmem:[#allocation22 + $0x40] sm:$0xff]
    %v5722 = vld [vmem:[#allocation22 + $0x48] sm:$0xff]
    %v5723 = vld [vmem:[#allocation22 + $0x50] sm:$0xff]
    %v5724 = vld [vmem:[#allocation22 + $0x58] sm:$0xff]
    %v5725 = vld [vmem:[#allocation22 + $0x60] sm:$0xff]
    %v5726 = vld [vmem:[#allocation22 + $0x68] sm:$0xff]
    %v5727 = vld [vmem:[#allocation22 + $0x70] sm:$0xff]
    %v5728 = vld [vmem:[#allocation22 + $0x78] sm:$0xff]
    %v5729 = vld [vmem:[#allocation22 + $0x80] sm:$0xff]
    %v5730 = vld [vmem:[#allocation22 + $0x88] sm:$0xff]
    %v5731 = vld [vmem:[#allocation22 + $0x90] sm:$0xff]
    %v5732 = vld [vmem:[#allocation22 + $0x98] sm:$0xff]
    %v5733 = vld [vmem:[#allocation22 + $0xa0] sm:$0xff]
    %v5734 = vld [vmem:[#allocation22 + $0xa8] sm:$0xff]
    %v5735 = vld [vmem:[#allocation22 + $0xb0] sm:$0xff]
    %v5736 = vld [vmem:[#allocation22 + $0xb8] sm:$0xff]
    %v5737 = vld [vmem:[#allocation22 + $0xc0] sm:$0xff]
    %v5738 = vld [vmem:[#allocation22 + $0xc8] sm:$0xff]
    %v5739 = vld [vmem:[#allocation22 + $0xd0] sm:$0xff]
    %v5740 = vld [vmem:[#allocation22 + $0xd8] sm:$0xff]
    %v5741 = vld [vmem:[#allocation22 + $0xe0] sm:$0xff]
    %v5742 = vld [vmem:[#allocation22 + $0xe8] sm:$0xff]
    %v5743 = vld [vmem:[#allocation22 + $0xf0] sm:$0xff]
    %v5744 = vld [vmem:[#allocation22 + $0xf8] sm:$0xff]
    %v5777 = vunpack.c.l.b16 %v5713
    %v5778 = vunpack.c.h.b16 %v5713
    %v5779 = vunpack.c.l.b16 %v5714
    %v5780 = vunpack.c.h.b16 %v5714
    %v5781 = vunpack.c.l.b16 %v5715
    %v5782 = vunpack.c.h.b16 %v5715
    %v5783 = vunpack.c.l.b16 %v5716
    %v5784 = vunpack.c.h.b16 %v5716
    %v5785 = vunpack.c.l.b16 %v5717
    %v5786 = vunpack.c.h.b16 %v5717
    %v5787 = vunpack.c.l.b16 %v5718
    %v5788 = vunpack.c.h.b16 %v5718
    %v5789 = vunpack.c.l.b16 %v5719
    %v5790 = vunpack.c.h.b16 %v5719
    %v5791 = vunpack.c.l.b16 %v5720
    %v5792 = vunpack.c.h.b16 %v5720
    %v5793 = vunpack.c.l.b16 %v5721
    %v5794 = vunpack.c.h.b16 %v5721
    %v5795 = vunpack.c.l.b16 %v5722
    %v5796 = vunpack.c.h.b16 %v5722
    %v5797 = vunpack.c.l.b16 %v5723
    %v5798 = vunpack.c.h.b16 %v5723
    %v5799 = vunpack.c.l.b16 %v5724
    %v5800 = vunpack.c.h.b16 %v5724
    %v5801 = vunpack.c.l.b16 %v5725
    %v5802 = vunpack.c.h.b16 %v5725
    %v5803 = vunpack.c.l.b16 %v5726
    %v5804 = vunpack.c.h.b16 %v5726
    %v5805 = vunpack.c.l.b16 %v5727
    %v5806 = vunpack.c.h.b16 %v5727
    %v5807 = vunpack.c.l.b16 %v5728
    %v5808 = vunpack.c.h.b16 %v5728
    %v5809 = vunpack.c.l.b16 %v5729
    %v5810 = vunpack.c.h.b16 %v5729
    %v5811 = vunpack.c.l.b16 %v5730
    %v5812 = vunpack.c.h.b16 %v5730
    %v5813 = vunpack.c.l.b16 %v5731
    %v5814 = vunpack.c.h.b16 %v5731
    %v5815 = vunpack.c.l.b16 %v5732
    %v5816 = vunpack.c.h.b16 %v5732
    %v5817 = vunpack.c.l.b16 %v5733
    %v5818 = vunpack.c.h.b16 %v5733
    %v5819 = vunpack.c.l.b16 %v5734
    %v5820 = vunpack.c.h.b16 %v5734
    %v5821 = vunpack.c.l.b16 %v5735
    %v5822 = vunpack.c.h.b16 %v5735
    %v5823 = vunpack.c.l.b16 %v5736
    %v5824 = vunpack.c.h.b16 %v5736
    %v5825 = vunpack.c.l.b16 %v5737
    %v5826 = vunpack.c.h.b16 %v5737
    %v5827 = vunpack.c.l.b16 %v5738
    %v5828 = vunpack.c.h.b16 %v5738
    %v5829 = vunpack.c.l.b16 %v5739
    %v5830 = vunpack.c.h.b16 %v5739
    %v5831 = vunpack.c.l.b16 %v5740
    %v5832 = vunpack.c.h.b16 %v5740
    %v5833 = vunpack.c.l.b16 %v5741
    %v5834 = vunpack.c.h.b16 %v5741
    %v5835 = vunpack.c.l.b16 %v5742
    %v5836 = vunpack.c.h.b16 %v5742
    %v5837 = vunpack.c.l.b16 %v5743
    %v5838 = vunpack.c.h.b16 %v5743
    %v5839 = vunpack.c.l.b16 %v5744
    %v5840 = vunpack.c.h.b16 %v5744
    %v5841 = vpack.c.b16 %v5779, %v5777
    %v5842 = vpack.c.b16 %v5780, %v5778
    %v5843 = vpack.c.b16 %v5783, %v5781
    %v5844 = vpack.c.b16 %v5784, %v5782
    %v5845 = vpack.c.b16 %v5787, %v5785
    %v5846 = vpack.c.b16 %v5788, %v5786
    %v5847 = vpack.c.b16 %v5791, %v5789
    %v5848 = vpack.c.b16 %v5792, %v5790
    %v5849 = vpack.c.b16 %v5795, %v5793
    %v5850 = vpack.c.b16 %v5796, %v5794
    %v5851 = vpack.c.b16 %v5799, %v5797
    %v5852 = vpack.c.b16 %v5800, %v5798
    %v5853 = vpack.c.b16 %v5803, %v5801
    %v5854 = vpack.c.b16 %v5804, %v5802
    %v5855 = vpack.c.b16 %v5807, %v5805
    %v5856 = vpack.c.b16 %v5808, %v5806
    %v5857 = vpack.c.b16 %v5811, %v5809
    %v5858 = vpack.c.b16 %v5812, %v5810
    %v5859 = vpack.c.b16 %v5815, %v5813
    %v5860 = vpack.c.b16 %v5816, %v5814
    %v5861 = vpack.c.b16 %v5819, %v5817
    %v5862 = vpack.c.b16 %v5820, %v5818
    %v5863 = vpack.c.b16 %v5823, %v5821
    %v5864 = vpack.c.b16 %v5824, %v5822
    %v5865 = vpack.c.b16 %v5827, %v5825
    %v5866 = vpack.c.b16 %v5828, %v5826
    %v5867 = vpack.c.b16 %v5831, %v5829
    %v5868 = vpack.c.b16 %v5832, %v5830
    %v5869 = vpack.c.b16 %v5835, %v5833
    %v5870 = vpack.c.b16 %v5836, %v5834
    %v5871 = vpack.c.b16 %v5839, %v5837
    %v5872 = vpack.c.b16 %v5840, %v5838
    %5905 = vmatpush.bf16.msra.mxu0 %v5855
    %5906 = vmatpush.bf16.msra.mxu0 %v5853
    %5907 = vmatpush.bf16.msra.mxu0 %v5851
    %5908 = vmatpush.bf16.msra.mxu0 %v5849
    %5909 = vmatpush.bf16.msra.mxu0 %v5847
    %5910 = vmatpush.bf16.msra.mxu0 %v5845
    %5911 = vmatpush.bf16.msra.mxu0 %v5843
    %5912 = vmatpush.bf16.msra.mxu0 %v5841
    %5913 = vmatmul.bf16.gmra.mxu0 %v5711
    %v5914 = vpop.f32.mrf.mxu0
    %v5915 = vadd.f32 0.0, %v5914
    %v5916 = vpop.f32.mrf.mxu0
    %5917 = vdwg.mxu0
    %5918 = vmatpush.bf16.msra.mxu0 %v5871
    %5919 = vmatpush.bf16.msra.mxu0 %v5869
    %5920 = vmatpush.bf16.msra.mxu0 %v5867
    %5921 = vmatpush.bf16.msra.mxu0 %v5865
    %5922 = vmatpush.bf16.msra.mxu0 %v5863
    %5923 = vmatpush.bf16.msra.mxu0 %v5861
    %5924 = vmatpush.bf16.msra.mxu0 %v5859
    %5925 = vmatpush.bf16.msra.mxu0 %v5857
    %5926 = vmatmul.bf16.gmra.mxu0 %v5712
    %v5927 = vpop.f32.mrf.mxu0
    %v5928 = vadd.f32 %v5915, %v5927
    %v5929 = vpop.f32.mrf.mxu0
    %5930 = vdwg.mxu0
    %5931 = vmatpush.bf16.msra.mxu0 %v5856
    %5932 = vmatpush.bf16.msra.mxu0 %v5854
    %5933 = vmatpush.bf16.msra.mxu0 %v5852
    %5934 = vmatpush.bf16.msra.mxu0 %v5850
    %5935 = vmatpush.bf16.msra.mxu0 %v5848
    %5936 = vmatpush.bf16.msra.mxu0 %v5846
    %5937 = vmatpush.bf16.msra.mxu0 %v5844
    %5938 = vmatpush.bf16.msra.mxu0 %v5842
    %5939 = vmatmul.bf16.gmra.mxu0 %v5711
    %v5940 = vpop.f32.mrf.mxu0
    %v5941 = vadd.f32 0.0, %v5940
    %v5942 = vpop.f32.mrf.mxu0
    %5943 = vdwg.mxu0
    %5944 = vmatpush.bf16.msra.mxu0 %v5872
    %5945 = vmatpush.bf16.msra.mxu0 %v5870
    %5946 = vmatpush.bf16.msra.mxu0 %v5868
    %5947 = vmatpush.bf16.msra.mxu0 %v5866
    %5948 = vmatpush.bf16.msra.mxu0 %v5864
    %5949 = vmatpush.bf16.msra.mxu0 %v5862
    %5950 = vmatpush.bf16.msra.mxu0 %v5860
    %5951 = vmatpush.bf16.msra.mxu0 %v5858
    %5952 = vmatmul.bf16.gmra.mxu0 %v5712
    %v5953 = vpop.f32.mrf.mxu0
    %v5954 = vadd.f32 %v5941, %v5953
    %v5955 = vpop.f32.mrf.mxu0
    %5956 = vdwg.mxu0
    %v5989 = vunpack.c.l.b16 %v5679
    %v5990 = vunpack.c.h.b16 %v5679
    %v5991 = vunpack.c.l.b16 %v5680
    %v5992 = vunpack.c.h.b16 %v5680
    %v5993 = vunpack.c.l.b16 %v5681
    %v5994 = vunpack.c.h.b16 %v5681
    %v5995 = vunpack.c.l.b16 %v5682
    %v5996 = vunpack.c.h.b16 %v5682
    %v5997 = vunpack.c.l.b16 %v5683
    %v5998 = vunpack.c.h.b16 %v5683
    %v5999 = vunpack.c.l.b16 %v5684
    %v6000 = vunpack.c.h.b16 %v5684
    %v6001 = vunpack.c.l.b16 %v5685
    %v6002 = vunpack.c.h.b16 %v5685
    %v6003 = vunpack.c.l.b16 %v5686
    %v6004 = vunpack.c.h.b16 %v5686
    %v6005 = vunpack.c.l.b16 %v5687
    %v6006 = vunpack.c.h.b16 %v5687
    %v6007 = vunpack.c.l.b16 %v5688
    %v6008 = vunpack.c.h.b16 %v5688
    %v6009 = vunpack.c.l.b16 %v5689
    %v6010 = vunpack.c.h.b16 %v5689
    %v6011 = vunpack.c.l.b16 %v5690
    %v6012 = vunpack.c.h.b16 %v5690
    %v6013 = vunpack.c.l.b16 %v5691
    %v6014 = vunpack.c.h.b16 %v5691
    %v6015 = vunpack.c.l.b16 %v5692
    %v6016 = vunpack.c.h.b16 %v5692
    %v6017 = vunpack.c.l.b16 %v5693
    %v6018 = vunpack.c.h.b16 %v5693
    %v6019 = vunpack.c.l.b16 %v5694
    %v6020 = vunpack.c.h.b16 %v5694
    %v6021 = vunpack.c.l.b16 %v5695
    %v6022 = vunpack.c.h.b16 %v5695
    %v6023 = vunpack.c.l.b16 %v5696
    %v6024 = vunpack.c.h.b16 %v5696
    %v6025 = vunpack.c.l.b16 %v5697
    %v6026 = vunpack.c.h.b16 %v5697
    %v6027 = vunpack.c.l.b16 %v5698
    %v6028 = vunpack.c.h.b16 %v5698
    %v6029 = vunpack.c.l.b16 %v5699
    %v6030 = vunpack.c.h.b16 %v5699
    %v6031 = vunpack.c.l.b16 %v5700
    %v6032 = vunpack.c.h.b16 %v5700
    %v6033 = vunpack.c.l.b16 %v5701
    %v6034 = vunpack.c.h.b16 %v5701
    %v6035 = vunpack.c.l.b16 %v5702
    %v6036 = vunpack.c.h.b16 %v5702
    %v6037 = vunpack.c.l.b16 %v5703
    %v6038 = vunpack.c.h.b16 %v5703
    %v6039 = vunpack.c.l.b16 %v5704
    %v6040 = vunpack.c.h.b16 %v5704
    %v6041 = vunpack.c.l.b16 %v5705
    %v6042 = vunpack.c.h.b16 %v5705
    %v6043 = vunpack.c.l.b16 %v5706
    %v6044 = vunpack.c.h.b16 %v5706
    %v6045 = vunpack.c.l.b16 %v5707
    %v6046 = vunpack.c.h.b16 %v5707
    %v6047 = vunpack.c.l.b16 %v5708
    %v6048 = vunpack.c.h.b16 %v5708
    %v6049 = vunpack.c.l.b16 %v5709
    %v6050 = vunpack.c.h.b16 %v5709
    %v6051 = vunpack.c.l.b16 %v5710
    %v6052 = vunpack.c.h.b16 %v5710
    %v6053 = vpack.c.b16 %v5991, %v5989
    %v6054 = vpack.c.b16 %v5992, %v5990
    %v6055 = vpack.c.b16 %v5995, %v5993
    %v6056 = vpack.c.b16 %v5996, %v5994
    %v6057 = vpack.c.b16 %v5999, %v5997
    %v6058 = vpack.c.b16 %v6000, %v5998
    %v6059 = vpack.c.b16 %v6003, %v6001
    %v6060 = vpack.c.b16 %v6004, %v6002
    %v6061 = vpack.c.b16 %v6007, %v6005
    %v6062 = vpack.c.b16 %v6008, %v6006
    %v6063 = vpack.c.b16 %v6011, %v6009
    %v6064 = vpack.c.b16 %v6012, %v6010
    %v6065 = vpack.c.b16 %v6015, %v6013
    %v6066 = vpack.c.b16 %v6016, %v6014
    %v6067 = vpack.c.b16 %v6019, %v6017
    %v6068 = vpack.c.b16 %v6020, %v6018
    %v6069 = vpack.c.b16 %v6023, %v6021
    %v6070 = vpack.c.b16 %v6024, %v6022
    %v6071 = vpack.c.b16 %v6027, %v6025
    %v6072 = vpack.c.b16 %v6028, %v6026
    %v6073 = vpack.c.b16 %v6031, %v6029
    %v6074 = vpack.c.b16 %v6032, %v6030
    %v6075 = vpack.c.b16 %v6035, %v6033
    %v6076 = vpack.c.b16 %v6036, %v6034
    %v6077 = vpack.c.b16 %v6039, %v6037
    %v6078 = vpack.c.b16 %v6040, %v6038
    %v6079 = vpack.c.b16 %v6043, %v6041
    %v6080 = vpack.c.b16 %v6044, %v6042
    %v6081 = vpack.c.b16 %v6047, %v6045
    %v6082 = vpack.c.b16 %v6048, %v6046
    %v6083 = vpack.c.b16 %v6051, %v6049
    %v6084 = vpack.c.b16 %v6052, %v6050
    %6117 = vmatpush.bf16.msra.mxu0 %v6067
    %6118 = vmatpush.bf16.msra.mxu0 %v6065
    %6119 = vmatpush.bf16.msra.mxu0 %v6063
    %6120 = vmatpush.bf16.msra.mxu0 %v6061
    %6121 = vmatpush.bf16.msra.mxu0 %v6059
    %6122 = vmatpush.bf16.msra.mxu0 %v6057
    %6123 = vmatpush.bf16.msra.mxu0 %v6055
    %6124 = vmatpush.bf16.msra.mxu0 %v6053
    %6125 = vmatmul.bf16.gmra.mxu0 %v5677
    %v6126 = vpop.f32.mrf.mxu0
    %v6127 = vadd.f32 %v5928, %v6126
    %v6128 = vpop.f32.mrf.mxu0
    %6129 = vdwg.mxu0
    %6130 = vmatpush.bf16.msra.mxu0 %v6083
    %6131 = vmatpush.bf16.msra.mxu0 %v6081
    %6132 = vmatpush.bf16.msra.mxu0 %v6079
    %6133 = vmatpush.bf16.msra.mxu0 %v6077
    %6134 = vmatpush.bf16.msra.mxu0 %v6075
    %6135 = vmatpush.bf16.msra.mxu0 %v6073
    %6136 = vmatpush.bf16.msra.mxu0 %v6071
    %6137 = vmatpush.bf16.msra.mxu0 %v6069
    %6138 = vmatmul.bf16.gmra.mxu0 %v5678
    %v6139 = vpop.f32.mrf.mxu0
    %v6140 = vadd.f32 %v6127, %v6139
    %v6141 = vpop.f32.mrf.mxu0
    %6142 = vdwg.mxu0
    %6143 = vmatpush.bf16.msra.mxu0 %v6068
    %6144 = vmatpush.bf16.msra.mxu0 %v6066
    %6145 = vmatpush.bf16.msra.mxu0 %v6064
    %6146 = vmatpush.bf16.msra.mxu0 %v6062
    %6147 = vmatpush.bf16.msra.mxu0 %v6060
    %6148 = vmatpush.bf16.msra.mxu0 %v6058
    %6149 = vmatpush.bf16.msra.mxu0 %v6056
    %6150 = vmatpush.bf16.msra.mxu0 %v6054
    %6151 = vmatmul.bf16.gmra.mxu0 %v5677
    %v6152 = vpop.f32.mrf.mxu0
    %v6153 = vadd.f32 %v5954, %v6152
    %v6154 = vpop.f32.mrf.mxu0
    %6155 = vdwg.mxu0
    %6156 = vmatpush.bf16.msra.mxu0 %v6084
    %6157 = vmatpush.bf16.msra.mxu0 %v6082
    %6158 = vmatpush.bf16.msra.mxu0 %v6080
    %6159 = vmatpush.bf16.msra.mxu0 %v6078
    %6160 = vmatpush.bf16.msra.mxu0 %v6076
    %6161 = vmatpush.bf16.msra.mxu0 %v6074
    %6162 = vmatpush.bf16.msra.mxu0 %v6072
    %6163 = vmatpush.bf16.msra.mxu0 %v6070
    %6164 = vmatmul.bf16.gmra.mxu0 %v5678
    %v6165 = vpop.f32.mrf.mxu0
    %v6166 = vadd.f32 %v6153, %v6165
    %v6167 = vpop.f32.mrf.mxu0
    %6168 = vdwg.mxu0
    %v6169 = vld [vmem:[%s16] sm:$0x3]
    %v6171 = vperm.slane %v6169, 0
    %v6172 = vperm.slane %v6169, 1
    %v6175 = vadd.f32 %v6140, %v6171
    %v6176 = vadd.f32 %v6166, %v6172
    %vm6177 = vcmp.gt.f32.partialorder %v6175, 0.0
    %vm6178 = vcmp.gt.f32.partialorder %v6176, 0.0
    %v6179 = vmul.f32 %v6175, 0.01
    %v6180 = vmul.f32 %v6176, 0.01
    %v6181 = vsel %vm6177, %v6175, %v6179
    %v6182 = vsel %vm6178, %v6176, %v6180
    %v6183 = vld [vmem:[%s17] sm:$0x3]
    %v6185 = vperm.slane %v6183, 0
    %v6186 = vperm.slane %v6183, 1
    %v6189 = vmul.f32 %v6181, %v6185
    %v6190 = vmul.f32 %v6182, %v6186
    %v6191 = vadd.f32 %v6189, %v6190
    %6192 = vadd.xlane.f32.xlu0 %v6191
    %v6193 = vpop.xlane.xlu0 %6192
    %v6194 = vld [vmem:[#allocation2] sm:$0x1]
    %v6196 = vperm.slane %v6194, 0
    %v6198 = vadd.f32 %v6193, %v6196
    %vm6199 = vcmask 7168
    %6200 = vst.msk [vmem:[%s19] sm:$0xff] %vm6199, %v6198
    // Predicated region
    $region130: #{tpu_custom_call.1} parent=1 // pred_check
      _
    $region131: #{tpu_custom_call.1} parent=1 // pred_check_branch
      %6202 = sbr.rel (0) target = $region133
    $region132: #{tpu_custom_call.1} parent=1 // pred_region
      _
    $region133: #{tpu_custom_call.1} parent=1 // pred_fallthru
      _
    // Predicated region
    $region134: #{tpu_custom_call.1} parent=1 // pred_check
      _
    $region135: #{tpu_custom_call.1} parent=1 // pred_check_branch
      %6204 = sbr.rel (0) target = $region137
    $region136: #{tpu_custom_call.1} parent=1 // pred_region
      _
    $region137: #{tpu_custom_call.1} parent=1 // pred_fallthru
      _
    %6205 = vsyncpa [#allocation4], 1
    %6206 = vsyncpa [#allocation6], 1
    %6207 = vsyncpa [#allocation9], 1
    %6208 = vsyncpa [#allocation12], 1
    %6209 = vsyncpa [#allocation15], 1
    %6210 = vsyncpa [#allocation18], 1
    %6211 = vsyncpa [#allocation21], 1

</llo_original>
